<compile_context>
chip_gen: v7x
topology: tpu7x:2x2x1
jax: 0.10.0
libtpu: 0.0.40
codegen_flags: <defaults>
</compile_context>

<pallas_src>
import functools

import jax
import jax.numpy as jnp
from jax import lax
from jax.experimental import pallas as pl
from jax.experimental.pallas import tpu as pltpu

CHANNELS = 3       # proggan global: toRGB output channels
BN_EPS = 1e-5      # nn.BatchNorm2d default eps


def _round_up(v, m):
    return ((v + m - 1) // m) * m


def _pick_tm(m0, tm_max):
    """Multiple-of-128 divisor of m0 closest to (and preferably <=) tm_max; else m0."""
    divs = [t for t in range(128, m0 + 1, 128) if m0 % t == 0]
    if not divs:
        return m0          # m0 < 128 or awkward: single (possibly lane-masked) tile
    under = [t for t in divs if t <= tm_max]
    return max(under) if under else min(divs)


def _vmem_limit(*buffer_bytes):
    """Scoped-VMEM request: sum of live buffers * 1.4 + 4 MiB margin, clamped."""
    need = int(1.4 * sum(buffer_bytes)) + (4 << 20)
    return int(min(max(need, 32 << 20), 100 << 20))


def _const_spec(block_shape, index_map, pmode):
    """BlockSpec for a constant-index (grid-resident) operand; single-buffer if possible."""
    if pmode is None:
        return pl.BlockSpec(block_shape, index_map)
    return pl.BlockSpec(block_shape, index_map, pipeline_mode=pmode)


# --------------------------------------------------------------------------
# Pass 1: fused (upsample+3x3 conv as 4 phases x 2 dots) + bias + ReLU, with
#         per-tile per-channel BatchNorm statistics (reduced host-side).
# --------------------------------------------------------------------------
def conv_relu_stats_kernel(pat_ref, w_ref, b_ref, act_ref, sum_ref, sq_ref):
    # pat_ref: (9*Cip, tm)     bf16  im2col of ORIGINAL x (3x3 window, pad=1), tap-major
    # w_ref:   (8, Co, 2*Cip)  bf16  per-(phase, tap-row) dense subpixel weights
    # b_ref:   (Co, 1)         f32   conv bias (shared by all 4 phases)
    # act_ref: (4, Co, tm)     bf16  post-ReLU activations (intermediate)
    # sum_ref: (1, Co, 1)      f32   per-tile per-channel sum (phases folded in)
    # sq_ref:  (1, Co, 1)      f32   per-tile per-channel sum of squares
    cip2 = w_ref.shape[-1]           # 2 * Cip  (two taps worth of padded channels)
    cip = cip2 // 2
    b = b_ref[...]                                   # (Co, 1) f32
    s_acc = jnp.zeros_like(b)
    q_acc = jnp.zeros_like(b)
    for p in range(4):                               # unrolled: 4 output phases
        py, px = p // 2, p % 2
        # Phase (py,px) uses taps {t0, t0+1, t0+3, t0+4}, t0 = py*3+px: two
        # contiguous 2*Cip K-runs of the shared patch block, one dense dot each.
        a = jnp.dot(w_ref[2 * p + 0],
                    pat_ref[pl.ds((py * 3 + px) * cip, cip2), :],
                    preferred_element_type=jnp.float32)
        a = a + jnp.dot(w_ref[2 * p + 1],
                        pat_ref[pl.ds(((py + 1) * 3 + px) * cip, cip2), :],
                        preferred_element_type=jnp.float32)
        a = jnp.maximum(a + b, 0.0)                  # bias + ReLU, f32
        act_ref[p] = a.astype(act_ref.dtype)         # bf16 intermediate
        s_acc = s_acc + jnp.sum(a, axis=1, keepdims=True)
        q_acc = q_acc + jnp.sum(a * a, axis=1, keepdims=True)
    sum_ref[0] = s_acc
    sq_ref[0] = q_acc


# --------------------------------------------------------------------------
# Pass 2: folded BatchNorm + 1x1 toRGB + tanh, per phase (shared weights).
# --------------------------------------------------------------------------
def bn_rgb_tanh_kernel(act_ref, wf_ref, bf_ref, out_ref):
    # act_ref: (4, Co, tm2) bf16; wf_ref: (CHANNELS, Co) f32; bf_ref: (CHANNELS, 1) f32
    # out_ref: (4, CHANNELS, tm2) f32 -- lane-dense stores.
    wf = wf_ref[...]
    bf = bf_ref[...]
    for p in range(4):
        a = act_ref[p].astype(jnp.float32)
        out_ref[p] = jnp.tanh(jnp.dot(wf, a, preferred_element_type=jnp.float32) + bf)


def init_params(key, fi, fo):
    """Deterministic synthetic parameters (shapes match nn.Conv2d / nn.BatchNorm2d)."""
    k1, k2, k3, k4 = jax.random.split(key, 4)
    w_conv = jax.random.normal(k1, (fo, fi, 3, 3), jnp.float32) / jnp.sqrt(9.0 * fi)
    b_conv = jax.random.normal(k2, (fo,), jnp.float32) * 0.01
    gamma = jnp.ones((fo,), jnp.float32)
    beta = jnp.zeros((fo,), jnp.float32)
    w_rgb = jax.random.normal(k3, (CHANNELS, fo, 1, 1), jnp.float32) / jnp.sqrt(1.0 * fo)
    b_rgb = jax.random.normal(k4, (CHANNELS,), jnp.float32) * 0.01
    return dict(w_conv=w_conv, b_conv=b_conv, gamma=gamma, beta=beta,
                w_rgb=w_rgb, b_rgb=b_rgb)


def genconv_forward(x_nchw, params, *, tm1_max=512, tm2_max=2048,
                    single_buffer_consts=True):
    """x_nchw: (N, Ci, H, W) f32 -> (N, CHANNELS, 2H, 2W) f32 (RGBphase == 0 path)."""
    N, Ci, H, W = x_nchw.shape
    Co = params["w_conv"].shape[0]
    M0 = N * H * W                   # output pixels per phase
    Cip = _round_up(Ci, 16)          # per-tap channel stride (bf16 sublane packing)

    # ---- glue: im2col of the ORIGINAL x (3x3 window, pad=1), tap-major / M-minor ----
    # TODO(synk): for memory-bound shapes (small Ci, large H*W) build the shifted
    # taps inside the kernel from an x tile + 1-pixel halo instead of this 9x
    # XLA materialization.
    xp = jnp.pad(x_nchw, ((0, 0), (0, 0), (1, 1), (1, 1)))
    taps = [xp[:, :, dy:dy + H, dx:dx + W] for dy in range(3) for dx in range(3)]
    pat = jnp.stack(taps, axis=0)                         # (9, N, Ci, H, W)
    pat = jnp.transpose(pat, (0, 2, 1, 3, 4)).reshape(9, Ci, M0)
    if Cip != Ci:
        pat = jnp.pad(pat, ((0, 0), (0, Cip - Ci), (0, 0)))
    pat = pat.reshape(9 * Cip, M0).astype(jnp.bfloat16)

    # ---- per-phase dense subpixel weights: row 2*p+ry holds taps (py+ry, px..px+1) ----
    Rm = {0: jnp.array([[1., 0., 0.], [0., 1., 1.]], jnp.float32),
          1: jnp.array([[1., 1., 0.], [0., 0., 1.]], jnp.float32)}
    w = params["w_conv"].astype(jnp.float32)              # (Co, Ci, 3, 3)
    W8 = jnp.zeros((8, Co, 2 * Cip), jnp.float32)
    for py in range(2):
        for px in range(2):
            p = py * 2 + px
            # E[o, c, ry, rx]: per-phase effective 2x2 kernel on the original x.
            E = jnp.einsum('ad,be,ocde->ocab', Rm[py], Rm[px], w)
            for ry in range(2):
                for rx in range(2):
                    W8 = W8.at[2 * p + ry, :, rx * Cip:rx * Cip + Ci].set(E[:, :, ry, rx])
    W8 = W8.astype(jnp.bfloat16)
    bconv = params["b_conv"].reshape(Co, 1).astype(jnp.float32)

    pmode = pl.Buffered(1) if single_buffer_consts else None
    wbuf = 1 if single_buffer_consts else 2

    # ---- pass 1: conv + bias + ReLU per M tile, per-tile BN statistics ----
    tm1 = _pick_tm(M0, tm1_max)
    nt1 = M0 // tm1
    vmem1 = _vmem_limit(2 * (9 * Cip * tm1 * 2),          # pat tile, bf16, 2 buffers
                        wbuf * (8 * Co * 2 * Cip * 2),    # resident conv weights, bf16
                        2 * (4 * Co * tm1 * 2),           # act out tile, bf16, 2 buffers
                        4 * (Co * tm1 * 4))               # f32 matmul/ReLU temporaries

    act, ssum, ssq = pl.pallas_call(
        conv_relu_stats_kernel,
        out_shape=(jax.ShapeDtypeStruct((4, Co, M0), jnp.bfloat16),
                   jax.ShapeDtypeStruct((nt1, Co, 1), jnp.float32),
                   jax.ShapeDtypeStruct((nt1, Co, 1), jnp.float32)),
        grid=(nt1,),
        in_specs=[pl.BlockSpec((9 * Cip, tm1), lambda i: (0, i)),
                  _const_spec((8, Co, 2 * Cip), lambda i: (0, 0, 0), pmode),
                  _const_spec((Co, 1), lambda i: (0, 0), pmode)],
        out_specs=(pl.BlockSpec((4, Co, tm1), lambda i: (0, 0, i)),
                   pl.BlockSpec((1, Co, 1), lambda i: (i, 0, 0)),
                   pl.BlockSpec((1, Co, 1), lambda i: (i, 0, 0))),
        compiler_params=pltpu.CompilerParams(
            dimension_semantics=("parallel",),            # fully independent M tiles
            vmem_limit_bytes=vmem1),
    )(pat, W8, bconv)

    # ---- BN (training mode, biased stats) folded with toRGB; (Co,)-sized math ----
    cnt = jnp.float32(4 * M0)                              # = N * 2H * 2W
    s = jnp.sum(ssum[:, :, 0], axis=0)                     # per-channel sum
    sq = jnp.sum(ssq[:, :, 0], axis=0)
    mean = s / cnt
    var = jnp.maximum(sq / cnt - mean * mean, 0.0)
    inv = lax.rsqrt(var + BN_EPS)
    scale_c = params["gamma"] * inv
    shift_c = params["beta"] - mean * scale_c
    wrgb = params["w_rgb"][:, :, 0, 0].astype(jnp.float32)  # (CHANNELS, Co)
    Wfold = wrgb * scale_c[None, :]                         # (CHANNELS, Co)
    bfold = (wrgb @ shift_c + params["b_rgb"]).reshape(CHANNELS, 1).astype(jnp.float32)

    # ---- pass 2: normalize + toRGB + tanh, per phase (shared folded weights) ----
    tm2 = _pick_tm(M0, tm2_max)
    nt2 = M0 // tm2
    vmem2 = _vmem_limit(2 * (4 * Co * tm2 * 2),            # act tile, bf16, 2 buffers
                        2 * (4 * CHANNELS * tm2 * 4),      # out tile, f32, 2 buffers
                        2 * (Co * tm2 * 4))                # f32 cast temporaries

    out4 = pl.pallas_call(
        bn_rgb_tanh_kernel,
        out_shape=jax.ShapeDtypeStruct((4, CHANNELS, M0), jnp.float32),
        grid=(nt2,),
        in_specs=[pl.BlockSpec((4, Co, tm2), lambda i: (0, 0, i)),
                  _const_spec((CHANNELS, Co), lambda i: (0, 0), pmode),
                  _const_spec((CHANNELS, 1), lambda i: (0, 0), pmode)],
        out_specs=pl.BlockSpec((4, CHANNELS, tm2), lambda i: (0, 0, i)),
        compiler_params=pltpu.CompilerParams(
            dimension_semantics=("parallel",),
            vmem_limit_bytes=vmem2),
    )(act, Wfold, bfold)

    # ---- pixel-shuffle the 4 phases back to (N, CHANNELS, 2H, 2W) ----
    y = out4.reshape(2, 2, CHANNELS, N, H, W)              # (py, px, ch, n, i, j)
    y = jnp.transpose(y, (3, 2, 4, 0, 5, 1)).reshape(N, CHANNELS, 2 * H, 2 * W)
    return y
    # TODO(synk): RGBphase == 1 branch (grow(); returns (x, upsampled-rgb(x)) tuple)
    # and BatchNorm running-stat buffer updates (training-mode side effect) are not
    # implemented; default RGBphase == 0 forward output only.


# --------------------------------------------------------------------------
# Pure-JAX reference (mirrors the PyTorch module) for a correctness check.
# --------------------------------------------------------------------------
def genconv_reference(x, params):
    u = jnp.repeat(jnp.repeat(x, 2, axis=2), 2, axis=3)              # nearest 2x
    y = lax.conv_general_dilated(u, params["w_conv"], (1, 1), ((1, 1), (1, 1)),
                                 dimension_numbers=("NCHW", "OIHW", "NCHW"))
    y = y + params["b_conv"][None, :, None, None]
    y = jnp.maximum(y, 0.0)
    mean = jnp.mean(y, axis=(0, 2, 3), keepdims=True)
    var = jnp.mean((y - mean) ** 2, axis=(0, 2, 3), keepdims=True)   # biased
    y = ((y - mean) * lax.rsqrt(var + BN_EPS)
         * params["gamma"][None, :, None, None] + params["beta"][None, :, None, None])
    z = lax.conv_general_dilated(y, params["w_rgb"], (1, 1), ((0, 0), (0, 0)),
                                 dimension_numbers=("NCHW", "OIHW", "NCHW"))
    z = z + params["b_rgb"][None, :, None, None]
    return jnp.tanh(z)


if __name__ == "__main__":
    key = jax.random.PRNGKey(0)
    kx, kp = jax.random.split(key)

    N, fi, H, W = 2, 4, 16, 16
    fo = 8
    x = jax.random.normal(kx, (N, fi, H, W), jnp.float32)
    params = init_params(kp, fi, fo)

    fwd_fast = jax.jit(functools.partial(genconv_forward, single_buffer_consts=True))
    fwd_safe = jax.jit(functools.partial(genconv_forward, single_buffer_consts=False))
    try:
        y = jax.block_until_ready(fwd_fast(x, params))
    except Exception:
        # Portability guard: single-buffered resident weights (pl.Buffered(1)) are a
        # pure VMEM optimization; fall back to default double-buffering if the
        # installed Pallas rejects buffer_count=1.
        y = jax.block_until_ready(fwd_safe(x, params))

    assert y.shape == (N, CHANNELS, 2 * H, 2 * W), y.shape
    assert bool(jnp.all(jnp.isfinite(y)))
    assert bool(jnp.all(jnp.abs(y) <= 1.0 + 1e-6))      # tanh range sanity check

    y_ref = genconv_reference(x, params)
    err = float(jnp.max(jnp.abs(y - y_ref)))
    assert err < 6e-2, f"max abs error vs reference: {err}"

    print("KERNEL_OK")
</pallas_src>

<mosaic_0001>
module attributes {stable_mosaic.version = 11 : i64} {
  func.func @conv_relu_stats_kernel(%arg0: i32, %arg1: memref<144x512xbf16, #tpu.memory_space<vmem>>, %arg2: memref<8x8x32xbf16, #tpu.memory_space<vmem>>, %arg3: memref<8x1xf32, #tpu.memory_space<vmem>>, %arg4: memref<4x8x512xbf16, #tpu.memory_space<vmem>>, %arg5: memref<1x8x1xf32, #tpu.memory_space<vmem>>, %arg6: memref<1x8x1xf32, #tpu.memory_space<vmem>>) attributes {dimension_semantics = [#tpu.dimension_semantics<parallel>], iteration_bounds = array<i64: 1>, scalar_prefetch = 0 : i64, scratch_operands = 0 : i64, tpu.core_type = #tpu.core_type<tc>, window_params = [{transform_indices = @transform_0, window_bounds = array<i64: 144, 512>}, {pipeline_mode = #tpu.pipeline_mode<synchronous>, transform_indices = @transform_1, window_bounds = array<i64: 8, 8, 32>}, {pipeline_mode = #tpu.pipeline_mode<synchronous>, transform_indices = @transform_2, window_bounds = array<i64: 8, 1>}, {transform_indices = @transform_3, window_bounds = array<i64: 4, 8, 512>}, {transform_indices = @transform_4, window_bounds = array<i64: 1, 8, 1>}, {transform_indices = @transform_5, window_bounds = array<i64: 1, 8, 1>}]} {
    %c0 = arith.constant 0 : index
    %c0_0 = arith.constant 0 : index
    %0 = vector.load %arg3[%c0, %c0_0] : memref<8x1xf32, #tpu.memory_space<vmem>>, vector<8x1xf32>
    %cst = arith.constant 0.000000e+00 : f32
    %1 = vector.broadcast %cst : f32 to vector<8x1xf32>
    %cst_1 = arith.constant 0.000000e+00 : f32
    %2 = vector.broadcast %cst_1 : f32 to vector<8x1xf32>
    %c0_2 = arith.constant 0 : index
    %c0_3 = arith.constant 0 : index
    %c0_4 = arith.constant 0 : index
    %3 = vector.load %arg2[%c0_2, %c0_3, %c0_4] : memref<8x8x32xbf16, #tpu.memory_space<vmem>>, vector<1x8x32xbf16>
    %4 = vector.shape_cast %3 : vector<1x8x32xbf16> to vector<8x32xbf16>
    %c0_5 = arith.constant 0 : index
    %c0_6 = arith.constant 0 : index
    %5 = vector.load %arg1[%c0_5, %c0_6] : memref<144x512xbf16, #tpu.memory_space<vmem>>, vector<32x512xbf16>
    %cst_7 = arith.constant dense<0.000000e+00> : vector<8x512xf32>
    %6 = tpu.matmul %4, %5, %cst_7 {dimension_numbers = #tpu.dot_dimension_numbers<[1], [0], [0], [1], [0, 0, 1, 1], [], []>} : vector<8x32xbf16>, vector<32x512xbf16>, vector<8x512xf32> -> vector<8x512xf32>
    %c1 = arith.constant 1 : index
    %c0_8 = arith.constant 0 : index
    %c0_9 = arith.constant 0 : index
    %7 = vector.load %arg2[%c1, %c0_8, %c0_9] : memref<8x8x32xbf16, #tpu.memory_space<vmem>>, vector<1x8x32xbf16>
    %8 = vector.shape_cast %7 : vector<1x8x32xbf16> to vector<8x32xbf16>
    %c48 = arith.constant 48 : index
    %c0_10 = arith.constant 0 : index
    %9 = vector.load %arg1[%c48, %c0_10] : memref<144x512xbf16, #tpu.memory_space<vmem>>, vector<32x512xbf16>
    %cst_11 = arith.constant dense<0.000000e+00> : vector<8x512xf32>
    %10 = tpu.matmul %8, %9, %cst_11 {dimension_numbers = #tpu.dot_dimension_numbers<[1], [0], [0], [1], [0, 0, 1, 1], [], []>} : vector<8x32xbf16>, vector<32x512xbf16>, vector<8x512xf32> -> vector<8x512xf32>
    %11 = arith.addf %6, %10 : vector<8x512xf32>
    %12 = vector.broadcast %0 : vector<8x1xf32> to vector<8x512xf32>
    %13 = arith.addf %11, %12 : vector<8x512xf32>
    %cst_12 = arith.constant 0.000000e+00 : f32
    %14 = vector.broadcast %cst_12 : f32 to vector<8x512xf32>
    %15 = arith.maximumf %13, %14 : vector<8x512xf32>
    %16 = arith.truncf %15 : vector<8x512xf32> to vector<8x512xbf16>
    %c0_13 = arith.constant 0 : index
    %c0_14 = arith.constant 0 : index
    %c0_15 = arith.constant 0 : index
    %17 = vector.load %arg4[%c0_13, %c0_14, %c0_15] : memref<4x8x512xbf16, #tpu.memory_space<vmem>>, vector<1x8x512xbf16>
    %18 = vector.shape_cast %17 : vector<1x8x512xbf16> to vector<8x512xbf16>
    %19 = vector.shape_cast %16 : vector<8x512xbf16> to vector<1x8x512xbf16>
    tpu.vector_store %arg4[%c0_13, %c0_14, %c0_15], %19 {strides = array<i32>} : memref<4x8x512xbf16, #tpu.memory_space<vmem>>, vector<1x8x512xbf16>,
    %cst_16 = arith.constant dense<0.000000e+00> : vector<8xf32>
    %20 = vector.multi_reduction <add>, %15, %cst_16 [1] : vector<8x512xf32> to vector<8xf32>
    %21 = vector.shape_cast %20 : vector<8xf32> to vector<8x1xf32>
    %22 = arith.addf %1, %21 : vector<8x1xf32>
    %23 = arith.mulf %15, %15 : vector<8x512xf32>
    %cst_17 = arith.constant dense<0.000000e+00> : vector<8xf32>
    %24 = vector.multi_reduction <add>, %23, %cst_17 [1] : vector<8x512xf32> to vector<8xf32>
    %25 = vector.shape_cast %24 : vector<8xf32> to vector<8x1xf32>
    %26 = arith.addf %2, %25 : vector<8x1xf32>
    %c2 = arith.constant 2 : index
    %c0_18 = arith.constant 0 : index
    %c0_19 = arith.constant 0 : index
    %27 = vector.load %arg2[%c2, %c0_18, %c0_19] : memref<8x8x32xbf16, #tpu.memory_space<vmem>>, vector<1x8x32xbf16>
    %28 = vector.shape_cast %27 : vector<1x8x32xbf16> to vector<8x32xbf16>
    %c16 = arith.constant 16 : index
    %c0_20 = arith.constant 0 : index
    %29 = vector.load %arg1[%c16, %c0_20] : memref<144x512xbf16, #tpu.memory_space<vmem>>, vector<32x512xbf16>
    %cst_21 = arith.constant dense<0.000000e+00> : vector<8x512xf32>
    %30 = tpu.matmul %28, %29, %cst_21 {dimension_numbers = #tpu.dot_dimension_numbers<[1], [0], [0], [1], [0, 0, 1, 1], [], []>} : vector<8x32xbf16>, vector<32x512xbf16>, vector<8x512xf32> -> vector<8x512xf32>
    %c3 = arith.constant 3 : index
    %c0_22 = arith.constant 0 : index
    %c0_23 = arith.constant 0 : index
    %31 = vector.load %arg2[%c3, %c0_22, %c0_23] : memref<8x8x32xbf16, #tpu.memory_space<vmem>>, vector<1x8x32xbf16>
    %32 = vector.shape_cast %31 : vector<1x8x32xbf16> to vector<8x32xbf16>
    %c64 = arith.constant 64 : index
    %c0_24 = arith.constant 0 : index
    %33 = vector.load %arg1[%c64, %c0_24] : memref<144x512xbf16, #tpu.memory_space<vmem>>, vector<32x512xbf16>
    %cst_25 = arith.constant dense<0.000000e+00> : vector<8x512xf32>
    %34 = tpu.matmul %32, %33, %cst_25 {dimension_numbers = #tpu.dot_dimension_numbers<[1], [0], [0], [1], [0, 0, 1, 1], [], []>} : vector<8x32xbf16>, vector<32x512xbf16>, vector<8x512xf32> -> vector<8x512xf32>
    %35 = arith.addf %30, %34 : vector<8x512xf32>
    %36 = vector.broadcast %0 : vector<8x1xf32> to vector<8x512xf32>
    %37 = arith.addf %35, %36 : vector<8x512xf32>
    %cst_26 = arith.constant 0.000000e+00 : f32
    %38 = vector.broadcast %cst_26 : f32 to vector<8x512xf32>
    %39 = arith.maximumf %37, %38 : vector<8x512xf32>
    %40 = arith.truncf %39 : vector<8x512xf32> to vector<8x512xbf16>
    %c1_27 = arith.constant 1 : index
    %c0_28 = arith.constant 0 : index
    %c0_29 = arith.constant 0 : index
    %41 = vector.load %arg4[%c1_27, %c0_28, %c0_29] : memref<4x8x512xbf16, #tpu.memory_space<vmem>>, vector<1x8x512xbf16>
    %42 = vector.shape_cast %41 : vector<1x8x512xbf16> to vector<8x512xbf16>
    %43 = vector.shape_cast %40 : vector<8x512xbf16> to vector<1x8x512xbf16>
    tpu.vector_store %arg4[%c1_27, %c0_28, %c0_29], %43 {strides = array<i32>} : memref<4x8x512xbf16, #tpu.memory_space<vmem>>, vector<1x8x512xbf16>,
    %cst_30 = arith.constant dense<0.000000e+00> : vector<8xf32>
    %44 = vector.multi_reduction <add>, %39, %cst_30 [1] : vector<8x512xf32> to vector<8xf32>
    %45 = vector.shape_cast %44 : vector<8xf32> to vector<8x1xf32>
    %46 = arith.addf %22, %45 : vector<8x1xf32>
    %47 = arith.mulf %39, %39 : vector<8x512xf32>
    %cst_31 = arith.constant dense<0.000000e+00> : vector<8xf32>
    %48 = vector.multi_reduction <add>, %47, %cst_31 [1] : vector<8x512xf32> to vector<8xf32>
    %49 = vector.shape_cast %48 : vector<8xf32> to vector<8x1xf32>
    %50 = arith.addf %26, %49 : vector<8x1xf32>
    %c4 = arith.constant 4 : index
    %c0_32 = arith.constant 0 : index
    %c0_33 = arith.constant 0 : index
    %51 = vector.load %arg2[%c4, %c0_32, %c0_33] : memref<8x8x32xbf16, #tpu.memory_space<vmem>>, vector<1x8x32xbf16>
    %52 = vector.shape_cast %51 : vector<1x8x32xbf16> to vector<8x32xbf16>
    %c48_34 = arith.constant 48 : index
    %c0_35 = arith.constant 0 : index
    %53 = vector.load %arg1[%c48_34, %c0_35] : memref<144x512xbf16, #tpu.memory_space<vmem>>, vector<32x512xbf16>
    %cst_36 = arith.constant dense<0.000000e+00> : vector<8x512xf32>
    %54 = tpu.matmul %52, %53, %cst_36 {dimension_numbers = #tpu.dot_dimension_numbers<[1], [0], [0], [1], [0, 0, 1, 1], [], []>} : vector<8x32xbf16>, vector<32x512xbf16>, vector<8x512xf32> -> vector<8x512xf32>
    %c5 = arith.constant 5 : index
    %c0_37 = arith.constant 0 : index
    %c0_38 = arith.constant 0 : index
    %55 = vector.load %arg2[%c5, %c0_37, %c0_38] : memref<8x8x32xbf16, #tpu.memory_space<vmem>>, vector<1x8x32xbf16>
    %56 = vector.shape_cast %55 : vector<1x8x32xbf16> to vector<8x32xbf16>
    %c96 = arith.constant 96 : index
    %c0_39 = arith.constant 0 : index
    %57 = vector.load %arg1[%c96, %c0_39] : memref<144x512xbf16, #tpu.memory_space<vmem>>, vector<32x512xbf16>
    %cst_40 = arith.constant dense<0.000000e+00> : vector<8x512xf32>
    %58 = tpu.matmul %56, %57, %cst_40 {dimension_numbers = #tpu.dot_dimension_numbers<[1], [0], [0], [1], [0, 0, 1, 1], [], []>} : vector<8x32xbf16>, vector<32x512xbf16>, vector<8x512xf32> -> vector<8x512xf32>
    %59 = arith.addf %54, %58 : vector<8x512xf32>
    %60 = vector.broadcast %0 : vector<8x1xf32> to vector<8x512xf32>
    %61 = arith.addf %59, %60 : vector<8x512xf32>
    %cst_41 = arith.constant 0.000000e+00 : f32
    %62 = vector.broadcast %cst_41 : f32 to vector<8x512xf32>
    %63 = arith.maximumf %61, %62 : vector<8x512xf32>
    %64 = arith.truncf %63 : vector<8x512xf32> to vector<8x512xbf16>
    %c2_42 = arith.constant 2 : index
    %c0_43 = arith.constant 0 : index
    %c0_44 = arith.constant 0 : index
    %65 = vector.load %arg4[%c2_42, %c0_43, %c0_44] : memref<4x8x512xbf16, #tpu.memory_space<vmem>>, vector<1x8x512xbf16>
    %66 = vector.shape_cast %65 : vector<1x8x512xbf16> to vector<8x512xbf16>
    %67 = vector.shape_cast %64 : vector<8x512xbf16> to vector<1x8x512xbf16>
    tpu.vector_store %arg4[%c2_42, %c0_43, %c0_44], %67 {strides = array<i32>} : memref<4x8x512xbf16, #tpu.memory_space<vmem>>, vector<1x8x512xbf16>,
    %cst_45 = arith.constant dense<0.000000e+00> : vector<8xf32>
    %68 = vector.multi_reduction <add>, %63, %cst_45 [1] : vector<8x512xf32> to vector<8xf32>
    %69 = vector.shape_cast %68 : vector<8xf32> to vector<8x1xf32>
    %70 = arith.addf %46, %69 : vector<8x1xf32>
    %71 = arith.mulf %63, %63 : vector<8x512xf32>
    %cst_46 = arith.constant dense<0.000000e+00> : vector<8xf32>
    %72 = vector.multi_reduction <add>, %71, %cst_46 [1] : vector<8x512xf32> to vector<8xf32>
    %73 = vector.shape_cast %72 : vector<8xf32> to vector<8x1xf32>
    %74 = arith.addf %50, %73 : vector<8x1xf32>
    %c6 = arith.constant 6 : index
    %c0_47 = arith.constant 0 : index
    %c0_48 = arith.constant 0 : index
    %75 = vector.load %arg2[%c6, %c0_47, %c0_48] : memref<8x8x32xbf16, #tpu.memory_space<vmem>>, vector<1x8x32xbf16>
    %76 = vector.shape_cast %75 : vector<1x8x32xbf16> to vector<8x32xbf16>
    %c64_49 = arith.constant 64 : index
    %c0_50 = arith.constant 0 : index
    %77 = vector.load %arg1[%c64_49, %c0_50] : memref<144x512xbf16, #tpu.memory_space<vmem>>, vector<32x512xbf16>
    %cst_51 = arith.constant dense<0.000000e+00> : vector<8x512xf32>
    %78 = tpu.matmul %76, %77, %cst_51 {dimension_numbers = #tpu.dot_dimension_numbers<[1], [0], [0], [1], [0, 0, 1, 1], [], []>} : vector<8x32xbf16>, vector<32x512xbf16>, vector<8x512xf32> -> vector<8x512xf32>
    %c7 = arith.constant 7 : index
    %c0_52 = arith.constant 0 : index
    %c0_53 = arith.constant 0 : index
    %79 = vector.load %arg2[%c7, %c0_52, %c0_53] : memref<8x8x32xbf16, #tpu.memory_space<vmem>>, vector<1x8x32xbf16>
    %80 = vector.shape_cast %79 : vector<1x8x32xbf16> to vector<8x32xbf16>
    %c112 = arith.constant 112 : index
    %c0_54 = arith.constant 0 : index
    %81 = vector.load %arg1[%c112, %c0_54] : memref<144x512xbf16, #tpu.memory_space<vmem>>, vector<32x512xbf16>
    %cst_55 = arith.constant dense<0.000000e+00> : vector<8x512xf32>
    %82 = tpu.matmul %80, %81, %cst_55 {dimension_numbers = #tpu.dot_dimension_numbers<[1], [0], [0], [1], [0, 0, 1, 1], [], []>} : vector<8x32xbf16>, vector<32x512xbf16>, vector<8x512xf32> -> vector<8x512xf32>
    %83 = arith.addf %78, %82 : vector<8x512xf32>
    %84 = vector.broadcast %0 : vector<8x1xf32> to vector<8x512xf32>
    %85 = arith.addf %83, %84 : vector<8x512xf32>
    %cst_56 = arith.constant 0.000000e+00 : f32
    %86 = vector.broadcast %cst_56 : f32 to vector<8x512xf32>
    %87 = arith.maximumf %85, %86 : vector<8x512xf32>
    %88 = arith.truncf %87 : vector<8x512xf32> to vector<8x512xbf16>
    %c3_57 = arith.constant 3 : index
    %c0_58 = arith.constant 0 : index
    %c0_59 = arith.constant 0 : index
    %89 = vector.load %arg4[%c3_57, %c0_58, %c0_59] : memref<4x8x512xbf16, #tpu.memory_space<vmem>>, vector<1x8x512xbf16>
    %90 = vector.shape_cast %89 : vector<1x8x512xbf16> to vector<8x512xbf16>
    %91 = vector.shape_cast %88 : vector<8x512xbf16> to vector<1x8x512xbf16>
    tpu.vector_store %arg4[%c3_57, %c0_58, %c0_59], %91 {strides = array<i32>} : memref<4x8x512xbf16, #tpu.memory_space<vmem>>, vector<1x8x512xbf16>,
    %cst_60 = arith.constant dense<0.000000e+00> : vector<8xf32>
    %92 = vector.multi_reduction <add>, %87, %cst_60 [1] : vector<8x512xf32> to vector<8xf32>
    %93 = vector.shape_cast %92 : vector<8xf32> to vector<8x1xf32>
    %94 = arith.addf %70, %93 : vector<8x1xf32>
    %95 = arith.mulf %87, %87 : vector<8x512xf32>
    %cst_61 = arith.constant dense<0.000000e+00> : vector<8xf32>
    %96 = vector.multi_reduction <add>, %95, %cst_61 [1] : vector<8x512xf32> to vector<8xf32>
    %97 = vector.shape_cast %96 : vector<8xf32> to vector<8x1xf32>
    %98 = arith.addf %74, %97 : vector<8x1xf32>
    %c0_62 = arith.constant 0 : index
    %c0_63 = arith.constant 0 : index
    %c0_64 = arith.constant 0 : index
    %99 = vector.load %arg5[%c0_62, %c0_63, %c0_64] : memref<1x8x1xf32, #tpu.memory_space<vmem>>, vector<1x8x1xf32>
    %100 = vector.shape_cast %99 : vector<1x8x1xf32> to vector<8x1xf32>
    %101 = vector.shape_cast %94 : vector<8x1xf32> to vector<1x8x1xf32>
    tpu.vector_store %arg5[%c0_62, %c0_63, %c0_64], %101 {strides = array<i32>} : memref<1x8x1xf32, #tpu.memory_space<vmem>>, vector<1x8x1xf32>,
    %c0_65 = arith.constant 0 : index
    %c0_66 = arith.constant 0 : index
    %c0_67 = arith.constant 0 : index
    %102 = vector.load %arg6[%c0_65, %c0_66, %c0_67] : memref<1x8x1xf32, #tpu.memory_space<vmem>>, vector<1x8x1xf32>
    %103 = vector.shape_cast %102 : vector<1x8x1xf32> to vector<8x1xf32>
    %104 = vector.shape_cast %98 : vector<8x1xf32> to vector<1x8x1xf32>
    tpu.vector_store %arg6[%c0_65, %c0_66, %c0_67], %104 {strides = array<i32>} : memref<1x8x1xf32, #tpu.memory_space<vmem>>, vector<1x8x1xf32>,
    return
  }
  func.func @transform_0(%arg0: i32) -> (i32, i32) {
    %c0_i32 = arith.constant 0 : i32
    %c0_i32_0 = arith.constant 0 : i32
    return %c0_i32, %arg0 : i32, i32
  }
  func.func @transform_1(%arg0: i32) -> (i32, i32, i32) {
    %c0_i32 = arith.constant 0 : i32
    %c0_i32_0 = arith.constant 0 : i32
    %c0_i32_1 = arith.constant 0 : i32
    %c0_i32_2 = arith.constant 0 : i32
    return %c0_i32, %c0_i32_0, %c0_i32_1 : i32, i32, i32
  }
  func.func @transform_2(%arg0: i32) -> (i32, i32) {
    %c0_i32 = arith.constant 0 : i32
    %c0_i32_0 = arith.constant 0 : i32
    %c0_i32_1 = arith.constant 0 : i32
    return %c0_i32, %c0_i32_0 : i32, i32
  }
  func.func @transform_3(%arg0: i32) -> (i32, i32, i32) {
    %c0_i32 = arith.constant 0 : i32
    %c0_i32_0 = arith.constant 0 : i32
    %c0_i32_1 = arith.constant 0 : i32
    return %c0_i32, %c0_i32_0, %arg0 : i32, i32, i32
  }
  func.func @transform_4(%arg0: i32) -> (i32, i32, i32) {
    %c0_i32 = arith.constant 0 : i32
    %c0_i32_0 = arith.constant 0 : i32
    %c0_i32_1 = arith.constant 0 : i32
    return %arg0, %c0_i32, %c0_i32_0 : i32, i32, i32
  }
  func.func @transform_5(%arg0: i32) -> (i32, i32, i32) {
    %c0_i32 = arith.constant 0 : i32
    %c0_i32_0 = arith.constant 0 : i32
    %c0_i32_1 = arith.constant 0 : i32
    return %arg0, %c0_i32, %c0_i32_0 : i32, i32, i32
  }
}

module attributes {stable_mosaic.version = 11 : i64} {
  func.func @bn_rgb_tanh_kernel(%arg0: i32, %arg1: memref<4x8x512xbf16, #tpu.memory_space<vmem>>, %arg2: memref<3x8xf32, #tpu.memory_space<vmem>>, %arg3: memref<3x1xf32, #tpu.memory_space<vmem>>, %arg4: memref<4x3x512xf32, #tpu.memory_space<vmem>>) attributes {dimension_semantics = [#tpu.dimension_semantics<parallel>], iteration_bounds = array<i64: 1>, scalar_prefetch = 0 : i64, scratch_operands = 0 : i64, tpu.core_type = #tpu.core_type<tc>, window_params = [{transform_indices = @transform_0, window_bounds = array<i64: 4, 8, 512>}, {pipeline_mode = #tpu.pipeline_mode<synchronous>, transform_indices = @transform_1, window_bounds = array<i64: 3, 8>}, {pipeline_mode = #tpu.pipeline_mode<synchronous>, transform_indices = @transform_2, window_bounds = array<i64: 3, 1>}, {transform_indices = @transform_3, window_bounds = array<i64: 4, 3, 512>}]} {
    %c0 = arith.constant 0 : index
    %c0_0 = arith.constant 0 : index
    %0 = vector.load %arg2[%c0, %c0_0] : memref<3x8xf32, #tpu.memory_space<vmem>>, vector<3x8xf32>
    %c0_1 = arith.constant 0 : index
    %c0_2 = arith.constant 0 : index
    %1 = vector.load %arg3[%c0_1, %c0_2] : memref<3x1xf32, #tpu.memory_space<vmem>>, vector<3x1xf32>
    %c0_3 = arith.constant 0 : index
    %c0_4 = arith.constant 0 : index
    %c0_5 = arith.constant 0 : index
    %2 = vector.load %arg1[%c0_3, %c0_4, %c0_5] : memref<4x8x512xbf16, #tpu.memory_space<vmem>>, vector<1x8x512xbf16>
    %3 = vector.shape_cast %2 : vector<1x8x512xbf16> to vector<8x512xbf16>
    %4 = arith.extf %3 : vector<8x512xbf16> to vector<8x512xf32>
    %cst = arith.constant dense<0.000000e+00> : vector<3x512xf32>
    %5 = tpu.matmul %0, %4, %cst {dimension_numbers = #tpu.dot_dimension_numbers<[1], [0], [0], [1], [0, 0, 1, 1], [], []>} : vector<3x8xf32>, vector<8x512xf32>, vector<3x512xf32> -> vector<3x512xf32>
    %6 = vector.broadcast %1 : vector<3x1xf32> to vector<3x512xf32>
    %7 = arith.addf %5, %6 : vector<3x512xf32>
    %8 = math.tanh %7 : vector<3x512xf32>
    %c0_6 = arith.constant 0 : index
    %c0_7 = arith.constant 0 : index
    %c0_8 = arith.constant 0 : index
    %9 = vector.load %arg4[%c0_6, %c0_7, %c0_8] : memref<4x3x512xf32, #tpu.memory_space<vmem>>, vector<1x3x512xf32>
    %10 = vector.shape_cast %9 : vector<1x3x512xf32> to vector<3x512xf32>
    %11 = vector.shape_cast %8 : vector<3x512xf32> to vector<1x3x512xf32>
    tpu.vector_store %arg4[%c0_6, %c0_7, %c0_8], %11 {strides = array<i32>} : memref<4x3x512xf32, #tpu.memory_space<vmem>>, vector<1x3x512xf32>,
    %c1 = arith.constant 1 : index
    %c0_9 = arith.constant 0 : index
    %c0_10 = arith.constant 0 : index
    %12 = vector.load %arg1[%c1, %c0_9, %c0_10] : memref<4x8x512xbf16, #tpu.memory_space<vmem>>, vector<1x8x512xbf16>
    %13 = vector.shape_cast %12 : vector<1x8x512xbf16> to vector<8x512xbf16>
    %14 = arith.extf %13 : vector<8x512xbf16> to vector<8x512xf32>
    %cst_11 = arith.constant dense<0.000000e+00> : vector<3x512xf32>
    %15 = tpu.matmul %0, %14, %cst_11 {dimension_numbers = #tpu.dot_dimension_numbers<[1], [0], [0], [1], [0, 0, 1, 1], [], []>} : vector<3x8xf32>, vector<8x512xf32>, vector<3x512xf32> -> vector<3x512xf32>
    %16 = vector.broadcast %1 : vector<3x1xf32> to vector<3x512xf32>
    %17 = arith.addf %15, %16 : vector<3x512xf32>
    %18 = math.tanh %17 : vector<3x512xf32>
    %c1_12 = arith.constant 1 : index
    %c0_13 = arith.constant 0 : index
    %c0_14 = arith.constant 0 : index
    %19 = vector.load %arg4[%c1_12, %c0_13, %c0_14] : memref<4x3x512xf32, #tpu.memory_space<vmem>>, vector<1x3x512xf32>
    %20 = vector.shape_cast %19 : vector<1x3x512xf32> to vector<3x512xf32>
    %21 = vector.shape_cast %18 : vector<3x512xf32> to vector<1x3x512xf32>
    tpu.vector_store %arg4[%c1_12, %c0_13, %c0_14], %21 {strides = array<i32>} : memref<4x3x512xf32, #tpu.memory_space<vmem>>, vector<1x3x512xf32>,
    %c2 = arith.constant 2 : index
    %c0_15 = arith.constant 0 : index
    %c0_16 = arith.constant 0 : index
    %22 = vector.load %arg1[%c2, %c0_15, %c0_16] : memref<4x8x512xbf16, #tpu.memory_space<vmem>>, vector<1x8x512xbf16>
    %23 = vector.shape_cast %22 : vector<1x8x512xbf16> to vector<8x512xbf16>
    %24 = arith.extf %23 : vector<8x512xbf16> to vector<8x512xf32>
    %cst_17 = arith.constant dense<0.000000e+00> : vector<3x512xf32>
    %25 = tpu.matmul %0, %24, %cst_17 {dimension_numbers = #tpu.dot_dimension_numbers<[1], [0], [0], [1], [0, 0, 1, 1], [], []>} : vector<3x8xf32>, vector<8x512xf32>, vector<3x512xf32> -> vector<3x512xf32>
    %26 = vector.broadcast %1 : vector<3x1xf32> to vector<3x512xf32>
    %27 = arith.addf %25, %26 : vector<3x512xf32>
    %28 = math.tanh %27 : vector<3x512xf32>
    %c2_18 = arith.constant 2 : index
    %c0_19 = arith.constant 0 : index
    %c0_20 = arith.constant 0 : index
    %29 = vector.load %arg4[%c2_18, %c0_19, %c0_20] : memref<4x3x512xf32, #tpu.memory_space<vmem>>, vector<1x3x512xf32>
    %30 = vector.shape_cast %29 : vector<1x3x512xf32> to vector<3x512xf32>
    %31 = vector.shape_cast %28 : vector<3x512xf32> to vector<1x3x512xf32>
    tpu.vector_store %arg4[%c2_18, %c0_19, %c0_20], %31 {strides = array<i32>} : memref<4x3x512xf32, #tpu.memory_space<vmem>>, vector<1x3x512xf32>,
    %c3 = arith.constant 3 : index
    %c0_21 = arith.constant 0 : index
    %c0_22 = arith.constant 0 : index
    %32 = vector.load %arg1[%c3, %c0_21, %c0_22] : memref<4x8x512xbf16, #tpu.memory_space<vmem>>, vector<1x8x512xbf16>
    %33 = vector.shape_cast %32 : vector<1x8x512xbf16> to vector<8x512xbf16>
    %34 = arith.extf %33 : vector<8x512xbf16> to vector<8x512xf32>
    %cst_23 = arith.constant dense<0.000000e+00> : vector<3x512xf32>
    %35 = tpu.matmul %0, %34, %cst_23 {dimension_numbers = #tpu.dot_dimension_numbers<[1], [0], [0], [1], [0, 0, 1, 1], [], []>} : vector<3x8xf32>, vector<8x512xf32>, vector<3x512xf32> -> vector<3x512xf32>
    %36 = vector.broadcast %1 : vector<3x1xf32> to vector<3x512xf32>
    %37 = arith.addf %35, %36 : vector<3x512xf32>
    %38 = math.tanh %37 : vector<3x512xf32>
    %c3_24 = arith.constant 3 : index
    %c0_25 = arith.constant 0 : index
    %c0_26 = arith.constant 0 : index
    %39 = vector.load %arg4[%c3_24, %c0_25, %c0_26] : memref<4x3x512xf32, #tpu.memory_space<vmem>>, vector<1x3x512xf32>
    %40 = vector.shape_cast %39 : vector<1x3x512xf32> to vector<3x512xf32>
    %41 = vector.shape_cast %38 : vector<3x512xf32> to vector<1x3x512xf32>
    tpu.vector_store %arg4[%c3_24, %c0_25, %c0_26], %41 {strides = array<i32>} : memref<4x3x512xf32, #tpu.memory_space<vmem>>, vector<1x3x512xf32>,
    return
  }
  func.func @transform_0(%arg0: i32) -> (i32, i32, i32) {
    %c0_i32 = arith.constant 0 : i32
    %c0_i32_0 = arith.constant 0 : i32
    %c0_i32_1 = arith.constant 0 : i32
    return %c0_i32, %c0_i32_0, %arg0 : i32, i32, i32
  }
  func.func @transform_1(%arg0: i32) -> (i32, i32) {
    %c0_i32 = arith.constant 0 : i32
    %c0_i32_0 = arith.constant 0 : i32
    %c0_i32_1 = arith.constant 0 : i32
    return %c0_i32, %c0_i32_0 : i32, i32
  }
  func.func @transform_2(%arg0: i32) -> (i32, i32) {
    %c0_i32 = arith.constant 0 : i32
    %c0_i32_0 = arith.constant 0 : i32
    %c0_i32_1 = arith.constant 0 : i32
    return %c0_i32, %c0_i32_0 : i32, i32
  }
  func.func @transform_3(%arg0: i32) -> (i32, i32, i32) {
    %c0_i32 = arith.constant 0 : i32
    %c0_i32_0 = arith.constant 0 : i32
    %c0_i32_1 = arith.constant 0 : i32
    return %c0_i32, %c0_i32_0, %arg0 : i32, i32, i32
  }
}

module attributes {stable_mosaic.version = 11 : i64} {
  func.func @conv_relu_stats_kernel(%arg0: i32, %arg1: memref<144x512xbf16, #tpu.memory_space<vmem>>, %arg2: memref<8x8x32xbf16, #tpu.memory_space<vmem>>, %arg3: memref<8x1xf32, #tpu.memory_space<vmem>>, %arg4: memref<4x8x512xbf16, #tpu.memory_space<vmem>>, %arg5: memref<1x8x1xf32, #tpu.memory_space<vmem>>, %arg6: memref<1x8x1xf32, #tpu.memory_space<vmem>>) attributes {dimension_semantics = [#tpu.dimension_semantics<parallel>], iteration_bounds = array<i64: 1>, scalar_prefetch = 0 : i64, scratch_operands = 0 : i64, tpu.core_type = #tpu.core_type<tc>, window_params = [{transform_indices = @transform_0, window_bounds = array<i64: 144, 512>}, {pipeline_mode = #tpu.pipeline_mode<synchronous>, transform_indices = @transform_1, window_bounds = array<i64: 8, 8, 32>}, {pipeline_mode = #tpu.pipeline_mode<synchronous>, transform_indices = @transform_2, window_bounds = array<i64: 8, 1>}, {transform_indices = @transform_3, window_bounds = array<i64: 4, 8, 512>}, {transform_indices = @transform_4, window_bounds = array<i64: 1, 8, 1>}, {transform_indices = @transform_5, window_bounds = array<i64: 1, 8, 1>}]} {
    %c0 = arith.constant 0 : index
    %c0_0 = arith.constant 0 : index
    %0 = vector.load %arg3[%c0, %c0_0] : memref<8x1xf32, #tpu.memory_space<vmem>>, vector<8x1xf32>
    %cst = arith.constant 0.000000e+00 : f32
    %1 = vector.broadcast %cst : f32 to vector<8x1xf32>
    %cst_1 = arith.constant 0.000000e+00 : f32
    %2 = vector.broadcast %cst_1 : f32 to vector<8x1xf32>
    %c0_2 = arith.constant 0 : index
    %c0_3 = arith.constant 0 : index
    %c0_4 = arith.constant 0 : index
    %3 = vector.load %arg2[%c0_2, %c0_3, %c0_4] : memref<8x8x32xbf16, #tpu.memory_space<vmem>>, vector<1x8x32xbf16>
    %4 = vector.shape_cast %3 : vector<1x8x32xbf16> to vector<8x32xbf16>
    %c0_5 = arith.constant 0 : index
    %c0_6 = arith.constant 0 : index
    %5 = vector.load %arg1[%c0_5, %c0_6] : memref<144x512xbf16, #tpu.memory_space<vmem>>, vector<32x512xbf16>
    %cst_7 = arith.constant dense<0.000000e+00> : vector<8x512xf32>
    %6 = tpu.matmul %4, %5, %cst_7 {dimension_numbers = #tpu.dot_dimension_numbers<[1], [0], [0], [1], [0, 0, 1, 1], [], []>} : vector<8x32xbf16>, vector<32x512xbf16>, vector<8x512xf32> -> vector<8x512xf32>
    %c1 = arith.constant 1 : index
    %c0_8 = arith.constant 0 : index
    %c0_9 = arith.constant 0 : index
    %7 = vector.load %arg2[%c1, %c0_8, %c0_9] : memref<8x8x32xbf16, #tpu.memory_space<vmem>>, vector<1x8x32xbf16>
    %8 = vector.shape_cast %7 : vector<1x8x32xbf16> to vector<8x32xbf16>
    %c48 = arith.constant 48 : index
    %c0_10 = arith.constant 0 : index
    %9 = vector.load %arg1[%c48, %c0_10] : memref<144x512xbf16, #tpu.memory_space<vmem>>, vector<32x512xbf16>
    %cst_11 = arith.constant dense<0.000000e+00> : vector<8x512xf32>
    %10 = tpu.matmul %8, %9, %cst_11 {dimension_numbers = #tpu.dot_dimension_numbers<[1], [0], [0], [1], [0, 0, 1, 1], [], []>} : vector<8x32xbf16>, vector<32x512xbf16>, vector<8x512xf32> -> vector<8x512xf32>
    %11 = arith.addf %6, %10 : vector<8x512xf32>
    %12 = vector.broadcast %0 : vector<8x1xf32> to vector<8x512xf32>
    %13 = arith.addf %11, %12 : vector<8x512xf32>
    %cst_12 = arith.constant 0.000000e+00 : f32
    %14 = vector.broadcast %cst_12 : f32 to vector<8x512xf32>
    %15 = arith.maximumf %13, %14 : vector<8x512xf32>
    %16 = arith.truncf %15 : vector<8x512xf32> to vector<8x512xbf16>
    %c0_13 = arith.constant 0 : index
    %c0_14 = arith.constant 0 : index
    %c0_15 = arith.constant 0 : index
    %17 = vector.load %arg4[%c0_13, %c0_14, %c0_15] : memref<4x8x512xbf16, #tpu.memory_space<vmem>>, vector<1x8x512xbf16>
    %18 = vector.shape_cast %17 : vector<1x8x512xbf16> to vector<8x512xbf16>
    %19 = vector.shape_cast %16 : vector<8x512xbf16> to vector<1x8x512xbf16>
    tpu.vector_store %arg4[%c0_13, %c0_14, %c0_15], %19 {strides = array<i32>} : memref<4x8x512xbf16, #tpu.memory_space<vmem>>, vector<1x8x512xbf16>,
    %cst_16 = arith.constant dense<0.000000e+00> : vector<8xf32>
    %20 = vector.multi_reduction <add>, %15, %cst_16 [1] : vector<8x512xf32> to vector<8xf32>
    %21 = vector.shape_cast %20 : vector<8xf32> to vector<8x1xf32>
    %22 = arith.addf %1, %21 : vector<8x1xf32>
    %23 = arith.mulf %15, %15 : vector<8x512xf32>
    %cst_17 = arith.constant dense<0.000000e+00> : vector<8xf32>
    %24 = vector.multi_reduction <add>, %23, %cst_17 [1] : vector<8x512xf32> to vector<8xf32>
    %25 = vector.shape_cast %24 : vector<8xf32> to vector<8x1xf32>
    %26 = arith.addf %2, %25 : vector<8x1xf32>
    %c2 = arith.constant 2 : index
    %c0_18 = arith.constant 0 : index
    %c0_19 = arith.constant 0 : index
    %27 = vector.load %arg2[%c2, %c0_18, %c0_19] : memref<8x8x32xbf16, #tpu.memory_space<vmem>>, vector<1x8x32xbf16>
    %28 = vector.shape_cast %27 : vector<1x8x32xbf16> to vector<8x32xbf16>
    %c16 = arith.constant 16 : index
    %c0_20 = arith.constant 0 : index
    %29 = vector.load %arg1[%c16, %c0_20] : memref<144x512xbf16, #tpu.memory_space<vmem>>, vector<32x512xbf16>
    %cst_21 = arith.constant dense<0.000000e+00> : vector<8x512xf32>
    %30 = tpu.matmul %28, %29, %cst_21 {dimension_numbers = #tpu.dot_dimension_numbers<[1], [0], [0], [1], [0, 0, 1, 1], [], []>} : vector<8x32xbf16>, vector<32x512xbf16>, vector<8x512xf32> -> vector<8x512xf32>
    %c3 = arith.constant 3 : index
    %c0_22 = arith.constant 0 : index
    %c0_23 = arith.constant 0 : index
    %31 = vector.load %arg2[%c3, %c0_22, %c0_23] : memref<8x8x32xbf16, #tpu.memory_space<vmem>>, vector<1x8x32xbf16>
    %32 = vector.shape_cast %31 : vector<1x8x32xbf16> to vector<8x32xbf16>
    %c64 = arith.constant 64 : index
    %c0_24 = arith.constant 0 : index
    %33 = vector.load %arg1[%c64, %c0_24] : memref<144x512xbf16, #tpu.memory_space<vmem>>, vector<32x512xbf16>
    %cst_25 = arith.constant dense<0.000000e+00> : vector<8x512xf32>
    %34 = tpu.matmul %32, %33, %cst_25 {dimension_numbers = #tpu.dot_dimension_numbers<[1], [0], [0], [1], [0, 0, 1, 1], [], []>} : vector<8x32xbf16>, vector<32x512xbf16>, vector<8x512xf32> -> vector<8x512xf32>
    %35 = arith.addf %30, %34 : vector<8x512xf32>
    %36 = vector.broadcast %0 : vector<8x1xf32> to vector<8x512xf32>
    %37 = arith.addf %35, %36 : vector<8x512xf32>
    %cst_26 = arith.constant 0.000000e+00 : f32
    %38 = vector.broadcast %cst_26 : f32 to vector<8x512xf32>
    %39 = arith.maximumf %37, %38 : vector<8x512xf32>
    %40 = arith.truncf %39 : vector<8x512xf32> to vector<8x512xbf16>
    %c1_27 = arith.constant 1 : index
    %c0_28 = arith.constant 0 : index
    %c0_29 = arith.constant 0 : index
    %41 = vector.load %arg4[%c1_27, %c0_28, %c0_29] : memref<4x8x512xbf16, #tpu.memory_space<vmem>>, vector<1x8x512xbf16>
    %42 = vector.shape_cast %41 : vector<1x8x512xbf16> to vector<8x512xbf16>
    %43 = vector.shape_cast %40 : vector<8x512xbf16> to vector<1x8x512xbf16>
    tpu.vector_store %arg4[%c1_27, %c0_28, %c0_29], %43 {strides = array<i32>} : memref<4x8x512xbf16, #tpu.memory_space<vmem>>, vector<1x8x512xbf16>,
    %cst_30 = arith.constant dense<0.000000e+00> : vector<8xf32>
    %44 = vector.multi_reduction <add>, %39, %cst_30 [1] : vector<8x512xf32> to vector<8xf32>
    %45 = vector.shape_cast %44 : vector<8xf32> to vector<8x1xf32>
    %46 = arith.addf %22, %45 : vector<8x1xf32>
    %47 = arith.mulf %39, %39 : vector<8x512xf32>
    %cst_31 = arith.constant dense<0.000000e+00> : vector<8xf32>
    %48 = vector.multi_reduction <add>, %47, %cst_31 [1] : vector<8x512xf32> to vector<8xf32>
    %49 = vector.shape_cast %48 : vector<8xf32> to vector<8x1xf32>
    %50 = arith.addf %26, %49 : vector<8x1xf32>
    %c4 = arith.constant 4 : index
    %c0_32 = arith.constant 0 : index
    %c0_33 = arith.constant 0 : index
    %51 = vector.load %arg2[%c4, %c0_32, %c0_33] : memref<8x8x32xbf16, #tpu.memory_space<vmem>>, vector<1x8x32xbf16>
    %52 = vector.shape_cast %51 : vector<1x8x32xbf16> to vector<8x32xbf16>
    %c48_34 = arith.constant 48 : index
    %c0_35 = arith.constant 0 : index
    %53 = vector.load %arg1[%c48_34, %c0_35] : memref<144x512xbf16, #tpu.memory_space<vmem>>, vector<32x512xbf16>
    %cst_36 = arith.constant dense<0.000000e+00> : vector<8x512xf32>
    %54 = tpu.matmul %52, %53, %cst_36 {dimension_numbers = #tpu.dot_dimension_numbers<[1], [0], [0], [1], [0, 0, 1, 1], [], []>} : vector<8x32xbf16>, vector<32x512xbf16>, vector<8x512xf32> -> vector<8x512xf32>
    %c5 = arith.constant 5 : index
    %c0_37 = arith.constant 0 : index
    %c0_38 = arith.constant 0 : index
    %55 = vector.load %arg2[%c5, %c0_37, %c0_38] : memref<8x8x32xbf16, #tpu.memory_space<vmem>>, vector<1x8x32xbf16>
    %56 = vector.shape_cast %55 : vector<1x8x32xbf16> to vector<8x32xbf16>
    %c96 = arith.constant 96 : index
    %c0_39 = arith.constant 0 : index
    %57 = vector.load %arg1[%c96, %c0_39] : memref<144x512xbf16, #tpu.memory_space<vmem>>, vector<32x512xbf16>
    %cst_40 = arith.constant dense<0.000000e+00> : vector<8x512xf32>
    %58 = tpu.matmul %56, %57, %cst_40 {dimension_numbers = #tpu.dot_dimension_numbers<[1], [0], [0], [1], [0, 0, 1, 1], [], []>} : vector<8x32xbf16>, vector<32x512xbf16>, vector<8x512xf32> -> vector<8x512xf32>
    %59 = arith.addf %54, %58 : vector<8x512xf32>
    %60 = vector.broadcast %0 : vector<8x1xf32> to vector<8x512xf32>
    %61 = arith.addf %59, %60 : vector<8x512xf32>
    %cst_41 = arith.constant 0.000000e+00 : f32
    %62 = vector.broadcast %cst_41 : f32 to vector<8x512xf32>
    %63 = arith.maximumf %61, %62 : vector<8x512xf32>
    %64 = arith.truncf %63 : vector<8x512xf32> to vector<8x512xbf16>
    %c2_42 = arith.constant 2 : index
    %c0_43 = arith.constant 0 : index
    %c0_44 = arith.constant 0 : index
    %65 = vector.load %arg4[%c2_42, %c0_43, %c0_44] : memref<4x8x512xbf16, #tpu.memory_space<vmem>>, vector<1x8x512xbf16>
    %66 = vector.shape_cast %65 : vector<1x8x512xbf16> to vector<8x512xbf16>
    %67 = vector.shape_cast %64 : vector<8x512xbf16> to vector<1x8x512xbf16>
    tpu.vector_store %arg4[%c2_42, %c0_43, %c0_44], %67 {strides = array<i32>} : memref<4x8x512xbf16, #tpu.memory_space<vmem>>, vector<1x8x512xbf16>,
    %cst_45 = arith.constant dense<0.000000e+00> : vector<8xf32>
    %68 = vector.multi_reduction <add>, %63, %cst_45 [1] : vector<8x512xf32> to vector<8xf32>
    %69 = vector.shape_cast %68 : vector<8xf32> to vector<8x1xf32>
    %70 = arith.addf %46, %69 : vector<8x1xf32>
    %71 = arith.mulf %63, %63 : vector<8x512xf32>
    %cst_46 = arith.constant dense<0.000000e+00> : vector<8xf32>
    %72 = vector.multi_reduction <add>, %71, %cst_46 [1] : vector<8x512xf32> to vector<8xf32>
    %73 = vector.shape_cast %72 : vector<8xf32> to vector<8x1xf32>
    %74 = arith.addf %50, %73 : vector<8x1xf32>
    %c6 = arith.constant 6 : index
    %c0_47 = arith.constant 0 : index
    %c0_48 = arith.constant 0 : index
    %75 = vector.load %arg2[%c6, %c0_47, %c0_48] : memref<8x8x32xbf16, #tpu.memory_space<vmem>>, vector<1x8x32xbf16>
    %76 = vector.shape_cast %75 : vector<1x8x32xbf16> to vector<8x32xbf16>
    %c64_49 = arith.constant 64 : index
    %c0_50 = arith.constant 0 : index
    %77 = vector.load %arg1[%c64_49, %c0_50] : memref<144x512xbf16, #tpu.memory_space<vmem>>, vector<32x512xbf16>
    %cst_51 = arith.constant dense<0.000000e+00> : vector<8x512xf32>
    %78 = tpu.matmul %76, %77, %cst_51 {dimension_numbers = #tpu.dot_dimension_numbers<[1], [0], [0], [1], [0, 0, 1, 1], [], []>} : vector<8x32xbf16>, vector<32x512xbf16>, vector<8x512xf32> -> vector<8x512xf32>
    %c7 = arith.constant 7 : index
    %c0_52 = arith.constant 0 : index
    %c0_53 = arith.constant 0 : index
    %79 = vector.load %arg2[%c7, %c0_52, %c0_53] : memref<8x8x32xbf16, #tpu.memory_space<vmem>>, vector<1x8x32xbf16>
    %80 = vector.shape_cast %79 : vector<1x8x32xbf16> to vector<8x32xbf16>
    %c112 = arith.constant 112 : index
    %c0_54 = arith.constant 0 : index
    %81 = vector.load %arg1[%c112, %c0_54] : memref<144x512xbf16, #tpu.memory_space<vmem>>, vector<32x512xbf16>
    %cst_55 = arith.constant dense<0.000000e+00> : vector<8x512xf32>
    %82 = tpu.matmul %80, %81, %cst_55 {dimension_numbers = #tpu.dot_dimension_numbers<[1], [0], [0], [1], [0, 0, 1, 1], [], []>} : vector<8x32xbf16>, vector<32x512xbf16>, vector<8x512xf32> -> vector<8x512xf32>
    %83 = arith.addf %78, %82 : vector<8x512xf32>
    %84 = vector.broadcast %0 : vector<8x1xf32> to vector<8x512xf32>
    %85 = arith.addf %83, %84 : vector<8x512xf32>
    %cst_56 = arith.constant 0.000000e+00 : f32
    %86 = vector.broadcast %cst_56 : f32 to vector<8x512xf32>
    %87 = arith.maximumf %85, %86 : vector<8x512xf32>
    %88 = arith.truncf %87 : vector<8x512xf32> to vector<8x512xbf16>
    %c3_57 = arith.constant 3 : index
    %c0_58 = arith.constant 0 : index
    %c0_59 = arith.constant 0 : index
    %89 = vector.load %arg4[%c3_57, %c0_58, %c0_59] : memref<4x8x512xbf16, #tpu.memory_space<vmem>>, vector<1x8x512xbf16>
    %90 = vector.shape_cast %89 : vector<1x8x512xbf16> to vector<8x512xbf16>
    %91 = vector.shape_cast %88 : vector<8x512xbf16> to vector<1x8x512xbf16>
    tpu.vector_store %arg4[%c3_57, %c0_58, %c0_59], %91 {strides = array<i32>} : memref<4x8x512xbf16, #tpu.memory_space<vmem>>, vector<1x8x512xbf16>,
    %cst_60 = arith.constant dense<0.000000e+00> : vector<8xf32>
    %92 = vector.multi_reduction <add>, %87, %cst_60 [1] : vector<8x512xf32> to vector<8xf32>
    %93 = vector.shape_cast %92 : vector<8xf32> to vector<8x1xf32>
    %94 = arith.addf %70, %93 : vector<8x1xf32>
    %95 = arith.mulf %87, %87 : vector<8x512xf32>
    %cst_61 = arith.constant dense<0.000000e+00> : vector<8xf32>
    %96 = vector.multi_reduction <add>, %95, %cst_61 [1] : vector<8x512xf32> to vector<8xf32>
    %97 = vector.shape_cast %96 : vector<8xf32> to vector<8x1xf32>
    %98 = arith.addf %74, %97 : vector<8x1xf32>
    %c0_62 = arith.constant 0 : index
    %c0_63 = arith.constant 0 : index
    %c0_64 = arith.constant 0 : index
    %99 = vector.load %arg5[%c0_62, %c0_63, %c0_64] : memref<1x8x1xf32, #tpu.memory_space<vmem>>, vector<1x8x1xf32>
    %100 = vector.shape_cast %99 : vector<1x8x1xf32> to vector<8x1xf32>
    %101 = vector.shape_cast %94 : vector<8x1xf32> to vector<1x8x1xf32>
    tpu.vector_store %arg5[%c0_62, %c0_63, %c0_64], %101 {strides = array<i32>} : memref<1x8x1xf32, #tpu.memory_space<vmem>>, vector<1x8x1xf32>,
    %c0_65 = arith.constant 0 : index
    %c0_66 = arith.constant 0 : index
    %c0_67 = arith.constant 0 : index
    %102 = vector.load %arg6[%c0_65, %c0_66, %c0_67] : memref<1x8x1xf32, #tpu.memory_space<vmem>>, vector<1x8x1xf32>
    %103 = vector.shape_cast %102 : vector<1x8x1xf32> to vector<8x1xf32>
    %104 = vector.shape_cast %98 : vector<8x1xf32> to vector<1x8x1xf32>
    tpu.vector_store %arg6[%c0_65, %c0_66, %c0_67], %104 {strides = array<i32>} : memref<1x8x1xf32, #tpu.memory_space<vmem>>, vector<1x8x1xf32>,
    return
  }
  func.func @transform_0(%arg0: i32) -> (i32, i32) {
    %c0_i32 = arith.constant 0 : i32
    %c0_i32_0 = arith.constant 0 : i32
    return %c0_i32, %arg0 : i32, i32
  }
  func.func @transform_1(%arg0: i32) -> (i32, i32, i32) {
    %c0_i32 = arith.constant 0 : i32
    %c0_i32_0 = arith.constant 0 : i32
    %c0_i32_1 = arith.constant 0 : i32
    %c0_i32_2 = arith.constant 0 : i32
    return %c0_i32, %c0_i32_0, %c0_i32_1 : i32, i32, i32
  }
  func.func @transform_2(%arg0: i32) -> (i32, i32) {
    %c0_i32 = arith.constant 0 : i32
    %c0_i32_0 = arith.constant 0 : i32
    %c0_i32_1 = arith.constant 0 : i32
    return %c0_i32, %c0_i32_0 : i32, i32
  }
  func.func @transform_3(%arg0: i32) -> (i32, i32, i32) {
    %c0_i32 = arith.constant 0 : i32
    %c0_i32_0 = arith.constant 0 : i32
    %c0_i32_1 = arith.constant 0 : i32
    return %c0_i32, %c0_i32_0, %arg0 : i32, i32, i32
  }
  func.func @transform_4(%arg0: i32) -> (i32, i32, i32) {
    %c0_i32 = arith.constant 0 : i32
    %c0_i32_0 = arith.constant 0 : i32
    %c0_i32_1 = arith.constant 0 : i32
    return %arg0, %c0_i32, %c0_i32_0 : i32, i32, i32
  }
  func.func @transform_5(%arg0: i32) -> (i32, i32, i32) {
    %c0_i32 = arith.constant 0 : i32
    %c0_i32_0 = arith.constant 0 : i32
    %c0_i32_1 = arith.constant 0 : i32
    return %arg0, %c0_i32, %c0_i32_0 : i32, i32, i32
  }
}

module attributes {stable_mosaic.version = 11 : i64} {
  func.func @bn_rgb_tanh_kernel(%arg0: i32, %arg1: memref<4x8x512xbf16, #tpu.memory_space<vmem>>, %arg2: memref<3x8xf32, #tpu.memory_space<vmem>>, %arg3: memref<3x1xf32, #tpu.memory_space<vmem>>, %arg4: memref<4x3x512xf32, #tpu.memory_space<vmem>>) attributes {dimension_semantics = [#tpu.dimension_semantics<parallel>], iteration_bounds = array<i64: 1>, scalar_prefetch = 0 : i64, scratch_operands = 0 : i64, tpu.core_type = #tpu.core_type<tc>, window_params = [{transform_indices = @transform_0, window_bounds = array<i64: 4, 8, 512>}, {pipeline_mode = #tpu.pipeline_mode<synchronous>, transform_indices = @transform_1, window_bounds = array<i64: 3, 8>}, {pipeline_mode = #tpu.pipeline_mode<synchronous>, transform_indices = @transform_2, window_bounds = array<i64: 3, 1>}, {transform_indices = @transform_3, window_bounds = array<i64: 4, 3, 512>}]} {
    %c0 = arith.constant 0 : index
    %c0_0 = arith.constant 0 : index
    %0 = vector.load %arg2[%c0, %c0_0] : memref<3x8xf32, #tpu.memory_space<vmem>>, vector<3x8xf32>
    %c0_1 = arith.constant 0 : index
    %c0_2 = arith.constant 0 : index
    %1 = vector.load %arg3[%c0_1, %c0_2] : memref<3x1xf32, #tpu.memory_space<vmem>>, vector<3x1xf32>
    %c0_3 = arith.constant 0 : index
    %c0_4 = arith.constant 0 : index
    %c0_5 = arith.constant 0 : index
    %2 = vector.load %arg1[%c0_3, %c0_4, %c0_5] : memref<4x8x512xbf16, #tpu.memory_space<vmem>>, vector<1x8x512xbf16>
    %3 = vector.shape_cast %2 : vector<1x8x512xbf16> to vector<8x512xbf16>
    %4 = arith.extf %3 : vector<8x512xbf16> to vector<8x512xf32>
    %cst = arith.constant dense<0.000000e+00> : vector<3x512xf32>
    %5 = tpu.matmul %0, %4, %cst {dimension_numbers = #tpu.dot_dimension_numbers<[1], [0], [0], [1], [0, 0, 1, 1], [], []>} : vector<3x8xf32>, vector<8x512xf32>, vector<3x512xf32> -> vector<3x512xf32>
    %6 = vector.broadcast %1 : vector<3x1xf32> to vector<3x512xf32>
    %7 = arith.addf %5, %6 : vector<3x512xf32>
    %8 = math.tanh %7 : vector<3x512xf32>
    %c0_6 = arith.constant 0 : index
    %c0_7 = arith.constant 0 : index
    %c0_8 = arith.constant 0 : index
    %9 = vector.load %arg4[%c0_6, %c0_7, %c0_8] : memref<4x3x512xf32, #tpu.memory_space<vmem>>, vector<1x3x512xf32>
    %10 = vector.shape_cast %9 : vector<1x3x512xf32> to vector<3x512xf32>
    %11 = vector.shape_cast %8 : vector<3x512xf32> to vector<1x3x512xf32>
    tpu.vector_store %arg4[%c0_6, %c0_7, %c0_8], %11 {strides = array<i32>} : memref<4x3x512xf32, #tpu.memory_space<vmem>>, vector<1x3x512xf32>,
    %c1 = arith.constant 1 : index
    %c0_9 = arith.constant 0 : index
    %c0_10 = arith.constant 0 : index
    %12 = vector.load %arg1[%c1, %c0_9, %c0_10] : memref<4x8x512xbf16, #tpu.memory_space<vmem>>, vector<1x8x512xbf16>
    %13 = vector.shape_cast %12 : vector<1x8x512xbf16> to vector<8x512xbf16>
    %14 = arith.extf %13 : vector<8x512xbf16> to vector<8x512xf32>
    %cst_11 = arith.constant dense<0.000000e+00> : vector<3x512xf32>
    %15 = tpu.matmul %0, %14, %cst_11 {dimension_numbers = #tpu.dot_dimension_numbers<[1], [0], [0], [1], [0, 0, 1, 1], [], []>} : vector<3x8xf32>, vector<8x512xf32>, vector<3x512xf32> -> vector<3x512xf32>
    %16 = vector.broadcast %1 : vector<3x1xf32> to vector<3x512xf32>
    %17 = arith.addf %15, %16 : vector<3x512xf32>
    %18 = math.tanh %17 : vector<3x512xf32>
    %c1_12 = arith.constant 1 : index
    %c0_13 = arith.constant 0 : index
    %c0_14 = arith.constant 0 : index
    %19 = vector.load %arg4[%c1_12, %c0_13, %c0_14] : memref<4x3x512xf32, #tpu.memory_space<vmem>>, vector<1x3x512xf32>
    %20 = vector.shape_cast %19 : vector<1x3x512xf32> to vector<3x512xf32>
    %21 = vector.shape_cast %18 : vector<3x512xf32> to vector<1x3x512xf32>
    tpu.vector_store %arg4[%c1_12, %c0_13, %c0_14], %21 {strides = array<i32>} : memref<4x3x512xf32, #tpu.memory_space<vmem>>, vector<1x3x512xf32>,
    %c2 = arith.constant 2 : index
    %c0_15 = arith.constant 0 : index
    %c0_16 = arith.constant 0 : index
    %22 = vector.load %arg1[%c2, %c0_15, %c0_16] : memref<4x8x512xbf16, #tpu.memory_space<vmem>>, vector<1x8x512xbf16>
    %23 = vector.shape_cast %22 : vector<1x8x512xbf16> to vector<8x512xbf16>
    %24 = arith.extf %23 : vector<8x512xbf16> to vector<8x512xf32>
    %cst_17 = arith.constant dense<0.000000e+00> : vector<3x512xf32>
    %25 = tpu.matmul %0, %24, %cst_17 {dimension_numbers = #tpu.dot_dimension_numbers<[1], [0], [0], [1], [0, 0, 1, 1], [], []>} : vector<3x8xf32>, vector<8x512xf32>, vector<3x512xf32> -> vector<3x512xf32>
    %26 = vector.broadcast %1 : vector<3x1xf32> to vector<3x512xf32>
    %27 = arith.addf %25, %26 : vector<3x512xf32>
    %28 = math.tanh %27 : vector<3x512xf32>
    %c2_18 = arith.constant 2 : index
    %c0_19 = arith.constant 0 : index
    %c0_20 = arith.constant 0 : index
    %29 = vector.load %arg4[%c2_18, %c0_19, %c0_20] : memref<4x3x512xf32, #tpu.memory_space<vmem>>, vector<1x3x512xf32>
    %30 = vector.shape_cast %29 : vector<1x3x512xf32> to vector<3x512xf32>
    %31 = vector.shape_cast %28 : vector<3x512xf32> to vector<1x3x512xf32>
    tpu.vector_store %arg4[%c2_18, %c0_19, %c0_20], %31 {strides = array<i32>} : memref<4x3x512xf32, #tpu.memory_space<vmem>>, vector<1x3x512xf32>,
    %c3 = arith.constant 3 : index
    %c0_21 = arith.constant 0 : index
    %c0_22 = arith.constant 0 : index
    %32 = vector.load %arg1[%c3, %c0_21, %c0_22] : memref<4x8x512xbf16, #tpu.memory_space<vmem>>, vector<1x8x512xbf16>
    %33 = vector.shape_cast %32 : vector<1x8x512xbf16> to vector<8x512xbf16>
    %34 = arith.extf %33 : vector<8x512xbf16> to vector<8x512xf32>
    %cst_23 = arith.constant dense<0.000000e+00> : vector<3x512xf32>
    %35 = tpu.matmul %0, %34, %cst_23 {dimension_numbers = #tpu.dot_dimension_numbers<[1], [0], [0], [1], [0, 0, 1, 1], [], []>} : vector<3x8xf32>, vector<8x512xf32>, vector<3x512xf32> -> vector<3x512xf32>
    %36 = vector.broadcast %1 : vector<3x1xf32> to vector<3x512xf32>
    %37 = arith.addf %35, %36 : vector<3x512xf32>
    %38 = math.tanh %37 : vector<3x512xf32>
    %c3_24 = arith.constant 3 : index
    %c0_25 = arith.constant 0 : index
    %c0_26 = arith.constant 0 : index
    %39 = vector.load %arg4[%c3_24, %c0_25, %c0_26] : memref<4x3x512xf32, #tpu.memory_space<vmem>>, vector<1x3x512xf32>
    %40 = vector.shape_cast %39 : vector<1x3x512xf32> to vector<3x512xf32>
    %41 = vector.shape_cast %38 : vector<3x512xf32> to vector<1x3x512xf32>
    tpu.vector_store %arg4[%c3_24, %c0_25, %c0_26], %41 {strides = array<i32>} : memref<4x3x512xf32, #tpu.memory_space<vmem>>, vector<1x3x512xf32>,
    return
  }
  func.func @transform_0(%arg0: i32) -> (i32, i32, i32) {
    %c0_i32 = arith.constant 0 : i32
    %c0_i32_0 = arith.constant 0 : i32
    %c0_i32_1 = arith.constant 0 : i32
    return %c0_i32, %c0_i32_0, %arg0 : i32, i32, i32
  }
  func.func @transform_1(%arg0: i32) -> (i32, i32) {
    %c0_i32 = arith.constant 0 : i32
    %c0_i32_0 = arith.constant 0 : i32
    %c0_i32_1 = arith.constant 0 : i32
    return %c0_i32, %c0_i32_0 : i32, i32
  }
  func.func @transform_2(%arg0: i32) -> (i32, i32) {
    %c0_i32 = arith.constant 0 : i32
    %c0_i32_0 = arith.constant 0 : i32
    %c0_i32_1 = arith.constant 0 : i32
    return %c0_i32, %c0_i32_0 : i32, i32
  }
  func.func @transform_3(%arg0: i32) -> (i32, i32, i32) {
    %c0_i32 = arith.constant 0 : i32
    %c0_i32_0 = arith.constant 0 : i32
    %c0_i32_1 = arith.constant 0 : i32
    return %c0_i32, %c0_i32_0, %arg0 : i32, i32, i32
  }
}

</mosaic_0001>

<llo_original>
// kernel: genconv_forward.3
$region0: #{genconv_forward.3}
  #allocation0 [shape = 'u32[]', space=smem, size = 0x4, offset = 0x4, fixed_abs, tag = 'smem constant byte address 0x4 - core index']
  #allocation1 [shape = 'u32[144,128]{1,0:T(1,128)}', space=vmem, size = 0x12000, scoped, tag = 'internal scratch']
  %s0 = inlined_call_operand.vmem [shape: bf16[4,8,512], index: 0, kind: input, shape index: {}]
  %s1 = inlined_call_operand.vmem [shape: f32[3,8], index: 1, kind: input, shape index: {}]
  %s2 = inlined_call_operand.vmem [shape: f32[3,1], index: 2, kind: input, shape index: {}]
  %s3 = inlined_call_operand.vmem [shape: f32[4,3,512], index: 3, kind: output, shape index: {}]
  %s4 = sld [smem:[#allocation0]]
  $region22: #{genconv_forward.3} parent=0
    _
  %s6 = ssub.s32 1, %s4
  %s7 = scalar_select 0, %s6, %s4
  // Predicated region
  $region2: #{genconv_forward.3} parent=0 // pred_check
    _
  $region3: #{genconv_forward.3} parent=0 // pred_check_branch
    %9 = sbr.rel (0) target = $region5
  $region4: #{genconv_forward.3} parent=0 // pred_region
    _
  $region5: #{genconv_forward.3} parent=0 // pred_fallthru
    _
  // Predicated region
  $region6: #{genconv_forward.3} parent=0 // pred_check
    _
  $region7: #{genconv_forward.3} parent=0 // pred_check_branch
    %11 = sbr.rel (0) target = $region9
  $region8: #{genconv_forward.3} parent=0 // pred_region
    _
  $region9: #{genconv_forward.3} parent=0 // pred_fallthru
    _
  // Predicated region
  $region10: #{genconv_forward.3} parent=0 // pred_check
    _
  $region11: #{genconv_forward.3} parent=0 // pred_check_branch
    %13 = sbr.rel (0) target = $region13
  $region12: #{genconv_forward.3} parent=0 // pred_region
    _
  $region13: #{genconv_forward.3} parent=0 // pred_fallthru
    _
  %v14 = vld [vmem:[%s1] sm:$0x7]
  %v15 = vld [vmem:[%s2] sm:$0x7]
  %v16 = vld [vmem:[%s0] sm:$0xff]
  %v17 = vld [vmem:[%s0 + $0x8] sm:$0xff]
  %v18 = vunpack.c.l.bf16 %v16
  %v19 = vunpack.c.h.bf16 %v16
  %v20 = vunpack.c.l.bf16 %v17
  %v21 = vunpack.c.h.bf16 %v17
  %23 = vset.pattern.permute.xlu0 0
  %24 = vperm.xlu0 %23, %v15
  %v25 = vpop.permute.xlu0 %24
  %vm27 = vcmask 64512
  %v29 = vsel %vm27, %v14, 0
  %31 = vmatprep.subr.mxu0 %v19
  %32 = vmatpush1.msra.mxu0 %v18
  %33 = vmatprep.subr.mxu0 0.0
  %34 = vmatpush1.msra.mxu0 0.0
  %35 = vmatprep.subr.mxu0 0.0
  %36 = vmatpush1.msra.mxu0 0.0
  %37 = vmatprep.subr.mxu0 0.0
  %38 = vmatpush1.msra.mxu0 0.0
  %39 = vmatprep.subr.mxu0 0.0
  %40 = vmatpush1.msra.mxu0 0.0
  %41 = vmatprep.subr.mxu0 0.0
  %42 = vmatpush1.msra.mxu0 0.0
  %43 = vmatprep.subr.mxu0 0.0
  %44 = vmatpush1.msra.mxu0 0.0
  %45 = vmatprep.subr.mxu0 0.0
  %46 = vmatpush1.msra.mxu0 0.0
  %47 = vmatprep.subr.mxu0 0.0
  %48 = vmatpush1.msra.mxu0 0.0
  %49 = vmatprep.subr.mxu0 0.0
  %50 = vmatpush1.msra.mxu0 0.0
  %51 = vmatprep.subr.mxu0 0.0
  %52 = vmatpush1.msra.mxu0 0.0
  %53 = vmatprep.subr.mxu0 0.0
  %54 = vmatpush1.msra.mxu0 0.0
  %55 = vmatprep.subr.mxu0 0.0
  %56 = vmatpush1.msra.mxu0 0.0
  %57 = vmatprep.subr.mxu0 0.0
  %58 = vmatpush1.msra.mxu0 0.0
  %59 = vmatprep.subr.mxu0 0.0
  %60 = vmatpush1.msra.mxu0 0.0
  %61 = vmatprep.subr.mxu0 0.0
  %62 = vmatpush1.msra.mxu0 0.0
  %63 = vmatprep.subr.mxu0 0.0
  %64 = vmatpush1.msra.mxu0 0.0
  %65 = vmatprep.subr.mxu0 0.0
  %66 = vmatpush1.msra.mxu0 0.0
  %67 = vmatprep.subr.mxu0 0.0
  %68 = vmatpush1.msra.mxu0 0.0
  %69 = vmatprep.subr.mxu0 0.0
  %70 = vmatpush1.msra.mxu0 0.0
  %71 = vmatprep.subr.mxu0 0.0
  %72 = vmatpush1.msra.mxu0 0.0
  %73 = vmatprep.subr.mxu0 0.0
  %74 = vmatpush1.msra.mxu0 0.0
  %75 = vmatprep.subr.mxu0 0.0
  %76 = vmatpush1.msra.mxu0 0.0
  %77 = vmatprep.subr.mxu0 0.0
  %78 = vmatpush1.msra.mxu0 0.0
  %79 = vmatprep.subr.mxu0 0.0
  %80 = vmatpush1.msra.mxu0 0.0
  %81 = vmatprep.subr.mxu0 0.0
  %82 = vmatpush1.msra.mxu0 0.0
  %83 = vmatprep.subr.mxu0 0.0
  %84 = vmatpush1.msra.mxu0 0.0
  %85 = vmatprep.subr.mxu0 0.0
  %86 = vmatpush1.msra.mxu0 0.0
  %87 = vmatprep.subr.mxu0 0.0
  %88 = vmatpush1.msra.mxu0 0.0
  %89 = vmatprep.subr.mxu0 0.0
  %90 = vmatpush1.msra.mxu0 0.0
  %91 = vmatprep.subr.mxu0 0.0
  %92 = vmatpush1.msra.mxu0 0.0
  %93 = vmatprep.subr.mxu0 0.0
  %94 = vmatpush1.msra.mxu0 0.0
  %95 = vmatprep.mubr.f32.mxu0 0.0
  %96 = vmatmul.mubr.f32.gmra.mrb[0].mxu0 %v29
  %v97 = vpop.f32.mrb[0].mxu0
  %v98 = vadd.f32 %v25, %v97
  %v99 = vpop.f32.mrb[0].mxu0
  %v100 = vadd.f32 %v25, %v99
  %101 = vdwg.mxu0
  %102 = vmatprep.subr.mxu0 %v21
  %103 = vmatpush1.msra.mxu0 %v20
  %104 = vmatprep.subr.mxu0 0.0
  %105 = vmatpush1.msra.mxu0 0.0
  %106 = vmatprep.subr.mxu0 0.0
  %107 = vmatpush1.msra.mxu0 0.0
  %108 = vmatprep.subr.mxu0 0.0
  %109 = vmatpush1.msra.mxu0 0.0
  %110 = vmatprep.subr.mxu0 0.0
  %111 = vmatpush1.msra.mxu0 0.0
  %112 = vmatprep.subr.mxu0 0.0
  %113 = vmatpush1.msra.mxu0 0.0
  %114 = vmatprep.subr.mxu0 0.0
  %115 = vmatpush1.msra.mxu0 0.0
  %116 = vmatprep.subr.mxu0 0.0
  %117 = vmatpush1.msra.mxu0 0.0
  %118 = vmatprep.subr.mxu0 0.0
  %119 = vmatpush1.msra.mxu0 0.0
  %120 = vmatprep.subr.mxu0 0.0
  %121 = vmatpush1.msra.mxu0 0.0
  %122 = vmatprep.subr.mxu0 0.0
  %123 = vmatpush1.msra.mxu0 0.0
  %124 = vmatprep.subr.mxu0 0.0
  %125 = vmatpush1.msra.mxu0 0.0
  %126 = vmatprep.subr.mxu0 0.0
  %127 = vmatpush1.msra.mxu0 0.0
  %128 = vmatprep.subr.mxu0 0.0
  %129 = vmatpush1.msra.mxu0 0.0
  %130 = vmatprep.subr.mxu0 0.0
  %131 = vmatpush1.msra.mxu0 0.0
  %132 = vmatprep.subr.mxu0 0.0
  %133 = vmatpush1.msra.mxu0 0.0
  %134 = vmatprep.subr.mxu0 0.0
  %135 = vmatpush1.msra.mxu0 0.0
  %136 = vmatprep.subr.mxu0 0.0
  %137 = vmatpush1.msra.mxu0 0.0
  %138 = vmatprep.subr.mxu0 0.0
  %139 = vmatpush1.msra.mxu0 0.0
  %140 = vmatprep.subr.mxu0 0.0
  %141 = vmatpush1.msra.mxu0 0.0
  %142 = vmatprep.subr.mxu0 0.0
  %143 = vmatpush1.msra.mxu0 0.0
  %144 = vmatprep.subr.mxu0 0.0
  %145 = vmatpush1.msra.mxu0 0.0
  %146 = vmatprep.subr.mxu0 0.0
  %147 = vmatpush1.msra.mxu0 0.0
  %148 = vmatprep.subr.mxu0 0.0
  %149 = vmatpush1.msra.mxu0 0.0
  %150 = vmatprep.subr.mxu0 0.0
  %151 = vmatpush1.msra.mxu0 0.0
  %152 = vmatprep.subr.mxu0 0.0
  %153 = vmatpush1.msra.mxu0 0.0
  %154 = vmatprep.subr.mxu0 0.0
  %155 = vmatpush1.msra.mxu0 0.0
  %156 = vmatprep.subr.mxu0 0.0
  %157 = vmatpush1.msra.mxu0 0.0
  %158 = vmatprep.subr.mxu0 0.0
  %159 = vmatpush1.msra.mxu0 0.0
  %160 = vmatprep.subr.mxu0 0.0
  %161 = vmatpush1.msra.mxu0 0.0
  %162 = vmatprep.subr.mxu0 0.0
  %163 = vmatpush1.msra.mxu0 0.0
  %164 = vmatprep.subr.mxu0 0.0
  %165 = vmatpush1.msra.mxu0 0.0
  %166 = vmatprep.mubr.f32.mxu0 0.0
  %167 = vmatmul.mubr.f32.gmra.mrb[0].mxu0 %v29
  %v168 = vpop.f32.mrb[0].mxu0
  %v169 = vadd.f32 %v25, %v168
  %v170 = vpop.f32.mrb[0].mxu0
  %v171 = vadd.f32 %v25, %v170
  %172 = vdwg.mxu0
  %v173 = vtanh.pop %v98
  %v174 = vtanh.pop %v100
  %v175 = vtanh.pop %v169
  %v176 = vtanh.pop %v171
  %v181 = vcombine.low %v173, %v174
  %v182 = vcombine.low %v175, %v176
  %185 = vst [vmem:[%s3] sm:$0x77] %v181
  %186 = vst [vmem:[%s3 + $0x8] sm:$0x77] %v182
  %s187 = scalar_lea.vmem %s0, 16
  %v188 = vld [vmem:[%s187] sm:$0xff]
  %v189 = vld [vmem:[%s187 + $0x8] sm:$0xff]
  %v190 = vunpack.c.l.bf16 %v188
  %v191 = vunpack.c.h.bf16 %v188
  %v192 = vunpack.c.l.bf16 %v189
  %v193 = vunpack.c.h.bf16 %v189
  %194 = vmatprep.subr.mxu0 %v191
  %195 = vmatpush1.msra.mxu0 %v190
  %196 = vmatprep.subr.mxu0 0.0
  %197 = vmatpush1.msra.mxu0 0.0
  %198 = vmatprep.subr.mxu0 0.0
  %199 = vmatpush1.msra.mxu0 0.0
  %200 = vmatprep.subr.mxu0 0.0
  %201 = vmatpush1.msra.mxu0 0.0
  %202 = vmatprep.subr.mxu0 0.0
  %203 = vmatpush1.msra.mxu0 0.0
  %204 = vmatprep.subr.mxu0 0.0
  %205 = vmatpush1.msra.mxu0 0.0
  %206 = vmatprep.subr.mxu0 0.0
  %207 = vmatpush1.msra.mxu0 0.0
  %208 = vmatprep.subr.mxu0 0.0
  %209 = vmatpush1.msra.mxu0 0.0
  %210 = vmatprep.subr.mxu0 0.0
  %211 = vmatpush1.msra.mxu0 0.0
  %212 = vmatprep.subr.mxu0 0.0
  %213 = vmatpush1.msra.mxu0 0.0
  %214 = vmatprep.subr.mxu0 0.0
  %215 = vmatpush1.msra.mxu0 0.0
  %216 = vmatprep.subr.mxu0 0.0
  %217 = vmatpush1.msra.mxu0 0.0
  %218 = vmatprep.subr.mxu0 0.0
  %219 = vmatpush1.msra.mxu0 0.0
  %220 = vmatprep.subr.mxu0 0.0
  %221 = vmatpush1.msra.mxu0 0.0
  %222 = vmatprep.subr.mxu0 0.0
  %223 = vmatpush1.msra.mxu0 0.0
  %224 = vmatprep.subr.mxu0 0.0
  %225 = vmatpush1.msra.mxu0 0.0
  %226 = vmatprep.subr.mxu0 0.0
  %227 = vmatpush1.msra.mxu0 0.0
  %228 = vmatprep.subr.mxu0 0.0
  %229 = vmatpush1.msra.mxu0 0.0
  %230 = vmatprep.subr.mxu0 0.0
  %231 = vmatpush1.msra.mxu0 0.0
  %232 = vmatprep.subr.mxu0 0.0
  %233 = vmatpush1.msra.mxu0 0.0
  %234 = vmatprep.subr.mxu0 0.0
  %235 = vmatpush1.msra.mxu0 0.0
  %236 = vmatprep.subr.mxu0 0.0
  %237 = vmatpush1.msra.mxu0 0.0
  %238 = vmatprep.subr.mxu0 0.0
  %239 = vmatpush1.msra.mxu0 0.0
  %240 = vmatprep.subr.mxu0 0.0
  %241 = vmatpush1.msra.mxu0 0.0
  %242 = vmatprep.subr.mxu0 0.0
  %243 = vmatpush1.msra.mxu0 0.0
  %244 = vmatprep.subr.mxu0 0.0
  %245 = vmatpush1.msra.mxu0 0.0
  %246 = vmatprep.subr.mxu0 0.0
  %247 = vmatpush1.msra.mxu0 0.0
  %248 = vmatprep.subr.mxu0 0.0
  %249 = vmatpush1.msra.mxu0 0.0
  %250 = vmatprep.subr.mxu0 0.0
  %251 = vmatpush1.msra.mxu0 0.0
  %252 = vmatprep.subr.mxu0 0.0
  %253 = vmatpush1.msra.mxu0 0.0
  %254 = vmatprep.subr.mxu0 0.0
  %255 = vmatpush1.msra.mxu0 0.0
  %256 = vmatprep.subr.mxu0 0.0
  %257 = vmatpush1.msra.mxu0 0.0
  %258 = vmatprep.mubr.f32.mxu0 0.0
  %259 = vmatmul.mubr.f32.gmra.mrb[0].mxu0 %v29
  %v260 = vpop.f32.mrb[0].mxu0
  %v261 = vadd.f32 %v25, %v260
  %v262 = vpop.f32.mrb[0].mxu0
  %v263 = vadd.f32 %v25, %v262
  %264 = vdwg.mxu0
  %265 = vmatprep.subr.mxu0 %v193
  %266 = vmatpush1.msra.mxu0 %v192
  %267 = vmatprep.subr.mxu0 0.0
  %268 = vmatpush1.msra.mxu0 0.0
  %269 = vmatprep.subr.mxu0 0.0
  %270 = vmatpush1.msra.mxu0 0.0
  %271 = vmatprep.subr.mxu0 0.0
  %272 = vmatpush1.msra.mxu0 0.0
  %273 = vmatprep.subr.mxu0 0.0
  %274 = vmatpush1.msra.mxu0 0.0
  %275 = vmatprep.subr.mxu0 0.0
  %276 = vmatpush1.msra.mxu0 0.0
  %277 = vmatprep.subr.mxu0 0.0
  %278 = vmatpush1.msra.mxu0 0.0
  %279 = vmatprep.subr.mxu0 0.0
  %280 = vmatpush1.msra.mxu0 0.0
  %281 = vmatprep.subr.mxu0 0.0
  %282 = vmatpush1.msra.mxu0 0.0
  %283 = vmatprep.subr.mxu0 0.0
  %284 = vmatpush1.msra.mxu0 0.0
  %285 = vmatprep.subr.mxu0 0.0
  %286 = vmatpush1.msra.mxu0 0.0
  %287 = vmatprep.subr.mxu0 0.0
  %288 = vmatpush1.msra.mxu0 0.0
  %289 = vmatprep.subr.mxu0 0.0
  %290 = vmatpush1.msra.mxu0 0.0
  %291 = vmatprep.subr.mxu0 0.0
  %292 = vmatpush1.msra.mxu0 0.0
  %293 = vmatprep.subr.mxu0 0.0
  %294 = vmatpush1.msra.mxu0 0.0
  %295 = vmatprep.subr.mxu0 0.0
  %296 = vmatpush1.msra.mxu0 0.0
  %297 = vmatprep.subr.mxu0 0.0
  %298 = vmatpush1.msra.mxu0 0.0
  %299 = vmatprep.subr.mxu0 0.0
  %300 = vmatpush1.msra.mxu0 0.0
  %301 = vmatprep.subr.mxu0 0.0
  %302 = vmatpush1.msra.mxu0 0.0
  %303 = vmatprep.subr.mxu0 0.0
  %304 = vmatpush1.msra.mxu0 0.0
  %305 = vmatprep.subr.mxu0 0.0
  %306 = vmatpush1.msra.mxu0 0.0
  %307 = vmatprep.subr.mxu0 0.0
  %308 = vmatpush1.msra.mxu0 0.0
  %309 = vmatprep.subr.mxu0 0.0
  %310 = vmatpush1.msra.mxu0 0.0
  %311 = vmatprep.subr.mxu0 0.0
  %312 = vmatpush1.msra.mxu0 0.0
  %313 = vmatprep.subr.mxu0 0.0
  %314 = vmatpush1.msra.mxu0 0.0
  %315 = vmatprep.subr.mxu0 0.0
  %316 = vmatpush1.msra.mxu0 0.0
  %317 = vmatprep.subr.mxu0 0.0
  %318 = vmatpush1.msra.mxu0 0.0
  %319 = vmatprep.subr.mxu0 0.0
  %320 = vmatpush1.msra.mxu0 0.0
  %321 = vmatprep.subr.mxu0 0.0
  %322 = vmatpush1.msra.mxu0 0.0
  %323 = vmatprep.subr.mxu0 0.0
  %324 = vmatpush1.msra.mxu0 0.0
  %325 = vmatprep.subr.mxu0 0.0
  %326 = vmatpush1.msra.mxu0 0.0
  %327 = vmatprep.subr.mxu0 0.0
  %328 = vmatpush1.msra.mxu0 0.0
  %329 = vmatprep.mubr.f32.mxu0 0.0
  %330 = vmatmul.mubr.f32.gmra.mrb[0].mxu0 %v29
  %v331 = vpop.f32.mrb[0].mxu0
  %v332 = vadd.f32 %v25, %v331
  %v333 = vpop.f32.mrb[0].mxu0
  %v334 = vadd.f32 %v25, %v333
  %335 = vdwg.mxu0
  %v336 = vtanh.pop %v261
  %v337 = vtanh.pop %v263
  %v338 = vtanh.pop %v332
  %v339 = vtanh.pop %v334
  %v344 = vcombine.low %v336, %v337
  %v345 = vcombine.low %v338, %v339
  %s348 = scalar_lea.vmem %s3, 16
  %349 = vst [vmem:[%s348] sm:$0x77] %v344
  %350 = vst [vmem:[%s348 + $0x8] sm:$0x77] %v345
  %s351 = scalar_lea.vmem %s0, 32
  %v352 = vld [vmem:[%s351] sm:$0xff]
  %v353 = vld [vmem:[%s351 + $0x8] sm:$0xff]
  %v354 = vunpack.c.l.bf16 %v352
  %v355 = vunpack.c.h.bf16 %v352
  %v356 = vunpack.c.l.bf16 %v353
  %v357 = vunpack.c.h.bf16 %v353
  %358 = vmatprep.subr.mxu0 %v355
  %359 = vmatpush1.msra.mxu0 %v354
  %360 = vmatprep.subr.mxu0 0.0
  %361 = vmatpush1.msra.mxu0 0.0
  %362 = vmatprep.subr.mxu0 0.0
  %363 = vmatpush1.msra.mxu0 0.0
  %364 = vmatprep.subr.mxu0 0.0
  %365 = vmatpush1.msra.mxu0 0.0
  %366 = vmatprep.subr.mxu0 0.0
  %367 = vmatpush1.msra.mxu0 0.0
  %368 = vmatprep.subr.mxu0 0.0
  %369 = vmatpush1.msra.mxu0 0.0
  %370 = vmatprep.subr.mxu0 0.0
  %371 = vmatpush1.msra.mxu0 0.0
  %372 = vmatprep.subr.mxu0 0.0
  %373 = vmatpush1.msra.mxu0 0.0
  %374 = vmatprep.subr.mxu0 0.0
  %375 = vmatpush1.msra.mxu0 0.0
  %376 = vmatprep.subr.mxu0 0.0
  %377 = vmatpush1.msra.mxu0 0.0
  %378 = vmatprep.subr.mxu0 0.0
  %379 = vmatpush1.msra.mxu0 0.0
  %380 = vmatprep.subr.mxu0 0.0
  %381 = vmatpush1.msra.mxu0 0.0
  %382 = vmatprep.subr.mxu0 0.0
  %383 = vmatpush1.msra.mxu0 0.0
  %384 = vmatprep.subr.mxu0 0.0
  %385 = vmatpush1.msra.mxu0 0.0
  %386 = vmatprep.subr.mxu0 0.0
  %387 = vmatpush1.msra.mxu0 0.0
  %388 = vmatprep.subr.mxu0 0.0
  %389 = vmatpush1.msra.mxu0 0.0
  %390 = vmatprep.subr.mxu0 0.0
  %391 = vmatpush1.msra.mxu0 0.0
  %392 = vmatprep.subr.mxu0 0.0
  %393 = vmatpush1.msra.mxu0 0.0
  %394 = vmatprep.subr.mxu0 0.0
  %395 = vmatpush1.msra.mxu0 0.0
  %396 = vmatprep.subr.mxu0 0.0
  %397 = vmatpush1.msra.mxu0 0.0
  %398 = vmatprep.subr.mxu0 0.0
  %399 = vmatpush1.msra.mxu0 0.0
  %400 = vmatprep.subr.mxu0 0.0
  %401 = vmatpush1.msra.mxu0 0.0
  %402 = vmatprep.subr.mxu0 0.0
  %403 = vmatpush1.msra.mxu0 0.0
  %404 = vmatprep.subr.mxu0 0.0
  %405 = vmatpush1.msra.mxu0 0.0
  %406 = vmatprep.subr.mxu0 0.0
  %407 = vmatpush1.msra.mxu0 0.0
  %408 = vmatprep.subr.mxu0 0.0
  %409 = vmatpush1.msra.mxu0 0.0
  %410 = vmatprep.subr.mxu0 0.0
  %411 = vmatpush1.msra.mxu0 0.0
  %412 = vmatprep.subr.mxu0 0.0
  %413 = vmatpush1.msra.mxu0 0.0
  %414 = vmatprep.subr.mxu0 0.0
  %415 = vmatpush1.msra.mxu0 0.0
  %416 = vmatprep.subr.mxu0 0.0
  %417 = vmatpush1.msra.mxu0 0.0
  %418 = vmatprep.subr.mxu0 0.0
  %419 = vmatpush1.msra.mxu0 0.0
  %420 = vmatprep.subr.mxu0 0.0
  %421 = vmatpush1.msra.mxu0 0.0
  %422 = vmatprep.mubr.f32.mxu0 0.0
  %423 = vmatmul.mubr.f32.gmra.mrb[0].mxu0 %v29
  %v424 = vpop.f32.mrb[0].mxu0
  %v425 = vadd.f32 %v25, %v424
  %v426 = vpop.f32.mrb[0].mxu0
  %v427 = vadd.f32 %v25, %v426
  %428 = vdwg.mxu0
  %429 = vmatprep.subr.mxu0 %v357
  %430 = vmatpush1.msra.mxu0 %v356
  %431 = vmatprep.subr.mxu0 0.0
  %432 = vmatpush1.msra.mxu0 0.0
  %433 = vmatprep.subr.mxu0 0.0
  %434 = vmatpush1.msra.mxu0 0.0
  %435 = vmatprep.subr.mxu0 0.0
  %436 = vmatpush1.msra.mxu0 0.0
  %437 = vmatprep.subr.mxu0 0.0
  %438 = vmatpush1.msra.mxu0 0.0
  %439 = vmatprep.subr.mxu0 0.0
  %440 = vmatpush1.msra.mxu0 0.0
  %441 = vmatprep.subr.mxu0 0.0
  %442 = vmatpush1.msra.mxu0 0.0
  %443 = vmatprep.subr.mxu0 0.0
  %444 = vmatpush1.msra.mxu0 0.0
  %445 = vmatprep.subr.mxu0 0.0
  %446 = vmatpush1.msra.mxu0 0.0
  %447 = vmatprep.subr.mxu0 0.0
  %448 = vmatpush1.msra.mxu0 0.0
  %449 = vmatprep.subr.mxu0 0.0
  %450 = vmatpush1.msra.mxu0 0.0
  %451 = vmatprep.subr.mxu0 0.0
  %452 = vmatpush1.msra.mxu0 0.0
  %453 = vmatprep.subr.mxu0 0.0
  %454 = vmatpush1.msra.mxu0 0.0
  %455 = vmatprep.subr.mxu0 0.0
  %456 = vmatpush1.msra.mxu0 0.0
  %457 = vmatprep.subr.mxu0 0.0
  %458 = vmatpush1.msra.mxu0 0.0
  %459 = vmatprep.subr.mxu0 0.0
  %460 = vmatpush1.msra.mxu0 0.0
  %461 = vmatprep.subr.mxu0 0.0
  %462 = vmatpush1.msra.mxu0 0.0
  %463 = vmatprep.subr.mxu0 0.0
  %464 = vmatpush1.msra.mxu0 0.0
  %465 = vmatprep.subr.mxu0 0.0
  %466 = vmatpush1.msra.mxu0 0.0
  %467 = vmatprep.subr.mxu0 0.0
  %468 = vmatpush1.msra.mxu0 0.0
  %469 = vmatprep.subr.mxu0 0.0
  %470 = vmatpush1.msra.mxu0 0.0
  %471 = vmatprep.subr.mxu0 0.0
  %472 = vmatpush1.msra.mxu0 0.0
  %473 = vmatprep.subr.mxu0 0.0
  %474 = vmatpush1.msra.mxu0 0.0
  %475 = vmatprep.subr.mxu0 0.0
  %476 = vmatpush1.msra.mxu0 0.0
  %477 = vmatprep.subr.mxu0 0.0
  %478 = vmatpush1.msra.mxu0 0.0
  %479 = vmatprep.subr.mxu0 0.0
  %480 = vmatpush1.msra.mxu0 0.0
  %481 = vmatprep.subr.mxu0 0.0
  %482 = vmatpush1.msra.mxu0 0.0
  %483 = vmatprep.subr.mxu0 0.0
  %484 = vmatpush1.msra.mxu0 0.0
  %485 = vmatprep.subr.mxu0 0.0
  %486 = vmatpush1.msra.mxu0 0.0
  %487 = vmatprep.subr.mxu0 0.0
  %488 = vmatpush1.msra.mxu0 0.0
  %489 = vmatprep.subr.mxu0 0.0
  %490 = vmatpush1.msra.mxu0 0.0
  %491 = vmatprep.subr.mxu0 0.0
  %492 = vmatpush1.msra.mxu0 0.0
  %493 = vmatprep.mubr.f32.mxu0 0.0
  %494 = vmatmul.mubr.f32.gmra.mrb[0].mxu0 %v29
  %v495 = vpop.f32.mrb[0].mxu0
  %v496 = vadd.f32 %v25, %v495
  %v497 = vpop.f32.mrb[0].mxu0
  %v498 = vadd.f32 %v25, %v497
  %499 = vdwg.mxu0
  %v500 = vtanh.pop %v425
  %v501 = vtanh.pop %v427
  %v502 = vtanh.pop %v496
  %v503 = vtanh.pop %v498
  %v508 = vcombine.low %v500, %v501
  %v509 = vcombine.low %v502, %v503
  %s512 = scalar_lea.vmem %s3, 32
  %513 = vst [vmem:[%s512] sm:$0x77] %v508
  %514 = vst [vmem:[%s512 + $0x8] sm:$0x77] %v509
  %s515 = scalar_lea.vmem %s0, 48
  %v516 = vld [vmem:[%s515] sm:$0xff]
  %v517 = vld [vmem:[%s515 + $0x8] sm:$0xff]
  %v518 = vunpack.c.l.bf16 %v516
  %v519 = vunpack.c.h.bf16 %v516
  %v520 = vunpack.c.l.bf16 %v517
  %v521 = vunpack.c.h.bf16 %v517
  %522 = vmatprep.subr.mxu0 %v519
  %523 = vmatpush1.msra.mxu0 %v518
  %524 = vmatprep.subr.mxu0 0.0
  %525 = vmatpush1.msra.mxu0 0.0
  %526 = vmatprep.subr.mxu0 0.0
  %527 = vmatpush1.msra.mxu0 0.0
  %528 = vmatprep.subr.mxu0 0.0
  %529 = vmatpush1.msra.mxu0 0.0
  %530 = vmatprep.subr.mxu0 0.0
  %531 = vmatpush1.msra.mxu0 0.0
  %532 = vmatprep.subr.mxu0 0.0
  %533 = vmatpush1.msra.mxu0 0.0
  %534 = vmatprep.subr.mxu0 0.0
  %535 = vmatpush1.msra.mxu0 0.0
  %536 = vmatprep.subr.mxu0 0.0
  %537 = vmatpush1.msra.mxu0 0.0
  %538 = vmatprep.subr.mxu0 0.0
  %539 = vmatpush1.msra.mxu0 0.0
  %540 = vmatprep.subr.mxu0 0.0
  %541 = vmatpush1.msra.mxu0 0.0
  %542 = vmatprep.subr.mxu0 0.0
  %543 = vmatpush1.msra.mxu0 0.0
  %544 = vmatprep.subr.mxu0 0.0
  %545 = vmatpush1.msra.mxu0 0.0
  %546 = vmatprep.subr.mxu0 0.0
  %547 = vmatpush1.msra.mxu0 0.0
  %548 = vmatprep.subr.mxu0 0.0
  %549 = vmatpush1.msra.mxu0 0.0
  %550 = vmatprep.subr.mxu0 0.0
  %551 = vmatpush1.msra.mxu0 0.0
  %552 = vmatprep.subr.mxu0 0.0
  %553 = vmatpush1.msra.mxu0 0.0
  %554 = vmatprep.subr.mxu0 0.0
  %555 = vmatpush1.msra.mxu0 0.0
  %556 = vmatprep.subr.mxu0 0.0
  %557 = vmatpush1.msra.mxu0 0.0
  %558 = vmatprep.subr.mxu0 0.0
  %559 = vmatpush1.msra.mxu0 0.0
  %560 = vmatprep.subr.mxu0 0.0
  %561 = vmatpush1.msra.mxu0 0.0
  %562 = vmatprep.subr.mxu0 0.0
  %563 = vmatpush1.msra.mxu0 0.0
  %564 = vmatprep.subr.mxu0 0.0
  %565 = vmatpush1.msra.mxu0 0.0
  %566 = vmatprep.subr.mxu0 0.0
  %567 = vmatpush1.msra.mxu0 0.0
  %568 = vmatprep.subr.mxu0 0.0
  %569 = vmatpush1.msra.mxu0 0.0
  %570 = vmatprep.subr.mxu0 0.0
  %571 = vmatpush1.msra.mxu0 0.0
  %572 = vmatprep.subr.mxu0 0.0
  %573 = vmatpush1.msra.mxu0 0.0
  %574 = vmatprep.subr.mxu0 0.0
  %575 = vmatpush1.msra.mxu0 0.0
  %576 = vmatprep.subr.mxu0 0.0
  %577 = vmatpush1.msra.mxu0 0.0
  %578 = vmatprep.subr.mxu0 0.0
  %579 = vmatpush1.msra.mxu0 0.0
  %580 = vmatprep.subr.mxu0 0.0
  %581 = vmatpush1.msra.mxu0 0.0
  %582 = vmatprep.subr.mxu0 0.0
  %583 = vmatpush1.msra.mxu0 0.0
  %584 = vmatprep.subr.mxu0 0.0
  %585 = vmatpush1.msra.mxu0 0.0
  %586 = vmatprep.mubr.f32.mxu0 0.0
  %587 = vmatmul.mubr.f32.gmra.mrb[0].mxu0 %v29
  %v588 = vpop.f32.mrb[0].mxu0
  %v589 = vadd.f32 %v25, %v588
  %v590 = vpop.f32.mrb[0].mxu0
  %v591 = vadd.f32 %v25, %v590
  %592 = vdwg.mxu0
  %593 = vmatprep.subr.mxu0 %v521
  %594 = vmatpush1.msra.mxu0 %v520
  %595 = vmatprep.subr.mxu0 0.0
  %596 = vmatpush1.msra.mxu0 0.0
  %597 = vmatprep.subr.mxu0 0.0
  %598 = vmatpush1.msra.mxu0 0.0
  %599 = vmatprep.subr.mxu0 0.0
  %600 = vmatpush1.msra.mxu0 0.0
  %601 = vmatprep.subr.mxu0 0.0
  %602 = vmatpush1.msra.mxu0 0.0
  %603 = vmatprep.subr.mxu0 0.0
  %604 = vmatpush1.msra.mxu0 0.0
  %605 = vmatprep.subr.mxu0 0.0
  %606 = vmatpush1.msra.mxu0 0.0
  %607 = vmatprep.subr.mxu0 0.0
  %608 = vmatpush1.msra.mxu0 0.0
  %609 = vmatprep.subr.mxu0 0.0
  %610 = vmatpush1.msra.mxu0 0.0
  %611 = vmatprep.subr.mxu0 0.0
  %612 = vmatpush1.msra.mxu0 0.0
  %613 = vmatprep.subr.mxu0 0.0
  %614 = vmatpush1.msra.mxu0 0.0
  %615 = vmatprep.subr.mxu0 0.0
  %616 = vmatpush1.msra.mxu0 0.0
  %617 = vmatprep.subr.mxu0 0.0
  %618 = vmatpush1.msra.mxu0 0.0
  %619 = vmatprep.subr.mxu0 0.0
  %620 = vmatpush1.msra.mxu0 0.0
  %621 = vmatprep.subr.mxu0 0.0
  %622 = vmatpush1.msra.mxu0 0.0
  %623 = vmatprep.subr.mxu0 0.0
  %624 = vmatpush1.msra.mxu0 0.0
  %625 = vmatprep.subr.mxu0 0.0
  %626 = vmatpush1.msra.mxu0 0.0
  %627 = vmatprep.subr.mxu0 0.0
  %628 = vmatpush1.msra.mxu0 0.0
  %629 = vmatprep.subr.mxu0 0.0
  %630 = vmatpush1.msra.mxu0 0.0
  %631 = vmatprep.subr.mxu0 0.0
  %632 = vmatpush1.msra.mxu0 0.0
  %633 = vmatprep.subr.mxu0 0.0
  %634 = vmatpush1.msra.mxu0 0.0
  %635 = vmatprep.subr.mxu0 0.0
  %636 = vmatpush1.msra.mxu0 0.0
  %637 = vmatprep.subr.mxu0 0.0
  %638 = vmatpush1.msra.mxu0 0.0
  %639 = vmatprep.subr.mxu0 0.0
  %640 = vmatpush1.msra.mxu0 0.0
  %641 = vmatprep.subr.mxu0 0.0
  %642 = vmatpush1.msra.mxu0 0.0
  %643 = vmatprep.subr.mxu0 0.0
  %644 = vmatpush1.msra.mxu0 0.0
  %645 = vmatprep.subr.mxu0 0.0
  %646 = vmatpush1.msra.mxu0 0.0
  %647 = vmatprep.subr.mxu0 0.0
  %648 = vmatpush1.msra.mxu0 0.0
  %649 = vmatprep.subr.mxu0 0.0
  %650 = vmatpush1.msra.mxu0 0.0
  %651 = vmatprep.subr.mxu0 0.0
  %652 = vmatpush1.msra.mxu0 0.0
  %653 = vmatprep.subr.mxu0 0.0
  %654 = vmatpush1.msra.mxu0 0.0
  %655 = vmatprep.subr.mxu0 0.0
  %656 = vmatpush1.msra.mxu0 0.0
  %657 = vmatprep.mubr.f32.mxu0 0.0
  %658 = vmatmul.mubr.f32.gmra.mrb[0].mxu0 %v29
  %v659 = vpop.f32.mrb[0].mxu0
  %v660 = vadd.f32 %v25, %v659
  %v661 = vpop.f32.mrb[0].mxu0
  %v662 = vadd.f32 %v25, %v661
  %663 = vdwg.mxu0
  %v664 = vtanh.pop %v589
  %v665 = vtanh.pop %v591
  %v666 = vtanh.pop %v660
  %v667 = vtanh.pop %v662
  %v672 = vcombine.low %v664, %v665
  %v673 = vcombine.low %v666, %v667
  %s676 = scalar_lea.vmem %s3, 48
  %677 = vst [vmem:[%s676] sm:$0x77] %v672
  %678 = vst [vmem:[%s676 + $0x8] sm:$0x77] %v673
  // Predicated region
  $region14: #{genconv_forward.3} parent=0 // pred_check
    _
  $region15: #{genconv_forward.3} parent=0 // pred_check_branch
    %680 = sbr.rel (0) target = $region17
  $region16: #{genconv_forward.3} parent=0 // pred_region
    _
  $region17: #{genconv_forward.3} parent=0 // pred_fallthru
    _
  // Predicated region
  $region18: #{genconv_forward.3} parent=0 // pred_check
    _
  $region19: #{genconv_forward.3} parent=0 // pred_check_branch
    %682 = sbr.rel (0) target = $region21
  $region20: #{genconv_forward.3} parent=0 // pred_region
    _
  $region21: #{genconv_forward.3} parent=0 // pred_fallthru
    _

// kernel: genconv_forward.2
$region0: #{genconv_forward.2}
  #allocation0 [shape = 'u32[]', space=smem, size = 0x4, offset = 0x4, fixed_abs, tag = 'smem constant byte address 0x4 - core index']
  #allocation1 [shape = 'u32[144,128]{1,0:T(1,128)}', space=vmem, size = 0x12000, scoped, tag = 'internal scratch']
  %s0 = inlined_call_operand.vmem [shape: bf16[144,512], index: 0, kind: input, shape index: {}]
  %s1 = inlined_call_operand.vmem [shape: bf16[8,8,32], index: 1, kind: input, shape index: {}]
  %s2 = inlined_call_operand.vmem [shape: f32[8,1], index: 2, kind: input, shape index: {}]
  %s3 = inlined_call_operand.vmem [shape: bf16[4,8,512], index: 3, kind: output, shape index: {0}]
  %s4 = inlined_call_operand.vmem [shape: f32[1,8,1], index: 4, kind: output, shape index: {1}]
  %s5 = inlined_call_operand.vmem [shape: f32[1,8,1], index: 5, kind: output, shape index: {2}]
  %6 = xla_tuple %s3, %s4, %s5
  %s7 = sld [smem:[#allocation0]]
  $region38: #{genconv_forward.2} parent=0
    _
  %s9 = ssub.s32 1, %s7
  %s10 = scalar_select 0, %s9, %s7
  // Predicated region
  $region2: #{genconv_forward.2} parent=0 // pred_check
    _
  $region3: #{genconv_forward.2} parent=0 // pred_check_branch
    %12 = sbr.rel (0) target = $region5
  $region4: #{genconv_forward.2} parent=0 // pred_region
    _
  $region5: #{genconv_forward.2} parent=0 // pred_fallthru
    _
  // Predicated region
  $region6: #{genconv_forward.2} parent=0 // pred_check
    _
  $region7: #{genconv_forward.2} parent=0 // pred_check_branch
    %14 = sbr.rel (0) target = $region9
  $region8: #{genconv_forward.2} parent=0 // pred_region
    _
  $region9: #{genconv_forward.2} parent=0 // pred_fallthru
    _
  // Predicated region
  $region10: #{genconv_forward.2} parent=0 // pred_check
    _
  $region11: #{genconv_forward.2} parent=0 // pred_check_branch
    %16 = sbr.rel (0) target = $region13
  $region12: #{genconv_forward.2} parent=0 // pred_region
    _
  $region13: #{genconv_forward.2} parent=0 // pred_fallthru
    _
  %v18 = vld [vmem:[%s2] sm:$0xff]
  %v19 = vld [vmem:[%s1] sm:$0xf]
  %v20 = vld [vmem:[%s0] sm:$0xff]
  %v21 = vld [vmem:[%s0 + $0x8] sm:$0xff]
  %v22 = vld [vmem:[%s0 + $0x10] sm:$0xff]
  %v23 = vld [vmem:[%s0 + $0x18] sm:$0xff]
  %v24 = vld [vmem:[%s0 + $0x20] sm:$0xff]
  %v25 = vld [vmem:[%s0 + $0x28] sm:$0xff]
  %v26 = vld [vmem:[%s0 + $0x30] sm:$0xff]
  %v27 = vld [vmem:[%s0 + $0x38] sm:$0xff]
  %s28 = scalar_lea.vmem %s1, 4
  %v29 = vld [vmem:[%s28] sm:$0xf]
  %v30 = vld [vmem:[%s0 + $0x60] sm:$0xff]
  %v31 = vld [vmem:[%s0 + $0x68] sm:$0xff]
  %v32 = vld [vmem:[%s0 + $0x70] sm:$0xff]
  %v33 = vld [vmem:[%s0 + $0x78] sm:$0xff]
  %v34 = vld [vmem:[%s0 + $0x80] sm:$0xff]
  %v35 = vld [vmem:[%s0 + $0x88] sm:$0xff]
  %v36 = vld [vmem:[%s0 + $0x90] sm:$0xff]
  %v37 = vld [vmem:[%s0 + $0x98] sm:$0xff]
  %v46 = vunpack.c.l.b16 %v30
  %v47 = vunpack.c.h.b16 %v30
  %v48 = vunpack.c.l.b16 %v31
  %v49 = vunpack.c.h.b16 %v31
  %v50 = vunpack.c.l.b16 %v32
  %v51 = vunpack.c.h.b16 %v32
  %v52 = vunpack.c.l.b16 %v33
  %v53 = vunpack.c.h.b16 %v33
  %v54 = vunpack.c.l.b16 %v34
  %v55 = vunpack.c.h.b16 %v34
  %v56 = vunpack.c.l.b16 %v35
  %v57 = vunpack.c.h.b16 %v35
  %v58 = vunpack.c.l.b16 %v36
  %v59 = vunpack.c.h.b16 %v36
  %v60 = vunpack.c.l.b16 %v37
  %v61 = vunpack.c.h.b16 %v37
  %v62 = vpack.c.b16 %v50, %v46
  %v63 = vpack.c.b16 %v51, %v47
  %v64 = vpack.c.b16 %v52, %v48
  %v65 = vpack.c.b16 %v53, %v49
  %v66 = vpack.c.b16 %v58, %v54
  %v67 = vpack.c.b16 %v59, %v55
  %v68 = vpack.c.b16 %v60, %v56
  %v69 = vpack.c.b16 %v61, %v57
  %vm78 = vcmask 261120
  %v80 = vsel %vm78, %v29, 0
  %82 = vmatprep.subr.bf16.mxu0 %v63
  %83 = vmatpush1.bf16.msra.mxu0 %v62
  %84 = vmatprep.subr.bf16.mxu0 %v67
  %85 = vmatpush1.bf16.msra.mxu0 %v66
  %86 = vmatprep.subr.bf16.mxu0 0
  %87 = vmatpush1.bf16.msra.mxu0 0
  %88 = vmatprep.subr.bf16.mxu0 0
  %89 = vmatpush1.bf16.msra.mxu0 0
  %90 = vmatprep.subr.bf16.mxu0 0
  %91 = vmatpush1.bf16.msra.mxu0 0
  %92 = vmatprep.subr.bf16.mxu0 0
  %93 = vmatpush1.bf16.msra.mxu0 0
  %94 = vmatprep.subr.bf16.mxu0 0
  %95 = vmatpush1.bf16.msra.mxu0 0
  %96 = vmatprep.subr.bf16.mxu0 0
  %97 = vmatpush1.bf16.msra.mxu0 0
  %98 = vmatprep.subr.bf16.mxu0 0
  %99 = vmatpush1.bf16.msra.mxu0 0
  %100 = vmatprep.subr.bf16.mxu0 0
  %101 = vmatpush1.bf16.msra.mxu0 0
  %102 = vmatprep.subr.bf16.mxu0 0
  %103 = vmatpush1.bf16.msra.mxu0 0
  %104 = vmatprep.subr.bf16.mxu0 0
  %105 = vmatpush1.bf16.msra.mxu0 0
  %106 = vmatprep.subr.bf16.mxu0 0
  %107 = vmatpush1.bf16.msra.mxu0 0
  %108 = vmatprep.subr.bf16.mxu0 0
  %109 = vmatpush1.bf16.msra.mxu0 0
  %110 = vmatprep.subr.bf16.mxu0 0
  %111 = vmatpush1.bf16.msra.mxu0 0
  %112 = vmatprep.subr.bf16.mxu0 0
  %113 = vmatpush1.bf16.msra.mxu0 0
  %114 = vmatprep.mubr.bf16.mxu0 0
  %115 = vmatmul.mubr.bf16.gmra.mrb[0].mxu0 %v80
  %v116 = vpop.f32.mrb[0].mxu0
  %v117 = vadd.f32 0.0, %v116
  %v118 = vpop.f32.mrb[0].mxu0
  %v119 = vadd.f32 0.0, %v118
  %v120 = vpop.f32.mrb[0].mxu0
  %v121 = vpop.f32.mrb[0].mxu0
  %122 = vdwg.mxu0
  %123 = vmatprep.subr.bf16.mxu0 %v65
  %124 = vmatpush1.bf16.msra.mxu0 %v64
  %125 = vmatprep.subr.bf16.mxu0 %v69
  %126 = vmatpush1.bf16.msra.mxu0 %v68
  %127 = vmatprep.subr.bf16.mxu0 0
  %128 = vmatpush1.bf16.msra.mxu0 0
  %129 = vmatprep.subr.bf16.mxu0 0
  %130 = vmatpush1.bf16.msra.mxu0 0
  %131 = vmatprep.subr.bf16.mxu0 0
  %132 = vmatpush1.bf16.msra.mxu0 0
  %133 = vmatprep.subr.bf16.mxu0 0
  %134 = vmatpush1.bf16.msra.mxu0 0
  %135 = vmatprep.subr.bf16.mxu0 0
  %136 = vmatpush1.bf16.msra.mxu0 0
  %137 = vmatprep.subr.bf16.mxu0 0
  %138 = vmatpush1.bf16.msra.mxu0 0
  %139 = vmatprep.subr.bf16.mxu0 0
  %140 = vmatpush1.bf16.msra.mxu0 0
  %141 = vmatprep.subr.bf16.mxu0 0
  %142 = vmatpush1.bf16.msra.mxu0 0
  %143 = vmatprep.subr.bf16.mxu0 0
  %144 = vmatpush1.bf16.msra.mxu0 0
  %145 = vmatprep.subr.bf16.mxu0 0
  %146 = vmatpush1.bf16.msra.mxu0 0
  %147 = vmatprep.subr.bf16.mxu0 0
  %148 = vmatpush1.bf16.msra.mxu0 0
  %149 = vmatprep.subr.bf16.mxu0 0
  %150 = vmatpush1.bf16.msra.mxu0 0
  %151 = vmatprep.subr.bf16.mxu0 0
  %152 = vmatpush1.bf16.msra.mxu0 0
  %153 = vmatprep.subr.bf16.mxu0 0
  %154 = vmatpush1.bf16.msra.mxu0 0
  %155 = vmatprep.mubr.bf16.mxu0 0
  %156 = vmatmul.mubr.bf16.gmra.mrb[0].mxu0 %v80
  %v157 = vpop.f32.mrb[0].mxu0
  %v158 = vadd.f32 0.0, %v157
  %v159 = vpop.f32.mrb[0].mxu0
  %v160 = vadd.f32 0.0, %v159
  %v161 = vpop.f32.mrb[0].mxu0
  %v162 = vpop.f32.mrb[0].mxu0
  %163 = vdwg.mxu0
  %v172 = vunpack.c.l.b16 %v20
  %v173 = vunpack.c.h.b16 %v20
  %v174 = vunpack.c.l.b16 %v21
  %v175 = vunpack.c.h.b16 %v21
  %v176 = vunpack.c.l.b16 %v22
  %v177 = vunpack.c.h.b16 %v22
  %v178 = vunpack.c.l.b16 %v23
  %v179 = vunpack.c.h.b16 %v23
  %v180 = vunpack.c.l.b16 %v24
  %v181 = vunpack.c.h.b16 %v24
  %v182 = vunpack.c.l.b16 %v25
  %v183 = vunpack.c.h.b16 %v25
  %v184 = vunpack.c.l.b16 %v26
  %v185 = vunpack.c.h.b16 %v26
  %v186 = vunpack.c.l.b16 %v27
  %v187 = vunpack.c.h.b16 %v27
  %v188 = vpack.c.b16 %v176, %v172
  %v189 = vpack.c.b16 %v177, %v173
  %v190 = vpack.c.b16 %v178, %v174
  %v191 = vpack.c.b16 %v179, %v175
  %v192 = vpack.c.b16 %v184, %v180
  %v193 = vpack.c.b16 %v185, %v181
  %v194 = vpack.c.b16 %v186, %v182
  %v195 = vpack.c.b16 %v187, %v183
  %v205 = vsel %vm78, %v19, 0
  %207 = vmatprep.subr.bf16.mxu0 %v189
  %208 = vmatpush1.bf16.msra.mxu0 %v188
  %209 = vmatprep.subr.bf16.mxu0 %v193
  %210 = vmatpush1.bf16.msra.mxu0 %v192
  %211 = vmatprep.subr.bf16.mxu0 0
  %212 = vmatpush1.bf16.msra.mxu0 0
  %213 = vmatprep.subr.bf16.mxu0 0
  %214 = vmatpush1.bf16.msra.mxu0 0
  %215 = vmatprep.subr.bf16.mxu0 0
  %216 = vmatpush1.bf16.msra.mxu0 0
  %217 = vmatprep.subr.bf16.mxu0 0
  %218 = vmatpush1.bf16.msra.mxu0 0
  %219 = vmatprep.subr.bf16.mxu0 0
  %220 = vmatpush1.bf16.msra.mxu0 0
  %221 = vmatprep.subr.bf16.mxu0 0
  %222 = vmatpush1.bf16.msra.mxu0 0
  %223 = vmatprep.subr.bf16.mxu0 0
  %224 = vmatpush1.bf16.msra.mxu0 0
  %225 = vmatprep.subr.bf16.mxu0 0
  %226 = vmatpush1.bf16.msra.mxu0 0
  %227 = vmatprep.subr.bf16.mxu0 0
  %228 = vmatpush1.bf16.msra.mxu0 0
  %229 = vmatprep.subr.bf16.mxu0 0
  %230 = vmatpush1.bf16.msra.mxu0 0
  %231 = vmatprep.subr.bf16.mxu0 0
  %232 = vmatpush1.bf16.msra.mxu0 0
  %233 = vmatprep.subr.bf16.mxu0 0
  %234 = vmatpush1.bf16.msra.mxu0 0
  %235 = vmatprep.subr.bf16.mxu0 0
  %236 = vmatpush1.bf16.msra.mxu0 0
  %237 = vmatprep.subr.bf16.mxu0 0
  %238 = vmatpush1.bf16.msra.mxu0 0
  %239 = vmatprep.mubr.bf16.mxu0 0
  %240 = vmatmul.mubr.bf16.gmra.mrb[0].mxu0 %v205
  %v241 = vpop.f32.mrb[0].mxu0
  %v242 = vadd.f32 %v117, %v241
  %v243 = vpop.f32.mrb[0].mxu0
  %v244 = vadd.f32 %v119, %v243
  %v245 = vpop.f32.mrb[0].mxu0
  %v246 = vpop.f32.mrb[0].mxu0
  %247 = vdwg.mxu0
  %248 = vmatprep.subr.bf16.mxu0 %v191
  %249 = vmatpush1.bf16.msra.mxu0 %v190
  %250 = vmatprep.subr.bf16.mxu0 %v195
  %251 = vmatpush1.bf16.msra.mxu0 %v194
  %252 = vmatprep.subr.bf16.mxu0 0
  %253 = vmatpush1.bf16.msra.mxu0 0
  %254 = vmatprep.subr.bf16.mxu0 0
  %255 = vmatpush1.bf16.msra.mxu0 0
  %256 = vmatprep.subr.bf16.mxu0 0
  %257 = vmatpush1.bf16.msra.mxu0 0
  %258 = vmatprep.subr.bf16.mxu0 0
  %259 = vmatpush1.bf16.msra.mxu0 0
  %260 = vmatprep.subr.bf16.mxu0 0
  %261 = vmatpush1.bf16.msra.mxu0 0
  %262 = vmatprep.subr.bf16.mxu0 0
  %263 = vmatpush1.bf16.msra.mxu0 0
  %264 = vmatprep.subr.bf16.mxu0 0
  %265 = vmatpush1.bf16.msra.mxu0 0
  %266 = vmatprep.subr.bf16.mxu0 0
  %267 = vmatpush1.bf16.msra.mxu0 0
  %268 = vmatprep.subr.bf16.mxu0 0
  %269 = vmatpush1.bf16.msra.mxu0 0
  %270 = vmatprep.subr.bf16.mxu0 0
  %271 = vmatpush1.bf16.msra.mxu0 0
  %272 = vmatprep.subr.bf16.mxu0 0
  %273 = vmatpush1.bf16.msra.mxu0 0
  %274 = vmatprep.subr.bf16.mxu0 0
  %275 = vmatpush1.bf16.msra.mxu0 0
  %276 = vmatprep.subr.bf16.mxu0 0
  %277 = vmatpush1.bf16.msra.mxu0 0
  %278 = vmatprep.subr.bf16.mxu0 0
  %279 = vmatpush1.bf16.msra.mxu0 0
  %280 = vmatprep.mubr.bf16.mxu0 0
  %281 = vmatmul.mubr.bf16.gmra.mrb[0].mxu0 %v205
  %v282 = vpop.f32.mrb[0].mxu0
  %v283 = vadd.f32 %v158, %v282
  %v284 = vpop.f32.mrb[0].mxu0
  %v285 = vadd.f32 %v160, %v284
  %v286 = vpop.f32.mrb[0].mxu0
  %v287 = vpop.f32.mrb[0].mxu0
  %288 = vdwg.mxu0
  %290 = vset.pattern.permute.xlu0 0
  %291 = vperm.xlu0 %290, %v18
  %v292 = vpop.permute.xlu0 %291
  %v294 = vadd.f32 %v242, %v292
  %v295 = vadd.f32 %v244, %v292
  %v296 = vadd.f32 %v283, %v292
  %v297 = vadd.f32 %v285, %v292
  %v298 = vmax.f32 %v294, 0.0
  %v299 = vmax.f32 %v295, 0.0
  %v300 = vmax.f32 %v296, 0.0
  %v301 = vmax.f32 %v297, 0.0
  %v302 = vpack.c.bf16 %v298, %v298
  %v303 = vpack.c.bf16 %v299, %v299
  %v304 = vpack.c.bf16 %v300, %v300
  %v305 = vpack.c.bf16 %v301, %v301
  %v310 = vunpack.c.l.b16 %v302
  %v311 = vunpack.c.l.b16 %v303
  %v312 = vunpack.c.l.b16 %v304
  %v313 = vunpack.c.l.b16 %v305
  %v314 = vpack.c.b16 %v311, %v310
  %v315 = vpack.c.b16 %v313, %v312
  %318 = vst [vmem:[%s3] sm:$0xff] %v314
  %319 = vst [vmem:[%s3 + $0x8] sm:$0xff] %v315
  %v320 = vadd.f32 %v298, %v299
  %v321 = vadd.f32 %v320, %v300
  %v322 = vadd.f32 %v321, %v301
  %323 = vadd.xlane.f32.xlu0 %v322
  %v324 = vpop.xlane.xlu0 %323
  %v325 = vadd.f32 %v324, 0.0
  %v326 = vmul.f32 %v298, %v298
  %v327 = vmul.f32 %v299, %v299
  %v328 = vmul.f32 %v300, %v300
  %v329 = vmul.f32 %v301, %v301
  %v330 = vadd.f32 %v326, %v327
  %v331 = vadd.f32 %v330, %v328
  %v332 = vadd.f32 %v331, %v329
  %333 = vadd.xlane.f32.xlu0 %v332
  %v334 = vpop.xlane.xlu0 %333
  %v335 = vadd.f32 %v334, 0.0
  %s336 = scalar_lea.vmem %s1, 8
  %v337 = vld [vmem:[%s336] sm:$0xf]
  %v338 = vld [vmem:[%s0 + $0x20] sm:$0xff]
  %v339 = vld [vmem:[%s0 + $0x28] sm:$0xff]
  %v340 = vld [vmem:[%s0 + $0x30] sm:$0xff]
  %v341 = vld [vmem:[%s0 + $0x38] sm:$0xff]
  %v342 = vld [vmem:[%s0 + $0x40] sm:$0xff]
  %v343 = vld [vmem:[%s0 + $0x48] sm:$0xff]
  %v344 = vld [vmem:[%s0 + $0x50] sm:$0xff]
  %v345 = vld [vmem:[%s0 + $0x58] sm:$0xff]
  %s346 = scalar_lea.vmem %s1, 12
  %v347 = vld [vmem:[%s346] sm:$0xf]
  %v348 = vld [vmem:[%s0 + $0x80] sm:$0xff]
  %v349 = vld [vmem:[%s0 + $0x88] sm:$0xff]
  %v350 = vld [vmem:[%s0 + $0x90] sm:$0xff]
  %v351 = vld [vmem:[%s0 + $0x98] sm:$0xff]
  %v352 = vld [vmem:[%s0 + $0xa0] sm:$0xff]
  %v353 = vld [vmem:[%s0 + $0xa8] sm:$0xff]
  %v354 = vld [vmem:[%s0 + $0xb0] sm:$0xff]
  %v355 = vld [vmem:[%s0 + $0xb8] sm:$0xff]
  %v364 = vunpack.c.l.b16 %v348
  %v365 = vunpack.c.h.b16 %v348
  %v366 = vunpack.c.l.b16 %v349
  %v367 = vunpack.c.h.b16 %v349
  %v368 = vunpack.c.l.b16 %v350
  %v369 = vunpack.c.h.b16 %v350
  %v370 = vunpack.c.l.b16 %v351
  %v371 = vunpack.c.h.b16 %v351
  %v372 = vunpack.c.l.b16 %v352
  %v373 = vunpack.c.h.b16 %v352
  %v374 = vunpack.c.l.b16 %v353
  %v375 = vunpack.c.h.b16 %v353
  %v376 = vunpack.c.l.b16 %v354
  %v377 = vunpack.c.h.b16 %v354
  %v378 = vunpack.c.l.b16 %v355
  %v379 = vunpack.c.h.b16 %v355
  %v380 = vpack.c.b16 %v368, %v364
  %v381 = vpack.c.b16 %v369, %v365
  %v382 = vpack.c.b16 %v370, %v366
  %v383 = vpack.c.b16 %v371, %v367
  %v384 = vpack.c.b16 %v376, %v372
  %v385 = vpack.c.b16 %v377, %v373
  %v386 = vpack.c.b16 %v378, %v374
  %v387 = vpack.c.b16 %v379, %v375
  %v397 = vsel %vm78, %v347, 0
  %399 = vmatprep.subr.bf16.mxu0 %v381
  %400 = vmatpush1.bf16.msra.mxu0 %v380
  %401 = vmatprep.subr.bf16.mxu0 %v385
  %402 = vmatpush1.bf16.msra.mxu0 %v384
  %403 = vmatprep.subr.bf16.mxu0 0
  %404 = vmatpush1.bf16.msra.mxu0 0
  %405 = vmatprep.subr.bf16.mxu0 0
  %406 = vmatpush1.bf16.msra.mxu0 0
  %407 = vmatprep.subr.bf16.mxu0 0
  %408 = vmatpush1.bf16.msra.mxu0 0
  %409 = vmatprep.subr.bf16.mxu0 0
  %410 = vmatpush1.bf16.msra.mxu0 0
  %411 = vmatprep.subr.bf16.mxu0 0
  %412 = vmatpush1.bf16.msra.mxu0 0
  %413 = vmatprep.subr.bf16.mxu0 0
  %414 = vmatpush1.bf16.msra.mxu0 0
  %415 = vmatprep.subr.bf16.mxu0 0
  %416 = vmatpush1.bf16.msra.mxu0 0
  %417 = vmatprep.subr.bf16.mxu0 0
  %418 = vmatpush1.bf16.msra.mxu0 0
  %419 = vmatprep.subr.bf16.mxu0 0
  %420 = vmatpush1.bf16.msra.mxu0 0
  %421 = vmatprep.subr.bf16.mxu0 0
  %422 = vmatpush1.bf16.msra.mxu0 0
  %423 = vmatprep.subr.bf16.mxu0 0
  %424 = vmatpush1.bf16.msra.mxu0 0
  %425 = vmatprep.subr.bf16.mxu0 0
  %426 = vmatpush1.bf16.msra.mxu0 0
  %427 = vmatprep.subr.bf16.mxu0 0
  %428 = vmatpush1.bf16.msra.mxu0 0
  %429 = vmatprep.subr.bf16.mxu0 0
  %430 = vmatpush1.bf16.msra.mxu0 0
  %431 = vmatprep.mubr.bf16.mxu0 0
  %432 = vmatmul.mubr.bf16.gmra.mrb[0].mxu0 %v397
  %v433 = vpop.f32.mrb[0].mxu0
  %v434 = vadd.f32 0.0, %v433
  %v435 = vpop.f32.mrb[0].mxu0
  %v436 = vadd.f32 0.0, %v435
  %v437 = vpop.f32.mrb[0].mxu0
  %v438 = vpop.f32.mrb[0].mxu0
  %439 = vdwg.mxu0
  %440 = vmatprep.subr.bf16.mxu0 %v383
  %441 = vmatpush1.bf16.msra.mxu0 %v382
  %442 = vmatprep.subr.bf16.mxu0 %v387
  %443 = vmatpush1.bf16.msra.mxu0 %v386
  %444 = vmatprep.subr.bf16.mxu0 0
  %445 = vmatpush1.bf16.msra.mxu0 0
  %446 = vmatprep.subr.bf16.mxu0 0
  %447 = vmatpush1.bf16.msra.mxu0 0
  %448 = vmatprep.subr.bf16.mxu0 0
  %449 = vmatpush1.bf16.msra.mxu0 0
  %450 = vmatprep.subr.bf16.mxu0 0
  %451 = vmatpush1.bf16.msra.mxu0 0
  %452 = vmatprep.subr.bf16.mxu0 0
  %453 = vmatpush1.bf16.msra.mxu0 0
  %454 = vmatprep.subr.bf16.mxu0 0
  %455 = vmatpush1.bf16.msra.mxu0 0
  %456 = vmatprep.subr.bf16.mxu0 0
  %457 = vmatpush1.bf16.msra.mxu0 0
  %458 = vmatprep.subr.bf16.mxu0 0
  %459 = vmatpush1.bf16.msra.mxu0 0
  %460 = vmatprep.subr.bf16.mxu0 0
  %461 = vmatpush1.bf16.msra.mxu0 0
  %462 = vmatprep.subr.bf16.mxu0 0
  %463 = vmatpush1.bf16.msra.mxu0 0
  %464 = vmatprep.subr.bf16.mxu0 0
  %465 = vmatpush1.bf16.msra.mxu0 0
  %466 = vmatprep.subr.bf16.mxu0 0
  %467 = vmatpush1.bf16.msra.mxu0 0
  %468 = vmatprep.subr.bf16.mxu0 0
  %469 = vmatpush1.bf16.msra.mxu0 0
  %470 = vmatprep.subr.bf16.mxu0 0
  %471 = vmatpush1.bf16.msra.mxu0 0
  %472 = vmatprep.mubr.bf16.mxu0 0
  %473 = vmatmul.mubr.bf16.gmra.mrb[0].mxu0 %v397
  %v474 = vpop.f32.mrb[0].mxu0
  %v475 = vadd.f32 0.0, %v474
  %v476 = vpop.f32.mrb[0].mxu0
  %v477 = vadd.f32 0.0, %v476
  %v478 = vpop.f32.mrb[0].mxu0
  %v479 = vpop.f32.mrb[0].mxu0
  %480 = vdwg.mxu0
  %v489 = vunpack.c.l.b16 %v338
  %v490 = vunpack.c.h.b16 %v338
  %v491 = vunpack.c.l.b16 %v339
  %v492 = vunpack.c.h.b16 %v339
  %v493 = vunpack.c.l.b16 %v340
  %v494 = vunpack.c.h.b16 %v340
  %v495 = vunpack.c.l.b16 %v341
  %v496 = vunpack.c.h.b16 %v341
  %v497 = vunpack.c.l.b16 %v342
  %v498 = vunpack.c.h.b16 %v342
  %v499 = vunpack.c.l.b16 %v343
  %v500 = vunpack.c.h.b16 %v343
  %v501 = vunpack.c.l.b16 %v344
  %v502 = vunpack.c.h.b16 %v344
  %v503 = vunpack.c.l.b16 %v345
  %v504 = vunpack.c.h.b16 %v345
  %v505 = vpack.c.b16 %v493, %v489
  %v506 = vpack.c.b16 %v494, %v490
  %v507 = vpack.c.b16 %v495, %v491
  %v508 = vpack.c.b16 %v496, %v492
  %v509 = vpack.c.b16 %v501, %v497
  %v510 = vpack.c.b16 %v502, %v498
  %v511 = vpack.c.b16 %v503, %v499
  %v512 = vpack.c.b16 %v504, %v500
  %v522 = vsel %vm78, %v337, 0
  %524 = vmatprep.subr.bf16.mxu0 %v506
  %525 = vmatpush1.bf16.msra.mxu0 %v505
  %526 = vmatprep.subr.bf16.mxu0 %v510
  %527 = vmatpush1.bf16.msra.mxu0 %v509
  %528 = vmatprep.subr.bf16.mxu0 0
  %529 = vmatpush1.bf16.msra.mxu0 0
  %530 = vmatprep.subr.bf16.mxu0 0
  %531 = vmatpush1.bf16.msra.mxu0 0
  %532 = vmatprep.subr.bf16.mxu0 0
  %533 = vmatpush1.bf16.msra.mxu0 0
  %534 = vmatprep.subr.bf16.mxu0 0
  %535 = vmatpush1.bf16.msra.mxu0 0
  %536 = vmatprep.subr.bf16.mxu0 0
  %537 = vmatpush1.bf16.msra.mxu0 0
  %538 = vmatprep.subr.bf16.mxu0 0
  %539 = vmatpush1.bf16.msra.mxu0 0
  %540 = vmatprep.subr.bf16.mxu0 0
  %541 = vmatpush1.bf16.msra.mxu0 0
  %542 = vmatprep.subr.bf16.mxu0 0
  %543 = vmatpush1.bf16.msra.mxu0 0
  %544 = vmatprep.subr.bf16.mxu0 0
  %545 = vmatpush1.bf16.msra.mxu0 0
  %546 = vmatprep.subr.bf16.mxu0 0
  %547 = vmatpush1.bf16.msra.mxu0 0
  %548 = vmatprep.subr.bf16.mxu0 0
  %549 = vmatpush1.bf16.msra.mxu0 0
  %550 = vmatprep.subr.bf16.mxu0 0
  %551 = vmatpush1.bf16.msra.mxu0 0
  %552 = vmatprep.subr.bf16.mxu0 0
  %553 = vmatpush1.bf16.msra.mxu0 0
  %554 = vmatprep.subr.bf16.mxu0 0
  %555 = vmatpush1.bf16.msra.mxu0 0
  %556 = vmatprep.mubr.bf16.mxu0 0
  %557 = vmatmul.mubr.bf16.gmra.mrb[0].mxu0 %v522
  %v558 = vpop.f32.mrb[0].mxu0
  %v559 = vadd.f32 %v434, %v558
  %v560 = vpop.f32.mrb[0].mxu0
  %v561 = vadd.f32 %v436, %v560
  %v562 = vpop.f32.mrb[0].mxu0
  %v563 = vpop.f32.mrb[0].mxu0
  %564 = vdwg.mxu0
  %565 = vmatprep.subr.bf16.mxu0 %v508
  %566 = vmatpush1.bf16.msra.mxu0 %v507
  %567 = vmatprep.subr.bf16.mxu0 %v512
  %568 = vmatpush1.bf16.msra.mxu0 %v511
  %569 = vmatprep.subr.bf16.mxu0 0
  %570 = vmatpush1.bf16.msra.mxu0 0
  %571 = vmatprep.subr.bf16.mxu0 0
  %572 = vmatpush1.bf16.msra.mxu0 0
  %573 = vmatprep.subr.bf16.mxu0 0
  %574 = vmatpush1.bf16.msra.mxu0 0
  %575 = vmatprep.subr.bf16.mxu0 0
  %576 = vmatpush1.bf16.msra.mxu0 0
  %577 = vmatprep.subr.bf16.mxu0 0
  %578 = vmatpush1.bf16.msra.mxu0 0
  %579 = vmatprep.subr.bf16.mxu0 0
  %580 = vmatpush1.bf16.msra.mxu0 0
  %581 = vmatprep.subr.bf16.mxu0 0
  %582 = vmatpush1.bf16.msra.mxu0 0
  %583 = vmatprep.subr.bf16.mxu0 0
  %584 = vmatpush1.bf16.msra.mxu0 0
  %585 = vmatprep.subr.bf16.mxu0 0
  %586 = vmatpush1.bf16.msra.mxu0 0
  %587 = vmatprep.subr.bf16.mxu0 0
  %588 = vmatpush1.bf16.msra.mxu0 0
  %589 = vmatprep.subr.bf16.mxu0 0
  %590 = vmatpush1.bf16.msra.mxu0 0
  %591 = vmatprep.subr.bf16.mxu0 0
  %592 = vmatpush1.bf16.msra.mxu0 0
  %593 = vmatprep.subr.bf16.mxu0 0
  %594 = vmatpush1.bf16.msra.mxu0 0
  %595 = vmatprep.subr.bf16.mxu0 0
  %596 = vmatpush1.bf16.msra.mxu0 0
  %597 = vmatprep.mubr.bf16.mxu0 0
  %598 = vmatmul.mubr.bf16.gmra.mrb[0].mxu0 %v522
  %v599 = vpop.f32.mrb[0].mxu0
  %v600 = vadd.f32 %v475, %v599
  %v601 = vpop.f32.mrb[0].mxu0
  %v602 = vadd.f32 %v477, %v601
  %v603 = vpop.f32.mrb[0].mxu0
  %v604 = vpop.f32.mrb[0].mxu0
  %605 = vdwg.mxu0
  %v606 = vadd.f32 %v559, %v292
  %v607 = vadd.f32 %v561, %v292
  %v608 = vadd.f32 %v600, %v292
  %v609 = vadd.f32 %v602, %v292
  %v610 = vmax.f32 %v606, 0.0
  %v611 = vmax.f32 %v607, 0.0
  %v612 = vmax.f32 %v608, 0.0
  %v613 = vmax.f32 %v609, 0.0
  %v614 = vpack.c.bf16 %v610, %v610
  %v615 = vpack.c.bf16 %v611, %v611
  %v616 = vpack.c.bf16 %v612, %v612
  %v617 = vpack.c.bf16 %v613, %v613
  %v622 = vunpack.c.l.b16 %v614
  %v623 = vunpack.c.l.b16 %v615
  %v624 = vunpack.c.l.b16 %v616
  %v625 = vunpack.c.l.b16 %v617
  %v626 = vpack.c.b16 %v623, %v622
  %v627 = vpack.c.b16 %v625, %v624
  %s630 = scalar_lea.vmem %s3, 16
  %631 = vst [vmem:[%s630] sm:$0xff] %v626
  %632 = vst [vmem:[%s630 + $0x8] sm:$0xff] %v627
  %v633 = vadd.f32 %v610, %v611
  %v634 = vadd.f32 %v633, %v612
  %v635 = vadd.f32 %v634, %v613
  %636 = vadd.xlane.f32.xlu0 %v635
  %v637 = vpop.xlane.xlu0 %636
  %v638 = vadd.f32 %v325, %v637
  %v639 = vmul.f32 %v610, %v610
  %v640 = vmul.f32 %v611, %v611
  %v641 = vmul.f32 %v612, %v612
  %v642 = vmul.f32 %v613, %v613
  %v643 = vadd.f32 %v639, %v640
  %v644 = vadd.f32 %v643, %v641
  %v645 = vadd.f32 %v644, %v642
  %646 = vadd.xlane.f32.xlu0 %v645
  %v647 = vpop.xlane.xlu0 %646
  %v648 = vadd.f32 %v335, %v647
  %s649 = scalar_lea.vmem %s1, 16
  %v650 = vld [vmem:[%s649] sm:$0xf]
  %v651 = vld [vmem:[%s0 + $0x60] sm:$0xff]
  %v652 = vld [vmem:[%s0 + $0x68] sm:$0xff]
  %v653 = vld [vmem:[%s0 + $0x70] sm:$0xff]
  %v654 = vld [vmem:[%s0 + $0x78] sm:$0xff]
  %v655 = vld [vmem:[%s0 + $0x80] sm:$0xff]
  %v656 = vld [vmem:[%s0 + $0x88] sm:$0xff]
  %v657 = vld [vmem:[%s0 + $0x90] sm:$0xff]
  %v658 = vld [vmem:[%s0 + $0x98] sm:$0xff]
  %s659 = scalar_lea.vmem %s1, 20
  %v660 = vld [vmem:[%s659] sm:$0xf]
  %v661 = vld [vmem:[%s0 + $0xc0] sm:$0xff]
  %v662 = vld [vmem:[%s0 + $0xc8] sm:$0xff]
  %v663 = vld [vmem:[%s0 + $0xd0] sm:$0xff]
  %v664 = vld [vmem:[%s0 + $0xd8] sm:$0xff]
  %v665 = vld [vmem:[%s0 + $0xe0] sm:$0xff]
  %v666 = vld [vmem:[%s0 + $0xe8] sm:$0xff]
  %v667 = vld [vmem:[%s0 + $0xf0] sm:$0xff]
  %v668 = vld [vmem:[%s0 + $0xf8] sm:$0xff]
  %v677 = vunpack.c.l.b16 %v661
  %v678 = vunpack.c.h.b16 %v661
  %v679 = vunpack.c.l.b16 %v662
  %v680 = vunpack.c.h.b16 %v662
  %v681 = vunpack.c.l.b16 %v663
  %v682 = vunpack.c.h.b16 %v663
  %v683 = vunpack.c.l.b16 %v664
  %v684 = vunpack.c.h.b16 %v664
  %v685 = vunpack.c.l.b16 %v665
  %v686 = vunpack.c.h.b16 %v665
  %v687 = vunpack.c.l.b16 %v666
  %v688 = vunpack.c.h.b16 %v666
  %v689 = vunpack.c.l.b16 %v667
  %v690 = vunpack.c.h.b16 %v667
  %v691 = vunpack.c.l.b16 %v668
  %v692 = vunpack.c.h.b16 %v668
  %v693 = vpack.c.b16 %v681, %v677
  %v694 = vpack.c.b16 %v682, %v678
  %v695 = vpack.c.b16 %v683, %v679
  %v696 = vpack.c.b16 %v684, %v680
  %v697 = vpack.c.b16 %v689, %v685
  %v698 = vpack.c.b16 %v690, %v686
  %v699 = vpack.c.b16 %v691, %v687
  %v700 = vpack.c.b16 %v692, %v688
  %v710 = vsel %vm78, %v660, 0
  %712 = vmatprep.subr.bf16.mxu0 %v694
  %713 = vmatpush1.bf16.msra.mxu0 %v693
  %714 = vmatprep.subr.bf16.mxu0 %v698
  %715 = vmatpush1.bf16.msra.mxu0 %v697
  %716 = vmatprep.subr.bf16.mxu0 0
  %717 = vmatpush1.bf16.msra.mxu0 0
  %718 = vmatprep.subr.bf16.mxu0 0
  %719 = vmatpush1.bf16.msra.mxu0 0
  %720 = vmatprep.subr.bf16.mxu0 0
  %721 = vmatpush1.bf16.msra.mxu0 0
  %722 = vmatprep.subr.bf16.mxu0 0
  %723 = vmatpush1.bf16.msra.mxu0 0
  %724 = vmatprep.subr.bf16.mxu0 0
  %725 = vmatpush1.bf16.msra.mxu0 0
  %726 = vmatprep.subr.bf16.mxu0 0
  %727 = vmatpush1.bf16.msra.mxu0 0
  %728 = vmatprep.subr.bf16.mxu0 0
  %729 = vmatpush1.bf16.msra.mxu0 0
  %730 = vmatprep.subr.bf16.mxu0 0
  %731 = vmatpush1.bf16.msra.mxu0 0
  %732 = vmatprep.subr.bf16.mxu0 0
  %733 = vmatpush1.bf16.msra.mxu0 0
  %734 = vmatprep.subr.bf16.mxu0 0
  %735 = vmatpush1.bf16.msra.mxu0 0
  %736 = vmatprep.subr.bf16.mxu0 0
  %737 = vmatpush1.bf16.msra.mxu0 0
  %738 = vmatprep.subr.bf16.mxu0 0
  %739 = vmatpush1.bf16.msra.mxu0 0
  %740 = vmatprep.subr.bf16.mxu0 0
  %741 = vmatpush1.bf16.msra.mxu0 0
  %742 = vmatprep.subr.bf16.mxu0 0
  %743 = vmatpush1.bf16.msra.mxu0 0
  %744 = vmatprep.mubr.bf16.mxu0 0
  %745 = vmatmul.mubr.bf16.gmra.mrb[0].mxu0 %v710
  %v746 = vpop.f32.mrb[0].mxu0
  %v747 = vadd.f32 0.0, %v746
  %v748 = vpop.f32.mrb[0].mxu0
  %v749 = vadd.f32 0.0, %v748
  %v750 = vpop.f32.mrb[0].mxu0
  %v751 = vpop.f32.mrb[0].mxu0
  %752 = vdwg.mxu0
  %753 = vmatprep.subr.bf16.mxu0 %v696
  %754 = vmatpush1.bf16.msra.mxu0 %v695
  %755 = vmatprep.subr.bf16.mxu0 %v700
  %756 = vmatpush1.bf16.msra.mxu0 %v699
  %757 = vmatprep.subr.bf16.mxu0 0
  %758 = vmatpush1.bf16.msra.mxu0 0
  %759 = vmatprep.subr.bf16.mxu0 0
  %760 = vmatpush1.bf16.msra.mxu0 0
  %761 = vmatprep.subr.bf16.mxu0 0
  %762 = vmatpush1.bf16.msra.mxu0 0
  %763 = vmatprep.subr.bf16.mxu0 0
  %764 = vmatpush1.bf16.msra.mxu0 0
  %765 = vmatprep.subr.bf16.mxu0 0
  %766 = vmatpush1.bf16.msra.mxu0 0
  %767 = vmatprep.subr.bf16.mxu0 0
  %768 = vmatpush1.bf16.msra.mxu0 0
  %769 = vmatprep.subr.bf16.mxu0 0
  %770 = vmatpush1.bf16.msra.mxu0 0
  %771 = vmatprep.subr.bf16.mxu0 0
  %772 = vmatpush1.bf16.msra.mxu0 0
  %773 = vmatprep.subr.bf16.mxu0 0
  %774 = vmatpush1.bf16.msra.mxu0 0
  %775 = vmatprep.subr.bf16.mxu0 0
  %776 = vmatpush1.bf16.msra.mxu0 0
  %777 = vmatprep.subr.bf16.mxu0 0
  %778 = vmatpush1.bf16.msra.mxu0 0
  %779 = vmatprep.subr.bf16.mxu0 0
  %780 = vmatpush1.bf16.msra.mxu0 0
  %781 = vmatprep.subr.bf16.mxu0 0
  %782 = vmatpush1.bf16.msra.mxu0 0
  %783 = vmatprep.subr.bf16.mxu0 0
  %784 = vmatpush1.bf16.msra.mxu0 0
  %785 = vmatprep.mubr.bf16.mxu0 0
  %786 = vmatmul.mubr.bf16.gmra.mrb[0].mxu0 %v710
  %v787 = vpop.f32.mrb[0].mxu0
  %v788 = vadd.f32 0.0, %v787
  %v789 = vpop.f32.mrb[0].mxu0
  %v790 = vadd.f32 0.0, %v789
  %v791 = vpop.f32.mrb[0].mxu0
  %v792 = vpop.f32.mrb[0].mxu0
  %793 = vdwg.mxu0
  %v802 = vunpack.c.l.b16 %v651
  %v803 = vunpack.c.h.b16 %v651
  %v804 = vunpack.c.l.b16 %v652
  %v805 = vunpack.c.h.b16 %v652
  %v806 = vunpack.c.l.b16 %v653
  %v807 = vunpack.c.h.b16 %v653
  %v808 = vunpack.c.l.b16 %v654
  %v809 = vunpack.c.h.b16 %v654
  %v810 = vunpack.c.l.b16 %v655
  %v811 = vunpack.c.h.b16 %v655
  %v812 = vunpack.c.l.b16 %v656
  %v813 = vunpack.c.h.b16 %v656
  %v814 = vunpack.c.l.b16 %v657
  %v815 = vunpack.c.h.b16 %v657
  %v816 = vunpack.c.l.b16 %v658
  %v817 = vunpack.c.h.b16 %v658
  %v818 = vpack.c.b16 %v806, %v802
  %v819 = vpack.c.b16 %v807, %v803
  %v820 = vpack.c.b16 %v808, %v804
  %v821 = vpack.c.b16 %v809, %v805
  %v822 = vpack.c.b16 %v814, %v810
  %v823 = vpack.c.b16 %v815, %v811
  %v824 = vpack.c.b16 %v816, %v812
  %v825 = vpack.c.b16 %v817, %v813
  %v835 = vsel %vm78, %v650, 0
  %837 = vmatprep.subr.bf16.mxu0 %v819
  %838 = vmatpush1.bf16.msra.mxu0 %v818
  %839 = vmatprep.subr.bf16.mxu0 %v823
  %840 = vmatpush1.bf16.msra.mxu0 %v822
  %841 = vmatprep.subr.bf16.mxu0 0
  %842 = vmatpush1.bf16.msra.mxu0 0
  %843 = vmatprep.subr.bf16.mxu0 0
  %844 = vmatpush1.bf16.msra.mxu0 0
  %845 = vmatprep.subr.bf16.mxu0 0
  %846 = vmatpush1.bf16.msra.mxu0 0
  %847 = vmatprep.subr.bf16.mxu0 0
  %848 = vmatpush1.bf16.msra.mxu0 0
  %849 = vmatprep.subr.bf16.mxu0 0
  %850 = vmatpush1.bf16.msra.mxu0 0
  %851 = vmatprep.subr.bf16.mxu0 0
  %852 = vmatpush1.bf16.msra.mxu0 0
  %853 = vmatprep.subr.bf16.mxu0 0
  %854 = vmatpush1.bf16.msra.mxu0 0
  %855 = vmatprep.subr.bf16.mxu0 0
  %856 = vmatpush1.bf16.msra.mxu0 0
  %857 = vmatprep.subr.bf16.mxu0 0
  %858 = vmatpush1.bf16.msra.mxu0 0
  %859 = vmatprep.subr.bf16.mxu0 0
  %860 = vmatpush1.bf16.msra.mxu0 0
  %861 = vmatprep.subr.bf16.mxu0 0
  %862 = vmatpush1.bf16.msra.mxu0 0
  %863 = vmatprep.subr.bf16.mxu0 0
  %864 = vmatpush1.bf16.msra.mxu0 0
  %865 = vmatprep.subr.bf16.mxu0 0
  %866 = vmatpush1.bf16.msra.mxu0 0
  %867 = vmatprep.subr.bf16.mxu0 0
  %868 = vmatpush1.bf16.msra.mxu0 0
  %869 = vmatprep.mubr.bf16.mxu0 0
  %870 = vmatmul.mubr.bf16.gmra.mrb[0].mxu0 %v835
  %v871 = vpop.f32.mrb[0].mxu0
  %v872 = vadd.f32 %v747, %v871
  %v873 = vpop.f32.mrb[0].mxu0
  %v874 = vadd.f32 %v749, %v873
  %v875 = vpop.f32.mrb[0].mxu0
  %v876 = vpop.f32.mrb[0].mxu0
  %877 = vdwg.mxu0
  %878 = vmatprep.subr.bf16.mxu0 %v821
  %879 = vmatpush1.bf16.msra.mxu0 %v820
  %880 = vmatprep.subr.bf16.mxu0 %v825
  %881 = vmatpush1.bf16.msra.mxu0 %v824
  %882 = vmatprep.subr.bf16.mxu0 0
  %883 = vmatpush1.bf16.msra.mxu0 0
  %884 = vmatprep.subr.bf16.mxu0 0
  %885 = vmatpush1.bf16.msra.mxu0 0
  %886 = vmatprep.subr.bf16.mxu0 0
  %887 = vmatpush1.bf16.msra.mxu0 0
  %888 = vmatprep.subr.bf16.mxu0 0
  %889 = vmatpush1.bf16.msra.mxu0 0
  %890 = vmatprep.subr.bf16.mxu0 0
  %891 = vmatpush1.bf16.msra.mxu0 0
  %892 = vmatprep.subr.bf16.mxu0 0
  %893 = vmatpush1.bf16.msra.mxu0 0
  %894 = vmatprep.subr.bf16.mxu0 0
  %895 = vmatpush1.bf16.msra.mxu0 0
  %896 = vmatprep.subr.bf16.mxu0 0
  %897 = vmatpush1.bf16.msra.mxu0 0
  %898 = vmatprep.subr.bf16.mxu0 0
  %899 = vmatpush1.bf16.msra.mxu0 0
  %900 = vmatprep.subr.bf16.mxu0 0
  %901 = vmatpush1.bf16.msra.mxu0 0
  %902 = vmatprep.subr.bf16.mxu0 0
  %903 = vmatpush1.bf16.msra.mxu0 0
  %904 = vmatprep.subr.bf16.mxu0 0
  %905 = vmatpush1.bf16.msra.mxu0 0
  %906 = vmatprep.subr.bf16.mxu0 0
  %907 = vmatpush1.bf16.msra.mxu0 0
  %908 = vmatprep.subr.bf16.mxu0 0
  %909 = vmatpush1.bf16.msra.mxu0 0
  %910 = vmatprep.mubr.bf16.mxu0 0
  %911 = vmatmul.mubr.bf16.gmra.mrb[0].mxu0 %v835
  %v912 = vpop.f32.mrb[0].mxu0
  %v913 = vadd.f32 %v788, %v912
  %v914 = vpop.f32.mrb[0].mxu0
  %v915 = vadd.f32 %v790, %v914
  %v916 = vpop.f32.mrb[0].mxu0
  %v917 = vpop.f32.mrb[0].mxu0
  %918 = vdwg.mxu0
  %v919 = vadd.f32 %v872, %v292
  %v920 = vadd.f32 %v874, %v292
  %v921 = vadd.f32 %v913, %v292
  %v922 = vadd.f32 %v915, %v292
  %v923 = vmax.f32 %v919, 0.0
  %v924 = vmax.f32 %v920, 0.0
  %v925 = vmax.f32 %v921, 0.0
  %v926 = vmax.f32 %v922, 0.0
  %v927 = vpack.c.bf16 %v923, %v923
  %v928 = vpack.c.bf16 %v924, %v924
  %v929 = vpack.c.bf16 %v925, %v925
  %v930 = vpack.c.bf16 %v926, %v926
  %v935 = vunpack.c.l.b16 %v927
  %v936 = vunpack.c.l.b16 %v928
  %v937 = vunpack.c.l.b16 %v929
  %v938 = vunpack.c.l.b16 %v930
  %v939 = vpack.c.b16 %v936, %v935
  %v940 = vpack.c.b16 %v938, %v937
  %s943 = scalar_lea.vmem %s3, 32
  %944 = vst [vmem:[%s943] sm:$0xff] %v939
  %945 = vst [vmem:[%s943 + $0x8] sm:$0xff] %v940
  %v946 = vadd.f32 %v923, %v924
  %v947 = vadd.f32 %v946, %v925
  %v948 = vadd.f32 %v947, %v926
  %949 = vadd.xlane.f32.xlu0 %v948
  %v950 = vpop.xlane.xlu0 %949
  %v951 = vadd.f32 %v638, %v950
  %v952 = vmul.f32 %v923, %v923
  %v953 = vmul.f32 %v924, %v924
  %v954 = vmul.f32 %v925, %v925
  %v955 = vmul.f32 %v926, %v926
  %v956 = vadd.f32 %v952, %v953
  %v957 = vadd.f32 %v956, %v954
  %v958 = vadd.f32 %v957, %v955
  %959 = vadd.xlane.f32.xlu0 %v958
  %v960 = vpop.xlane.xlu0 %959
  %v961 = vadd.f32 %v648, %v960
  %s962 = scalar_lea.vmem %s1, 24
  %v963 = vld [vmem:[%s962] sm:$0xf]
  %v964 = vld [vmem:[%s0 + $0x80] sm:$0xff]
  %v965 = vld [vmem:[%s0 + $0x88] sm:$0xff]
  %v966 = vld [vmem:[%s0 + $0x90] sm:$0xff]
  %v967 = vld [vmem:[%s0 + $0x98] sm:$0xff]
  %v968 = vld [vmem:[%s0 + $0xa0] sm:$0xff]
  %v969 = vld [vmem:[%s0 + $0xa8] sm:$0xff]
  %v970 = vld [vmem:[%s0 + $0xb0] sm:$0xff]
  %v971 = vld [vmem:[%s0 + $0xb8] sm:$0xff]
  %s972 = scalar_lea.vmem %s1, 28
  %v973 = vld [vmem:[%s972] sm:$0xf]
  %v974 = vld [vmem:[%s0 + $0xe0] sm:$0xff]
  %v975 = vld [vmem:[%s0 + $0xe8] sm:$0xff]
  %v976 = vld [vmem:[%s0 + $0xf0] sm:$0xff]
  %v977 = vld [vmem:[%s0 + $0xf8] sm:$0xff]
  %v978 = vld [vmem:[%s0 + $0x100] sm:$0xff]
  %v979 = vld [vmem:[%s0 + $0x108] sm:$0xff]
  %v980 = vld [vmem:[%s0 + $0x110] sm:$0xff]
  %v981 = vld [vmem:[%s0 + $0x118] sm:$0xff]
  %v990 = vunpack.c.l.b16 %v974
  %v991 = vunpack.c.h.b16 %v974
  %v992 = vunpack.c.l.b16 %v975
  %v993 = vunpack.c.h.b16 %v975
  %v994 = vunpack.c.l.b16 %v976
  %v995 = vunpack.c.h.b16 %v976
  %v996 = vunpack.c.l.b16 %v977
  %v997 = vunpack.c.h.b16 %v977
  %v998 = vunpack.c.l.b16 %v978
  %v999 = vunpack.c.h.b16 %v978
  %v1000 = vunpack.c.l.b16 %v979
  %v1001 = vunpack.c.h.b16 %v979
  %v1002 = vunpack.c.l.b16 %v980
  %v1003 = vunpack.c.h.b16 %v980
  %v1004 = vunpack.c.l.b16 %v981
  %v1005 = vunpack.c.h.b16 %v981
  %v1006 = vpack.c.b16 %v994, %v990
  %v1007 = vpack.c.b16 %v995, %v991
  %v1008 = vpack.c.b16 %v996, %v992
  %v1009 = vpack.c.b16 %v997, %v993
  %v1010 = vpack.c.b16 %v1002, %v998
  %v1011 = vpack.c.b16 %v1003, %v999
  %v1012 = vpack.c.b16 %v1004, %v1000
  %v1013 = vpack.c.b16 %v1005, %v1001
  %v1023 = vsel %vm78, %v973, 0
  %1025 = vmatprep.subr.bf16.mxu0 %v1007
  %1026 = vmatpush1.bf16.msra.mxu0 %v1006
  %1027 = vmatprep.subr.bf16.mxu0 %v1011
  %1028 = vmatpush1.bf16.msra.mxu0 %v1010
  %1029 = vmatprep.subr.bf16.mxu0 0
  %1030 = vmatpush1.bf16.msra.mxu0 0
  %1031 = vmatprep.subr.bf16.mxu0 0
  %1032 = vmatpush1.bf16.msra.mxu0 0
  %1033 = vmatprep.subr.bf16.mxu0 0
  %1034 = vmatpush1.bf16.msra.mxu0 0
  %1035 = vmatprep.subr.bf16.mxu0 0
  %1036 = vmatpush1.bf16.msra.mxu0 0
  %1037 = vmatprep.subr.bf16.mxu0 0
  %1038 = vmatpush1.bf16.msra.mxu0 0
  %1039 = vmatprep.subr.bf16.mxu0 0
  %1040 = vmatpush1.bf16.msra.mxu0 0
  %1041 = vmatprep.subr.bf16.mxu0 0
  %1042 = vmatpush1.bf16.msra.mxu0 0
  %1043 = vmatprep.subr.bf16.mxu0 0
  %1044 = vmatpush1.bf16.msra.mxu0 0
  %1045 = vmatprep.subr.bf16.mxu0 0
  %1046 = vmatpush1.bf16.msra.mxu0 0
  %1047 = vmatprep.subr.bf16.mxu0 0
  %1048 = vmatpush1.bf16.msra.mxu0 0
  %1049 = vmatprep.subr.bf16.mxu0 0
  %1050 = vmatpush1.bf16.msra.mxu0 0
  %1051 = vmatprep.subr.bf16.mxu0 0
  %1052 = vmatpush1.bf16.msra.mxu0 0
  %1053 = vmatprep.subr.bf16.mxu0 0
  %1054 = vmatpush1.bf16.msra.mxu0 0
  %1055 = vmatprep.subr.bf16.mxu0 0
  %1056 = vmatpush1.bf16.msra.mxu0 0
  %1057 = vmatprep.mubr.bf16.mxu0 0
  %1058 = vmatmul.mubr.bf16.gmra.mrb[0].mxu0 %v1023
  %v1059 = vpop.f32.mrb[0].mxu0
  %v1060 = vadd.f32 0.0, %v1059
  %v1061 = vpop.f32.mrb[0].mxu0
  %v1062 = vadd.f32 0.0, %v1061
  %v1063 = vpop.f32.mrb[0].mxu0
  %v1064 = vpop.f32.mrb[0].mxu0
  %1065 = vdwg.mxu0
  %1066 = vmatprep.subr.bf16.mxu0 %v1009
  %1067 = vmatpush1.bf16.msra.mxu0 %v1008
  %1068 = vmatprep.subr.bf16.mxu0 %v1013
  %1069 = vmatpush1.bf16.msra.mxu0 %v1012
  %1070 = vmatprep.subr.bf16.mxu0 0
  %1071 = vmatpush1.bf16.msra.mxu0 0
  %1072 = vmatprep.subr.bf16.mxu0 0
  %1073 = vmatpush1.bf16.msra.mxu0 0
  %1074 = vmatprep.subr.bf16.mxu0 0
  %1075 = vmatpush1.bf16.msra.mxu0 0
  %1076 = vmatprep.subr.bf16.mxu0 0
  %1077 = vmatpush1.bf16.msra.mxu0 0
  %1078 = vmatprep.subr.bf16.mxu0 0
  %1079 = vmatpush1.bf16.msra.mxu0 0
  %1080 = vmatprep.subr.bf16.mxu0 0
  %1081 = vmatpush1.bf16.msra.mxu0 0
  %1082 = vmatprep.subr.bf16.mxu0 0
  %1083 = vmatpush1.bf16.msra.mxu0 0
  %1084 = vmatprep.subr.bf16.mxu0 0
  %1085 = vmatpush1.bf16.msra.mxu0 0
  %1086 = vmatprep.subr.bf16.mxu0 0
  %1087 = vmatpush1.bf16.msra.mxu0 0
  %1088 = vmatprep.subr.bf16.mxu0 0
  %1089 = vmatpush1.bf16.msra.mxu0 0
  %1090 = vmatprep.subr.bf16.mxu0 0
  %1091 = vmatpush1.bf16.msra.mxu0 0
  %1092 = vmatprep.subr.bf16.mxu0 0
  %1093 = vmatpush1.bf16.msra.mxu0 0
  %1094 = vmatprep.subr.bf16.mxu0 0
  %1095 = vmatpush1.bf16.msra.mxu0 0
  %1096 = vmatprep.subr.bf16.mxu0 0
  %1097 = vmatpush1.bf16.msra.mxu0 0
  %1098 = vmatprep.mubr.bf16.mxu0 0
  %1099 = vmatmul.mubr.bf16.gmra.mrb[0].mxu0 %v1023
  %v1100 = vpop.f32.mrb[0].mxu0
  %v1101 = vadd.f32 0.0, %v1100
  %v1102 = vpop.f32.mrb[0].mxu0
  %v1103 = vadd.f32 0.0, %v1102
  %v1104 = vpop.f32.mrb[0].mxu0
  %v1105 = vpop.f32.mrb[0].mxu0
  %1106 = vdwg.mxu0
  %v1115 = vunpack.c.l.b16 %v964
  %v1116 = vunpack.c.h.b16 %v964
  %v1117 = vunpack.c.l.b16 %v965
  %v1118 = vunpack.c.h.b16 %v965
  %v1119 = vunpack.c.l.b16 %v966
  %v1120 = vunpack.c.h.b16 %v966
  %v1121 = vunpack.c.l.b16 %v967
  %v1122 = vunpack.c.h.b16 %v967
  %v1123 = vunpack.c.l.b16 %v968
  %v1124 = vunpack.c.h.b16 %v968
  %v1125 = vunpack.c.l.b16 %v969
  %v1126 = vunpack.c.h.b16 %v969
  %v1127 = vunpack.c.l.b16 %v970
  %v1128 = vunpack.c.h.b16 %v970
  %v1129 = vunpack.c.l.b16 %v971
  %v1130 = vunpack.c.h.b16 %v971
  %v1131 = vpack.c.b16 %v1119, %v1115
  %v1132 = vpack.c.b16 %v1120, %v1116
  %v1133 = vpack.c.b16 %v1121, %v1117
  %v1134 = vpack.c.b16 %v1122, %v1118
  %v1135 = vpack.c.b16 %v1127, %v1123
  %v1136 = vpack.c.b16 %v1128, %v1124
  %v1137 = vpack.c.b16 %v1129, %v1125
  %v1138 = vpack.c.b16 %v1130, %v1126
  %v1148 = vsel %vm78, %v963, 0
  %1150 = vmatprep.subr.bf16.mxu0 %v1132
  %1151 = vmatpush1.bf16.msra.mxu0 %v1131
  %1152 = vmatprep.subr.bf16.mxu0 %v1136
  %1153 = vmatpush1.bf16.msra.mxu0 %v1135
  %1154 = vmatprep.subr.bf16.mxu0 0
  %1155 = vmatpush1.bf16.msra.mxu0 0
  %1156 = vmatprep.subr.bf16.mxu0 0
  %1157 = vmatpush1.bf16.msra.mxu0 0
  %1158 = vmatprep.subr.bf16.mxu0 0
  %1159 = vmatpush1.bf16.msra.mxu0 0
  %1160 = vmatprep.subr.bf16.mxu0 0
  %1161 = vmatpush1.bf16.msra.mxu0 0
  %1162 = vmatprep.subr.bf16.mxu0 0
  %1163 = vmatpush1.bf16.msra.mxu0 0
  %1164 = vmatprep.subr.bf16.mxu0 0
  %1165 = vmatpush1.bf16.msra.mxu0 0
  %1166 = vmatprep.subr.bf16.mxu0 0
  %1167 = vmatpush1.bf16.msra.mxu0 0
  %1168 = vmatprep.subr.bf16.mxu0 0
  %1169 = vmatpush1.bf16.msra.mxu0 0
  %1170 = vmatprep.subr.bf16.mxu0 0
  %1171 = vmatpush1.bf16.msra.mxu0 0
  %1172 = vmatprep.subr.bf16.mxu0 0
  %1173 = vmatpush1.bf16.msra.mxu0 0
  %1174 = vmatprep.subr.bf16.mxu0 0
  %1175 = vmatpush1.bf16.msra.mxu0 0
  %1176 = vmatprep.subr.bf16.mxu0 0
  %1177 = vmatpush1.bf16.msra.mxu0 0
  %1178 = vmatprep.subr.bf16.mxu0 0
  %1179 = vmatpush1.bf16.msra.mxu0 0
  %1180 = vmatprep.subr.bf16.mxu0 0
  %1181 = vmatpush1.bf16.msra.mxu0 0
  %1182 = vmatprep.mubr.bf16.mxu0 0
  %1183 = vmatmul.mubr.bf16.gmra.mrb[0].mxu0 %v1148
  %v1184 = vpop.f32.mrb[0].mxu0
  %v1185 = vadd.f32 %v1060, %v1184
  %v1186 = vpop.f32.mrb[0].mxu0
  %v1187 = vadd.f32 %v1062, %v1186
  %v1188 = vpop.f32.mrb[0].mxu0
  %v1189 = vpop.f32.mrb[0].mxu0
  %1190 = vdwg.mxu0
  %1191 = vmatprep.subr.bf16.mxu0 %v1134
  %1192 = vmatpush1.bf16.msra.mxu0 %v1133
  %1193 = vmatprep.subr.bf16.mxu0 %v1138
  %1194 = vmatpush1.bf16.msra.mxu0 %v1137
  %1195 = vmatprep.subr.bf16.mxu0 0
  %1196 = vmatpush1.bf16.msra.mxu0 0
  %1197 = vmatprep.subr.bf16.mxu0 0
  %1198 = vmatpush1.bf16.msra.mxu0 0
  %1199 = vmatprep.subr.bf16.mxu0 0
  %1200 = vmatpush1.bf16.msra.mxu0 0
  %1201 = vmatprep.subr.bf16.mxu0 0
  %1202 = vmatpush1.bf16.msra.mxu0 0
  %1203 = vmatprep.subr.bf16.mxu0 0
  %1204 = vmatpush1.bf16.msra.mxu0 0
  %1205 = vmatprep.subr.bf16.mxu0 0
  %1206 = vmatpush1.bf16.msra.mxu0 0
  %1207 = vmatprep.subr.bf16.mxu0 0
  %1208 = vmatpush1.bf16.msra.mxu0 0
  %1209 = vmatprep.subr.bf16.mxu0 0
  %1210 = vmatpush1.bf16.msra.mxu0 0
  %1211 = vmatprep.subr.bf16.mxu0 0
  %1212 = vmatpush1.bf16.msra.mxu0 0
  %1213 = vmatprep.subr.bf16.mxu0 0
  %1214 = vmatpush1.bf16.msra.mxu0 0
  %1215 = vmatprep.subr.bf16.mxu0 0
  %1216 = vmatpush1.bf16.msra.mxu0 0
  %1217 = vmatprep.subr.bf16.mxu0 0
  %1218 = vmatpush1.bf16.msra.mxu0 0
  %1219 = vmatprep.subr.bf16.mxu0 0
  %1220 = vmatpush1.bf16.msra.mxu0 0
  %1221 = vmatprep.subr.bf16.mxu0 0
  %1222 = vmatpush1.bf16.msra.mxu0 0
  %1223 = vmatprep.mubr.bf16.mxu0 0
  %1224 = vmatmul.mubr.bf16.gmra.mrb[0].mxu0 %v1148
  %v1225 = vpop.f32.mrb[0].mxu0
  %v1226 = vadd.f32 %v1101, %v1225
  %v1227 = vpop.f32.mrb[0].mxu0
  %v1228 = vadd.f32 %v1103, %v1227
  %v1229 = vpop.f32.mrb[0].mxu0
  %v1230 = vpop.f32.mrb[0].mxu0
  %1231 = vdwg.mxu0
  %v1232 = vadd.f32 %v1185, %v292
  %v1233 = vadd.f32 %v1187, %v292
  %v1234 = vadd.f32 %v1226, %v292
  %v1235 = vadd.f32 %v1228, %v292
  %v1236 = vmax.f32 %v1232, 0.0
  %v1237 = vmax.f32 %v1233, 0.0
  %v1238 = vmax.f32 %v1234, 0.0
  %v1239 = vmax.f32 %v1235, 0.0
  %v1240 = vpack.c.bf16 %v1236, %v1236
  %v1241 = vpack.c.bf16 %v1237, %v1237
  %v1242 = vpack.c.bf16 %v1238, %v1238
  %v1243 = vpack.c.bf16 %v1239, %v1239
  %v1248 = vunpack.c.l.b16 %v1240
  %v1249 = vunpack.c.l.b16 %v1241
  %v1250 = vunpack.c.l.b16 %v1242
  %v1251 = vunpack.c.l.b16 %v1243
  %v1252 = vpack.c.b16 %v1249, %v1248
  %v1253 = vpack.c.b16 %v1251, %v1250
  %s1256 = scalar_lea.vmem %s3, 48
  %1257 = vst [vmem:[%s1256] sm:$0xff] %v1252
  %1258 = vst [vmem:[%s1256 + $0x8] sm:$0xff] %v1253
  %v1259 = vadd.f32 %v1236, %v1237
  %v1260 = vadd.f32 %v1259, %v1238
  %v1261 = vadd.f32 %v1260, %v1239
  %1262 = vadd.xlane.f32.xlu0 %v1261
  %v1263 = vpop.xlane.xlu0 %1262
  %v1264 = vadd.f32 %v951, %v1263
  %v1265 = vmul.f32 %v1236, %v1236
  %v1266 = vmul.f32 %v1237, %v1237
  %v1267 = vmul.f32 %v1238, %v1238
  %v1268 = vmul.f32 %v1239, %v1239
  %v1269 = vadd.f32 %v1265, %v1266
  %v1270 = vadd.f32 %v1269, %v1267
  %v1271 = vadd.f32 %v1270, %v1268
  %1272 = vadd.xlane.f32.xlu0 %v1271
  %v1273 = vpop.xlane.xlu0 %1272
  %v1274 = vadd.f32 %v961, %v1273
  %vm1275 = vcmask 7168
  %1276 = vst.msk [vmem:[%s4] sm:$0xff] %vm1275, %v1264
  %1277 = vst.msk [vmem:[%s5] sm:$0xff] %vm1275, %v1274
  // Predicated region
  $region14: #{genconv_forward.2} parent=0 // pred_check
    _
  $region15: #{genconv_forward.2} parent=0 // pred_check_branch
    %1279 = sbr.rel (0) target = $region17
  $region16: #{genconv_forward.2} parent=0 // pred_region
    _
  $region17: #{genconv_forward.2} parent=0 // pred_fallthru
    _
  // Predicated region
  $region18: #{genconv_forward.2} parent=0 // pred_check
    _
  $region19: #{genconv_forward.2} parent=0 // pred_check_branch
    %1281 = sbr.rel (0) target = $region21
  $region20: #{genconv_forward.2} parent=0 // pred_region
    _
  $region21: #{genconv_forward.2} parent=0 // pred_fallthru
    _
  // Predicated region
  $region22: #{genconv_forward.2} parent=0 // pred_check
    _
  $region23: #{genconv_forward.2} parent=0 // pred_check_branch
    %1283 = sbr.rel (0) target = $region25
  $region24: #{genconv_forward.2} parent=0 // pred_region
    _
  $region25: #{genconv_forward.2} parent=0 // pred_fallthru
    _
  // Predicated region
  $region26: #{genconv_forward.2} parent=0 // pred_check
    _
  $region27: #{genconv_forward.2} parent=0 // pred_check_branch
    %1285 = sbr.rel (0) target = $region29
  $region28: #{genconv_forward.2} parent=0 // pred_region
    _
  $region29: #{genconv_forward.2} parent=0 // pred_fallthru
    _
  // Predicated region
  $region30: #{genconv_forward.2} parent=0 // pred_check
    _
  $region31: #{genconv_forward.2} parent=0 // pred_check_branch
    %1287 = sbr.rel (0) target = $region33
  $region32: #{genconv_forward.2} parent=0 // pred_region
    _
  $region33: #{genconv_forward.2} parent=0 // pred_fallthru
    _
  // Predicated region
  $region34: #{genconv_forward.2} parent=0 // pred_check
    _
  $region35: #{genconv_forward.2} parent=0 // pred_check_branch
    %1289 = sbr.rel (0) target = $region37
  $region36: #{genconv_forward.2} parent=0 // pred_region
    _
  $region37: #{genconv_forward.2} parent=0 // pred_fallthru
    _

// kernel: genconv_forward.2
$region0: #{genconv_forward.2}
  #allocation0 [shape = 'u32[]', space=smem, size = 0x4, offset = 0x4, fixed_abs, tag = 'smem constant byte address 0x4 - core index']
  #allocation1 [shape = 'u32[144,128]{1,0:T(1,128)}', space=vmem, size = 0x12000, scoped, tag = 'internal scratch']
  %s0 = inlined_call_operand.vmem [shape: bf16[144,512], index: 0, kind: input, shape index: {}]
  %s1 = inlined_call_operand.vmem [shape: bf16[8,8,32], index: 1, kind: input, shape index: {}]
  %s2 = inlined_call_operand.vmem [shape: f32[8,1], index: 2, kind: input, shape index: {}]
  %s3 = inlined_call_operand.vmem [shape: bf16[4,8,512], index: 3, kind: output, shape index: {0}]
  %s4 = inlined_call_operand.vmem [shape: f32[1,8,1], index: 4, kind: output, shape index: {1}]
  %s5 = inlined_call_operand.vmem [shape: f32[1,8,1], index: 5, kind: output, shape index: {2}]
  %6 = xla_tuple %s3, %s4, %s5
  %s7 = sld [smem:[#allocation0]]
  $region38: #{genconv_forward.2} parent=0
    _
  %s9 = ssub.s32 1, %s7
  %s10 = scalar_select 0, %s9, %s7
  // Predicated region
  $region2: #{genconv_forward.2} parent=0 // pred_check
    _
  $region3: #{genconv_forward.2} parent=0 // pred_check_branch
    %12 = sbr.rel (0) target = $region5
  $region4: #{genconv_forward.2} parent=0 // pred_region
    _
  $region5: #{genconv_forward.2} parent=0 // pred_fallthru
    _
  // Predicated region
  $region6: #{genconv_forward.2} parent=0 // pred_check
    _
  $region7: #{genconv_forward.2} parent=0 // pred_check_branch
    %14 = sbr.rel (0) target = $region9
  $region8: #{genconv_forward.2} parent=0 // pred_region
    _
  $region9: #{genconv_forward.2} parent=0 // pred_fallthru
    _
  // Predicated region
  $region10: #{genconv_forward.2} parent=0 // pred_check
    _
  $region11: #{genconv_forward.2} parent=0 // pred_check_branch
    %16 = sbr.rel (0) target = $region13
  $region12: #{genconv_forward.2} parent=0 // pred_region
    _
  $region13: #{genconv_forward.2} parent=0 // pred_fallthru
    _
  %v18 = vld [vmem:[%s2] sm:$0xff]
  %v19 = vld [vmem:[%s1] sm:$0xf]
  %v20 = vld [vmem:[%s0] sm:$0xff]
  %v21 = vld [vmem:[%s0 + $0x8] sm:$0xff]
  %v22 = vld [vmem:[%s0 + $0x10] sm:$0xff]
  %v23 = vld [vmem:[%s0 + $0x18] sm:$0xff]
  %v24 = vld [vmem:[%s0 + $0x20] sm:$0xff]
  %v25 = vld [vmem:[%s0 + $0x28] sm:$0xff]
  %v26 = vld [vmem:[%s0 + $0x30] sm:$0xff]
  %v27 = vld [vmem:[%s0 + $0x38] sm:$0xff]
  %s28 = scalar_lea.vmem %s1, 4
  %v29 = vld [vmem:[%s28] sm:$0xf]
  %v30 = vld [vmem:[%s0 + $0x60] sm:$0xff]
  %v31 = vld [vmem:[%s0 + $0x68] sm:$0xff]
  %v32 = vld [vmem:[%s0 + $0x70] sm:$0xff]
  %v33 = vld [vmem:[%s0 + $0x78] sm:$0xff]
  %v34 = vld [vmem:[%s0 + $0x80] sm:$0xff]
  %v35 = vld [vmem:[%s0 + $0x88] sm:$0xff]
  %v36 = vld [vmem:[%s0 + $0x90] sm:$0xff]
  %v37 = vld [vmem:[%s0 + $0x98] sm:$0xff]
  %v46 = vunpack.c.l.b16 %v30
  %v47 = vunpack.c.h.b16 %v30
  %v48 = vunpack.c.l.b16 %v31
  %v49 = vunpack.c.h.b16 %v31
  %v50 = vunpack.c.l.b16 %v32
  %v51 = vunpack.c.h.b16 %v32
  %v52 = vunpack.c.l.b16 %v33
  %v53 = vunpack.c.h.b16 %v33
  %v54 = vunpack.c.l.b16 %v34
  %v55 = vunpack.c.h.b16 %v34
  %v56 = vunpack.c.l.b16 %v35
  %v57 = vunpack.c.h.b16 %v35
  %v58 = vunpack.c.l.b16 %v36
  %v59 = vunpack.c.h.b16 %v36
  %v60 = vunpack.c.l.b16 %v37
  %v61 = vunpack.c.h.b16 %v37
  %v62 = vpack.c.b16 %v50, %v46
  %v63 = vpack.c.b16 %v51, %v47
  %v64 = vpack.c.b16 %v52, %v48
  %v65 = vpack.c.b16 %v53, %v49
  %v66 = vpack.c.b16 %v58, %v54
  %v67 = vpack.c.b16 %v59, %v55
  %v68 = vpack.c.b16 %v60, %v56
  %v69 = vpack.c.b16 %v61, %v57
  %vm78 = vcmask 261120
  %v80 = vsel %vm78, %v29, 0
  %82 = vmatprep.subr.bf16.mxu0 %v63
  %83 = vmatpush1.bf16.msra.mxu0 %v62
  %84 = vmatprep.subr.bf16.mxu0 %v67
  %85 = vmatpush1.bf16.msra.mxu0 %v66
  %86 = vmatprep.subr.bf16.mxu0 0
  %87 = vmatpush1.bf16.msra.mxu0 0
  %88 = vmatprep.subr.bf16.mxu0 0
  %89 = vmatpush1.bf16.msra.mxu0 0
  %90 = vmatprep.subr.bf16.mxu0 0
  %91 = vmatpush1.bf16.msra.mxu0 0
  %92 = vmatprep.subr.bf16.mxu0 0
  %93 = vmatpush1.bf16.msra.mxu0 0
  %94 = vmatprep.subr.bf16.mxu0 0
  %95 = vmatpush1.bf16.msra.mxu0 0
  %96 = vmatprep.subr.bf16.mxu0 0
  %97 = vmatpush1.bf16.msra.mxu0 0
  %98 = vmatprep.subr.bf16.mxu0 0
  %99 = vmatpush1.bf16.msra.mxu0 0
  %100 = vmatprep.subr.bf16.mxu0 0
  %101 = vmatpush1.bf16.msra.mxu0 0
  %102 = vmatprep.subr.bf16.mxu0 0
  %103 = vmatpush1.bf16.msra.mxu0 0
  %104 = vmatprep.subr.bf16.mxu0 0
  %105 = vmatpush1.bf16.msra.mxu0 0
  %106 = vmatprep.subr.bf16.mxu0 0
  %107 = vmatpush1.bf16.msra.mxu0 0
  %108 = vmatprep.subr.bf16.mxu0 0
  %109 = vmatpush1.bf16.msra.mxu0 0
  %110 = vmatprep.subr.bf16.mxu0 0
  %111 = vmatpush1.bf16.msra.mxu0 0
  %112 = vmatprep.subr.bf16.mxu0 0
  %113 = vmatpush1.bf16.msra.mxu0 0
  %114 = vmatprep.mubr.bf16.mxu0 0
  %115 = vmatmul.mubr.bf16.gmra.mrb[0].mxu0 %v80
  %v116 = vpop.f32.mrb[0].mxu0
  %v117 = vadd.f32 0.0, %v116
  %v118 = vpop.f32.mrb[0].mxu0
  %v119 = vadd.f32 0.0, %v118
  %v120 = vpop.f32.mrb[0].mxu0
  %v121 = vpop.f32.mrb[0].mxu0
  %122 = vdwg.mxu0
  %123 = vmatprep.subr.bf16.mxu0 %v65
  %124 = vmatpush1.bf16.msra.mxu0 %v64
  %125 = vmatprep.subr.bf16.mxu0 %v69
  %126 = vmatpush1.bf16.msra.mxu0 %v68
  %127 = vmatprep.subr.bf16.mxu0 0
  %128 = vmatpush1.bf16.msra.mxu0 0
  %129 = vmatprep.subr.bf16.mxu0 0
  %130 = vmatpush1.bf16.msra.mxu0 0
  %131 = vmatprep.subr.bf16.mxu0 0
  %132 = vmatpush1.bf16.msra.mxu0 0
  %133 = vmatprep.subr.bf16.mxu0 0
  %134 = vmatpush1.bf16.msra.mxu0 0
  %135 = vmatprep.subr.bf16.mxu0 0
  %136 = vmatpush1.bf16.msra.mxu0 0
  %137 = vmatprep.subr.bf16.mxu0 0
  %138 = vmatpush1.bf16.msra.mxu0 0
  %139 = vmatprep.subr.bf16.mxu0 0
  %140 = vmatpush1.bf16.msra.mxu0 0
  %141 = vmatprep.subr.bf16.mxu0 0
  %142 = vmatpush1.bf16.msra.mxu0 0
  %143 = vmatprep.subr.bf16.mxu0 0
  %144 = vmatpush1.bf16.msra.mxu0 0
  %145 = vmatprep.subr.bf16.mxu0 0
  %146 = vmatpush1.bf16.msra.mxu0 0
  %147 = vmatprep.subr.bf16.mxu0 0
  %148 = vmatpush1.bf16.msra.mxu0 0
  %149 = vmatprep.subr.bf16.mxu0 0
  %150 = vmatpush1.bf16.msra.mxu0 0
  %151 = vmatprep.subr.bf16.mxu0 0
  %152 = vmatpush1.bf16.msra.mxu0 0
  %153 = vmatprep.subr.bf16.mxu0 0
  %154 = vmatpush1.bf16.msra.mxu0 0
  %155 = vmatprep.mubr.bf16.mxu0 0
  %156 = vmatmul.mubr.bf16.gmra.mrb[0].mxu0 %v80
  %v157 = vpop.f32.mrb[0].mxu0
  %v158 = vadd.f32 0.0, %v157
  %v159 = vpop.f32.mrb[0].mxu0
  %v160 = vadd.f32 0.0, %v159
  %v161 = vpop.f32.mrb[0].mxu0
  %v162 = vpop.f32.mrb[0].mxu0
  %163 = vdwg.mxu0
  %v172 = vunpack.c.l.b16 %v20
  %v173 = vunpack.c.h.b16 %v20
  %v174 = vunpack.c.l.b16 %v21
  %v175 = vunpack.c.h.b16 %v21
  %v176 = vunpack.c.l.b16 %v22
  %v177 = vunpack.c.h.b16 %v22
  %v178 = vunpack.c.l.b16 %v23
  %v179 = vunpack.c.h.b16 %v23
  %v180 = vunpack.c.l.b16 %v24
  %v181 = vunpack.c.h.b16 %v24
  %v182 = vunpack.c.l.b16 %v25
  %v183 = vunpack.c.h.b16 %v25
  %v184 = vunpack.c.l.b16 %v26
  %v185 = vunpack.c.h.b16 %v26
  %v186 = vunpack.c.l.b16 %v27
  %v187 = vunpack.c.h.b16 %v27
  %v188 = vpack.c.b16 %v176, %v172
  %v189 = vpack.c.b16 %v177, %v173
  %v190 = vpack.c.b16 %v178, %v174
  %v191 = vpack.c.b16 %v179, %v175
  %v192 = vpack.c.b16 %v184, %v180
  %v193 = vpack.c.b16 %v185, %v181
  %v194 = vpack.c.b16 %v186, %v182
  %v195 = vpack.c.b16 %v187, %v183
  %v205 = vsel %vm78, %v19, 0
  %207 = vmatprep.subr.bf16.mxu0 %v189
  %208 = vmatpush1.bf16.msra.mxu0 %v188
  %209 = vmatprep.subr.bf16.mxu0 %v193
  %210 = vmatpush1.bf16.msra.mxu0 %v192
  %211 = vmatprep.subr.bf16.mxu0 0
  %212 = vmatpush1.bf16.msra.mxu0 0
  %213 = vmatprep.subr.bf16.mxu0 0
  %214 = vmatpush1.bf16.msra.mxu0 0
  %215 = vmatprep.subr.bf16.mxu0 0
  %216 = vmatpush1.bf16.msra.mxu0 0
  %217 = vmatprep.subr.bf16.mxu0 0
  %218 = vmatpush1.bf16.msra.mxu0 0
  %219 = vmatprep.subr.bf16.mxu0 0
  %220 = vmatpush1.bf16.msra.mxu0 0
  %221 = vmatprep.subr.bf16.mxu0 0
  %222 = vmatpush1.bf16.msra.mxu0 0
  %223 = vmatprep.subr.bf16.mxu0 0
  %224 = vmatpush1.bf16.msra.mxu0 0
  %225 = vmatprep.subr.bf16.mxu0 0
  %226 = vmatpush1.bf16.msra.mxu0 0
  %227 = vmatprep.subr.bf16.mxu0 0
  %228 = vmatpush1.bf16.msra.mxu0 0
  %229 = vmatprep.subr.bf16.mxu0 0
  %230 = vmatpush1.bf16.msra.mxu0 0
  %231 = vmatprep.subr.bf16.mxu0 0
  %232 = vmatpush1.bf16.msra.mxu0 0
  %233 = vmatprep.subr.bf16.mxu0 0
  %234 = vmatpush1.bf16.msra.mxu0 0
  %235 = vmatprep.subr.bf16.mxu0 0
  %236 = vmatpush1.bf16.msra.mxu0 0
  %237 = vmatprep.subr.bf16.mxu0 0
  %238 = vmatpush1.bf16.msra.mxu0 0
  %239 = vmatprep.mubr.bf16.mxu0 0
  %240 = vmatmul.mubr.bf16.gmra.mrb[0].mxu0 %v205
  %v241 = vpop.f32.mrb[0].mxu0
  %v242 = vadd.f32 %v117, %v241
  %v243 = vpop.f32.mrb[0].mxu0
  %v244 = vadd.f32 %v119, %v243
  %v245 = vpop.f32.mrb[0].mxu0
  %v246 = vpop.f32.mrb[0].mxu0
  %247 = vdwg.mxu0
  %248 = vmatprep.subr.bf16.mxu0 %v191
  %249 = vmatpush1.bf16.msra.mxu0 %v190
  %250 = vmatprep.subr.bf16.mxu0 %v195
  %251 = vmatpush1.bf16.msra.mxu0 %v194
  %252 = vmatprep.subr.bf16.mxu0 0
  %253 = vmatpush1.bf16.msra.mxu0 0
  %254 = vmatprep.subr.bf16.mxu0 0
  %255 = vmatpush1.bf16.msra.mxu0 0
  %256 = vmatprep.subr.bf16.mxu0 0
  %257 = vmatpush1.bf16.msra.mxu0 0
  %258 = vmatprep.subr.bf16.mxu0 0
  %259 = vmatpush1.bf16.msra.mxu0 0
  %260 = vmatprep.subr.bf16.mxu0 0
  %261 = vmatpush1.bf16.msra.mxu0 0
  %262 = vmatprep.subr.bf16.mxu0 0
  %263 = vmatpush1.bf16.msra.mxu0 0
  %264 = vmatprep.subr.bf16.mxu0 0
  %265 = vmatpush1.bf16.msra.mxu0 0
  %266 = vmatprep.subr.bf16.mxu0 0
  %267 = vmatpush1.bf16.msra.mxu0 0
  %268 = vmatprep.subr.bf16.mxu0 0
  %269 = vmatpush1.bf16.msra.mxu0 0
  %270 = vmatprep.subr.bf16.mxu0 0
  %271 = vmatpush1.bf16.msra.mxu0 0
  %272 = vmatprep.subr.bf16.mxu0 0
  %273 = vmatpush1.bf16.msra.mxu0 0
  %274 = vmatprep.subr.bf16.mxu0 0
  %275 = vmatpush1.bf16.msra.mxu0 0
  %276 = vmatprep.subr.bf16.mxu0 0
  %277 = vmatpush1.bf16.msra.mxu0 0
  %278 = vmatprep.subr.bf16.mxu0 0
  %279 = vmatpush1.bf16.msra.mxu0 0
  %280 = vmatprep.mubr.bf16.mxu0 0
  %281 = vmatmul.mubr.bf16.gmra.mrb[0].mxu0 %v205
  %v282 = vpop.f32.mrb[0].mxu0
  %v283 = vadd.f32 %v158, %v282
  %v284 = vpop.f32.mrb[0].mxu0
  %v285 = vadd.f32 %v160, %v284
  %v286 = vpop.f32.mrb[0].mxu0
  %v287 = vpop.f32.mrb[0].mxu0
  %288 = vdwg.mxu0
  %290 = vset.pattern.permute.xlu0 0
  %291 = vperm.xlu0 %290, %v18
  %v292 = vpop.permute.xlu0 %291
  %v294 = vadd.f32 %v242, %v292
  %v295 = vadd.f32 %v244, %v292
  %v296 = vadd.f32 %v283, %v292
  %v297 = vadd.f32 %v285, %v292
  %v298 = vmax.f32 %v294, 0.0
  %v299 = vmax.f32 %v295, 0.0
  %v300 = vmax.f32 %v296, 0.0
  %v301 = vmax.f32 %v297, 0.0
  %v302 = vpack.c.bf16 %v298, %v298
  %v303 = vpack.c.bf16 %v299, %v299
  %v304 = vpack.c.bf16 %v300, %v300
  %v305 = vpack.c.bf16 %v301, %v301
  %v310 = vunpack.c.l.b16 %v302
  %v311 = vunpack.c.l.b16 %v303
  %v312 = vunpack.c.l.b16 %v304
  %v313 = vunpack.c.l.b16 %v305
  %v314 = vpack.c.b16 %v311, %v310
  %v315 = vpack.c.b16 %v313, %v312
  %318 = vst [vmem:[%s3] sm:$0xff] %v314
  %319 = vst [vmem:[%s3 + $0x8] sm:$0xff] %v315
  %v320 = vadd.f32 %v298, %v299
  %v321 = vadd.f32 %v320, %v300
  %v322 = vadd.f32 %v321, %v301
  %323 = vadd.xlane.f32.xlu0 %v322
  %v324 = vpop.xlane.xlu0 %323
  %v325 = vadd.f32 %v324, 0.0
  %v326 = vmul.f32 %v298, %v298
  %v327 = vmul.f32 %v299, %v299
  %v328 = vmul.f32 %v300, %v300
  %v329 = vmul.f32 %v301, %v301
  %v330 = vadd.f32 %v326, %v327
  %v331 = vadd.f32 %v330, %v328
  %v332 = vadd.f32 %v331, %v329
  %333 = vadd.xlane.f32.xlu0 %v332
  %v334 = vpop.xlane.xlu0 %333
  %v335 = vadd.f32 %v334, 0.0
  %s336 = scalar_lea.vmem %s1, 8
  %v337 = vld [vmem:[%s336] sm:$0xf]
  %v338 = vld [vmem:[%s0 + $0x20] sm:$0xff]
  %v339 = vld [vmem:[%s0 + $0x28] sm:$0xff]
  %v340 = vld [vmem:[%s0 + $0x30] sm:$0xff]
  %v341 = vld [vmem:[%s0 + $0x38] sm:$0xff]
  %v342 = vld [vmem:[%s0 + $0x40] sm:$0xff]
  %v343 = vld [vmem:[%s0 + $0x48] sm:$0xff]
  %v344 = vld [vmem:[%s0 + $0x50] sm:$0xff]
  %v345 = vld [vmem:[%s0 + $0x58] sm:$0xff]
  %s346 = scalar_lea.vmem %s1, 12
  %v347 = vld [vmem:[%s346] sm:$0xf]
  %v348 = vld [vmem:[%s0 + $0x80] sm:$0xff]
  %v349 = vld [vmem:[%s0 + $0x88] sm:$0xff]
  %v350 = vld [vmem:[%s0 + $0x90] sm:$0xff]
  %v351 = vld [vmem:[%s0 + $0x98] sm:$0xff]
  %v352 = vld [vmem:[%s0 + $0xa0] sm:$0xff]
  %v353 = vld [vmem:[%s0 + $0xa8] sm:$0xff]
  %v354 = vld [vmem:[%s0 + $0xb0] sm:$0xff]
  %v355 = vld [vmem:[%s0 + $0xb8] sm:$0xff]
  %v364 = vunpack.c.l.b16 %v348
  %v365 = vunpack.c.h.b16 %v348
  %v366 = vunpack.c.l.b16 %v349
  %v367 = vunpack.c.h.b16 %v349
  %v368 = vunpack.c.l.b16 %v350
  %v369 = vunpack.c.h.b16 %v350
  %v370 = vunpack.c.l.b16 %v351
  %v371 = vunpack.c.h.b16 %v351
  %v372 = vunpack.c.l.b16 %v352
  %v373 = vunpack.c.h.b16 %v352
  %v374 = vunpack.c.l.b16 %v353
  %v375 = vunpack.c.h.b16 %v353
  %v376 = vunpack.c.l.b16 %v354
  %v377 = vunpack.c.h.b16 %v354
  %v378 = vunpack.c.l.b16 %v355
  %v379 = vunpack.c.h.b16 %v355
  %v380 = vpack.c.b16 %v368, %v364
  %v381 = vpack.c.b16 %v369, %v365
  %v382 = vpack.c.b16 %v370, %v366
  %v383 = vpack.c.b16 %v371, %v367
  %v384 = vpack.c.b16 %v376, %v372
  %v385 = vpack.c.b16 %v377, %v373
  %v386 = vpack.c.b16 %v378, %v374
  %v387 = vpack.c.b16 %v379, %v375
  %v397 = vsel %vm78, %v347, 0
  %399 = vmatprep.subr.bf16.mxu0 %v381
  %400 = vmatpush1.bf16.msra.mxu0 %v380
  %401 = vmatprep.subr.bf16.mxu0 %v385
  %402 = vmatpush1.bf16.msra.mxu0 %v384
  %403 = vmatprep.subr.bf16.mxu0 0
  %404 = vmatpush1.bf16.msra.mxu0 0
  %405 = vmatprep.subr.bf16.mxu0 0
  %406 = vmatpush1.bf16.msra.mxu0 0
  %407 = vmatprep.subr.bf16.mxu0 0
  %408 = vmatpush1.bf16.msra.mxu0 0
  %409 = vmatprep.subr.bf16.mxu0 0
  %410 = vmatpush1.bf16.msra.mxu0 0
  %411 = vmatprep.subr.bf16.mxu0 0
  %412 = vmatpush1.bf16.msra.mxu0 0
  %413 = vmatprep.subr.bf16.mxu0 0
  %414 = vmatpush1.bf16.msra.mxu0 0
  %415 = vmatprep.subr.bf16.mxu0 0
  %416 = vmatpush1.bf16.msra.mxu0 0
  %417 = vmatprep.subr.bf16.mxu0 0
  %418 = vmatpush1.bf16.msra.mxu0 0
  %419 = vmatprep.subr.bf16.mxu0 0
  %420 = vmatpush1.bf16.msra.mxu0 0
  %421 = vmatprep.subr.bf16.mxu0 0
  %422 = vmatpush1.bf16.msra.mxu0 0
  %423 = vmatprep.subr.bf16.mxu0 0
  %424 = vmatpush1.bf16.msra.mxu0 0
  %425 = vmatprep.subr.bf16.mxu0 0
  %426 = vmatpush1.bf16.msra.mxu0 0
  %427 = vmatprep.subr.bf16.mxu0 0
  %428 = vmatpush1.bf16.msra.mxu0 0
  %429 = vmatprep.subr.bf16.mxu0 0
  %430 = vmatpush1.bf16.msra.mxu0 0
  %431 = vmatprep.mubr.bf16.mxu0 0
  %432 = vmatmul.mubr.bf16.gmra.mrb[0].mxu0 %v397
  %v433 = vpop.f32.mrb[0].mxu0
  %v434 = vadd.f32 0.0, %v433
  %v435 = vpop.f32.mrb[0].mxu0
  %v436 = vadd.f32 0.0, %v435
  %v437 = vpop.f32.mrb[0].mxu0
  %v438 = vpop.f32.mrb[0].mxu0
  %439 = vdwg.mxu0
  %440 = vmatprep.subr.bf16.mxu0 %v383
  %441 = vmatpush1.bf16.msra.mxu0 %v382
  %442 = vmatprep.subr.bf16.mxu0 %v387
  %443 = vmatpush1.bf16.msra.mxu0 %v386
  %444 = vmatprep.subr.bf16.mxu0 0
  %445 = vmatpush1.bf16.msra.mxu0 0
  %446 = vmatprep.subr.bf16.mxu0 0
  %447 = vmatpush1.bf16.msra.mxu0 0
  %448 = vmatprep.subr.bf16.mxu0 0
  %449 = vmatpush1.bf16.msra.mxu0 0
  %450 = vmatprep.subr.bf16.mxu0 0
  %451 = vmatpush1.bf16.msra.mxu0 0
  %452 = vmatprep.subr.bf16.mxu0 0
  %453 = vmatpush1.bf16.msra.mxu0 0
  %454 = vmatprep.subr.bf16.mxu0 0
  %455 = vmatpush1.bf16.msra.mxu0 0
  %456 = vmatprep.subr.bf16.mxu0 0
  %457 = vmatpush1.bf16.msra.mxu0 0
  %458 = vmatprep.subr.bf16.mxu0 0
  %459 = vmatpush1.bf16.msra.mxu0 0
  %460 = vmatprep.subr.bf16.mxu0 0
  %461 = vmatpush1.bf16.msra.mxu0 0
  %462 = vmatprep.subr.bf16.mxu0 0
  %463 = vmatpush1.bf16.msra.mxu0 0
  %464 = vmatprep.subr.bf16.mxu0 0
  %465 = vmatpush1.bf16.msra.mxu0 0
  %466 = vmatprep.subr.bf16.mxu0 0
  %467 = vmatpush1.bf16.msra.mxu0 0
  %468 = vmatprep.subr.bf16.mxu0 0
  %469 = vmatpush1.bf16.msra.mxu0 0
  %470 = vmatprep.subr.bf16.mxu0 0
  %471 = vmatpush1.bf16.msra.mxu0 0
  %472 = vmatprep.mubr.bf16.mxu0 0
  %473 = vmatmul.mubr.bf16.gmra.mrb[0].mxu0 %v397
  %v474 = vpop.f32.mrb[0].mxu0
  %v475 = vadd.f32 0.0, %v474
  %v476 = vpop.f32.mrb[0].mxu0
  %v477 = vadd.f32 0.0, %v476
  %v478 = vpop.f32.mrb[0].mxu0
  %v479 = vpop.f32.mrb[0].mxu0
  %480 = vdwg.mxu0
  %v489 = vunpack.c.l.b16 %v338
  %v490 = vunpack.c.h.b16 %v338
  %v491 = vunpack.c.l.b16 %v339
  %v492 = vunpack.c.h.b16 %v339
  %v493 = vunpack.c.l.b16 %v340
  %v494 = vunpack.c.h.b16 %v340
  %v495 = vunpack.c.l.b16 %v341
  %v496 = vunpack.c.h.b16 %v341
  %v497 = vunpack.c.l.b16 %v342
  %v498 = vunpack.c.h.b16 %v342
  %v499 = vunpack.c.l.b16 %v343
  %v500 = vunpack.c.h.b16 %v343
  %v501 = vunpack.c.l.b16 %v344
  %v502 = vunpack.c.h.b16 %v344
  %v503 = vunpack.c.l.b16 %v345
  %v504 = vunpack.c.h.b16 %v345
  %v505 = vpack.c.b16 %v493, %v489
  %v506 = vpack.c.b16 %v494, %v490
  %v507 = vpack.c.b16 %v495, %v491
  %v508 = vpack.c.b16 %v496, %v492
  %v509 = vpack.c.b16 %v501, %v497
  %v510 = vpack.c.b16 %v502, %v498
  %v511 = vpack.c.b16 %v503, %v499
  %v512 = vpack.c.b16 %v504, %v500
  %v522 = vsel %vm78, %v337, 0
  %524 = vmatprep.subr.bf16.mxu0 %v506
  %525 = vmatpush1.bf16.msra.mxu0 %v505
  %526 = vmatprep.subr.bf16.mxu0 %v510
  %527 = vmatpush1.bf16.msra.mxu0 %v509
  %528 = vmatprep.subr.bf16.mxu0 0
  %529 = vmatpush1.bf16.msra.mxu0 0
  %530 = vmatprep.subr.bf16.mxu0 0
  %531 = vmatpush1.bf16.msra.mxu0 0
  %532 = vmatprep.subr.bf16.mxu0 0
  %533 = vmatpush1.bf16.msra.mxu0 0
  %534 = vmatprep.subr.bf16.mxu0 0
  %535 = vmatpush1.bf16.msra.mxu0 0
  %536 = vmatprep.subr.bf16.mxu0 0
  %537 = vmatpush1.bf16.msra.mxu0 0
  %538 = vmatprep.subr.bf16.mxu0 0
  %539 = vmatpush1.bf16.msra.mxu0 0
  %540 = vmatprep.subr.bf16.mxu0 0
  %541 = vmatpush1.bf16.msra.mxu0 0
  %542 = vmatprep.subr.bf16.mxu0 0
  %543 = vmatpush1.bf16.msra.mxu0 0
  %544 = vmatprep.subr.bf16.mxu0 0
  %545 = vmatpush1.bf16.msra.mxu0 0
  %546 = vmatprep.subr.bf16.mxu0 0
  %547 = vmatpush1.bf16.msra.mxu0 0
  %548 = vmatprep.subr.bf16.mxu0 0
  %549 = vmatpush1.bf16.msra.mxu0 0
  %550 = vmatprep.subr.bf16.mxu0 0
  %551 = vmatpush1.bf16.msra.mxu0 0
  %552 = vmatprep.subr.bf16.mxu0 0
  %553 = vmatpush1.bf16.msra.mxu0 0
  %554 = vmatprep.subr.bf16.mxu0 0
  %555 = vmatpush1.bf16.msra.mxu0 0
  %556 = vmatprep.mubr.bf16.mxu0 0
  %557 = vmatmul.mubr.bf16.gmra.mrb[0].mxu0 %v522
  %v558 = vpop.f32.mrb[0].mxu0
  %v559 = vadd.f32 %v434, %v558
  %v560 = vpop.f32.mrb[0].mxu0
  %v561 = vadd.f32 %v436, %v560
  %v562 = vpop.f32.mrb[0].mxu0
  %v563 = vpop.f32.mrb[0].mxu0
  %564 = vdwg.mxu0
  %565 = vmatprep.subr.bf16.mxu0 %v508
  %566 = vmatpush1.bf16.msra.mxu0 %v507
  %567 = vmatprep.subr.bf16.mxu0 %v512
  %568 = vmatpush1.bf16.msra.mxu0 %v511
  %569 = vmatprep.subr.bf16.mxu0 0
  %570 = vmatpush1.bf16.msra.mxu0 0
  %571 = vmatprep.subr.bf16.mxu0 0
  %572 = vmatpush1.bf16.msra.mxu0 0
  %573 = vmatprep.subr.bf16.mxu0 0
  %574 = vmatpush1.bf16.msra.mxu0 0
  %575 = vmatprep.subr.bf16.mxu0 0
  %576 = vmatpush1.bf16.msra.mxu0 0
  %577 = vmatprep.subr.bf16.mxu0 0
  %578 = vmatpush1.bf16.msra.mxu0 0
  %579 = vmatprep.subr.bf16.mxu0 0
  %580 = vmatpush1.bf16.msra.mxu0 0
  %581 = vmatprep.subr.bf16.mxu0 0
  %582 = vmatpush1.bf16.msra.mxu0 0
  %583 = vmatprep.subr.bf16.mxu0 0
  %584 = vmatpush1.bf16.msra.mxu0 0
  %585 = vmatprep.subr.bf16.mxu0 0
  %586 = vmatpush1.bf16.msra.mxu0 0
  %587 = vmatprep.subr.bf16.mxu0 0
  %588 = vmatpush1.bf16.msra.mxu0 0
  %589 = vmatprep.subr.bf16.mxu0 0
  %590 = vmatpush1.bf16.msra.mxu0 0
  %591 = vmatprep.subr.bf16.mxu0 0
  %592 = vmatpush1.bf16.msra.mxu0 0
  %593 = vmatprep.subr.bf16.mxu0 0
  %594 = vmatpush1.bf16.msra.mxu0 0
  %595 = vmatprep.subr.bf16.mxu0 0
  %596 = vmatpush1.bf16.msra.mxu0 0
  %597 = vmatprep.mubr.bf16.mxu0 0
  %598 = vmatmul.mubr.bf16.gmra.mrb[0].mxu0 %v522
  %v599 = vpop.f32.mrb[0].mxu0
  %v600 = vadd.f32 %v475, %v599
  %v601 = vpop.f32.mrb[0].mxu0
  %v602 = vadd.f32 %v477, %v601
  %v603 = vpop.f32.mrb[0].mxu0
  %v604 = vpop.f32.mrb[0].mxu0
  %605 = vdwg.mxu0
  %v606 = vadd.f32 %v559, %v292
  %v607 = vadd.f32 %v561, %v292
  %v608 = vadd.f32 %v600, %v292
  %v609 = vadd.f32 %v602, %v292
  %v610 = vmax.f32 %v606, 0.0
  %v611 = vmax.f32 %v607, 0.0
  %v612 = vmax.f32 %v608, 0.0
  %v613 = vmax.f32 %v609, 0.0
  %v614 = vpack.c.bf16 %v610, %v610
  %v615 = vpack.c.bf16 %v611, %v611
  %v616 = vpack.c.bf16 %v612, %v612
  %v617 = vpack.c.bf16 %v613, %v613
  %v622 = vunpack.c.l.b16 %v614
  %v623 = vunpack.c.l.b16 %v615
  %v624 = vunpack.c.l.b16 %v616
  %v625 = vunpack.c.l.b16 %v617
  %v626 = vpack.c.b16 %v623, %v622
  %v627 = vpack.c.b16 %v625, %v624
  %s630 = scalar_lea.vmem %s3, 16
  %631 = vst [vmem:[%s630] sm:$0xff] %v626
  %632 = vst [vmem:[%s630 + $0x8] sm:$0xff] %v627
  %v633 = vadd.f32 %v610, %v611
  %v634 = vadd.f32 %v633, %v612
  %v635 = vadd.f32 %v634, %v613
  %636 = vadd.xlane.f32.xlu0 %v635
  %v637 = vpop.xlane.xlu0 %636
  %v638 = vadd.f32 %v325, %v637
  %v639 = vmul.f32 %v610, %v610
  %v640 = vmul.f32 %v611, %v611
  %v641 = vmul.f32 %v612, %v612
  %v642 = vmul.f32 %v613, %v613
  %v643 = vadd.f32 %v639, %v640
  %v644 = vadd.f32 %v643, %v641
  %v645 = vadd.f32 %v644, %v642
  %646 = vadd.xlane.f32.xlu0 %v645
  %v647 = vpop.xlane.xlu0 %646
  %v648 = vadd.f32 %v335, %v647
  %s649 = scalar_lea.vmem %s1, 16
  %v650 = vld [vmem:[%s649] sm:$0xf]
  %v651 = vld [vmem:[%s0 + $0x60] sm:$0xff]
  %v652 = vld [vmem:[%s0 + $0x68] sm:$0xff]
  %v653 = vld [vmem:[%s0 + $0x70] sm:$0xff]
  %v654 = vld [vmem:[%s0 + $0x78] sm:$0xff]
  %v655 = vld [vmem:[%s0 + $0x80] sm:$0xff]
  %v656 = vld [vmem:[%s0 + $0x88] sm:$0xff]
  %v657 = vld [vmem:[%s0 + $0x90] sm:$0xff]
  %v658 = vld [vmem:[%s0 + $0x98] sm:$0xff]
  %s659 = scalar_lea.vmem %s1, 20
  %v660 = vld [vmem:[%s659] sm:$0xf]
  %v661 = vld [vmem:[%s0 + $0xc0] sm:$0xff]
  %v662 = vld [vmem:[%s0 + $0xc8] sm:$0xff]
  %v663 = vld [vmem:[%s0 + $0xd0] sm:$0xff]
  %v664 = vld [vmem:[%s0 + $0xd8] sm:$0xff]
  %v665 = vld [vmem:[%s0 + $0xe0] sm:$0xff]
  %v666 = vld [vmem:[%s0 + $0xe8] sm:$0xff]
  %v667 = vld [vmem:[%s0 + $0xf0] sm:$0xff]
  %v668 = vld [vmem:[%s0 + $0xf8] sm:$0xff]
  %v677 = vunpack.c.l.b16 %v661
  %v678 = vunpack.c.h.b16 %v661
  %v679 = vunpack.c.l.b16 %v662
  %v680 = vunpack.c.h.b16 %v662
  %v681 = vunpack.c.l.b16 %v663
  %v682 = vunpack.c.h.b16 %v663
  %v683 = vunpack.c.l.b16 %v664
  %v684 = vunpack.c.h.b16 %v664
  %v685 = vunpack.c.l.b16 %v665
  %v686 = vunpack.c.h.b16 %v665
  %v687 = vunpack.c.l.b16 %v666
  %v688 = vunpack.c.h.b16 %v666
  %v689 = vunpack.c.l.b16 %v667
  %v690 = vunpack.c.h.b16 %v667
  %v691 = vunpack.c.l.b16 %v668
  %v692 = vunpack.c.h.b16 %v668
  %v693 = vpack.c.b16 %v681, %v677
  %v694 = vpack.c.b16 %v682, %v678
  %v695 = vpack.c.b16 %v683, %v679
  %v696 = vpack.c.b16 %v684, %v680
  %v697 = vpack.c.b16 %v689, %v685
  %v698 = vpack.c.b16 %v690, %v686
  %v699 = vpack.c.b16 %v691, %v687
  %v700 = vpack.c.b16 %v692, %v688
  %v710 = vsel %vm78, %v660, 0
  %712 = vmatprep.subr.bf16.mxu0 %v694
  %713 = vmatpush1.bf16.msra.mxu0 %v693
  %714 = vmatprep.subr.bf16.mxu0 %v698
  %715 = vmatpush1.bf16.msra.mxu0 %v697
  %716 = vmatprep.subr.bf16.mxu0 0
  %717 = vmatpush1.bf16.msra.mxu0 0
  %718 = vmatprep.subr.bf16.mxu0 0
  %719 = vmatpush1.bf16.msra.mxu0 0
  %720 = vmatprep.subr.bf16.mxu0 0
  %721 = vmatpush1.bf16.msra.mxu0 0
  %722 = vmatprep.subr.bf16.mxu0 0
  %723 = vmatpush1.bf16.msra.mxu0 0
  %724 = vmatprep.subr.bf16.mxu0 0
  %725 = vmatpush1.bf16.msra.mxu0 0
  %726 = vmatprep.subr.bf16.mxu0 0
  %727 = vmatpush1.bf16.msra.mxu0 0
  %728 = vmatprep.subr.bf16.mxu0 0
  %729 = vmatpush1.bf16.msra.mxu0 0
  %730 = vmatprep.subr.bf16.mxu0 0
  %731 = vmatpush1.bf16.msra.mxu0 0
  %732 = vmatprep.subr.bf16.mxu0 0
  %733 = vmatpush1.bf16.msra.mxu0 0
  %734 = vmatprep.subr.bf16.mxu0 0
  %735 = vmatpush1.bf16.msra.mxu0 0
  %736 = vmatprep.subr.bf16.mxu0 0
  %737 = vmatpush1.bf16.msra.mxu0 0
  %738 = vmatprep.subr.bf16.mxu0 0
  %739 = vmatpush1.bf16.msra.mxu0 0
  %740 = vmatprep.subr.bf16.mxu0 0
  %741 = vmatpush1.bf16.msra.mxu0 0
  %742 = vmatprep.subr.bf16.mxu0 0
  %743 = vmatpush1.bf16.msra.mxu0 0
  %744 = vmatprep.mubr.bf16.mxu0 0
  %745 = vmatmul.mubr.bf16.gmra.mrb[0].mxu0 %v710
  %v746 = vpop.f32.mrb[0].mxu0
  %v747 = vadd.f32 0.0, %v746
  %v748 = vpop.f32.mrb[0].mxu0
  %v749 = vadd.f32 0.0, %v748
  %v750 = vpop.f32.mrb[0].mxu0
  %v751 = vpop.f32.mrb[0].mxu0
  %752 = vdwg.mxu0
  %753 = vmatprep.subr.bf16.mxu0 %v696
  %754 = vmatpush1.bf16.msra.mxu0 %v695
  %755 = vmatprep.subr.bf16.mxu0 %v700
  %756 = vmatpush1.bf16.msra.mxu0 %v699
  %757 = vmatprep.subr.bf16.mxu0 0
  %758 = vmatpush1.bf16.msra.mxu0 0
  %759 = vmatprep.subr.bf16.mxu0 0
  %760 = vmatpush1.bf16.msra.mxu0 0
  %761 = vmatprep.subr.bf16.mxu0 0
  %762 = vmatpush1.bf16.msra.mxu0 0
  %763 = vmatprep.subr.bf16.mxu0 0
  %764 = vmatpush1.bf16.msra.mxu0 0
  %765 = vmatprep.subr.bf16.mxu0 0
  %766 = vmatpush1.bf16.msra.mxu0 0
  %767 = vmatprep.subr.bf16.mxu0 0
  %768 = vmatpush1.bf16.msra.mxu0 0
  %769 = vmatprep.subr.bf16.mxu0 0
  %770 = vmatpush1.bf16.msra.mxu0 0
  %771 = vmatprep.subr.bf16.mxu0 0
  %772 = vmatpush1.bf16.msra.mxu0 0
  %773 = vmatprep.subr.bf16.mxu0 0
  %774 = vmatpush1.bf16.msra.mxu0 0
  %775 = vmatprep.subr.bf16.mxu0 0
  %776 = vmatpush1.bf16.msra.mxu0 0
  %777 = vmatprep.subr.bf16.mxu0 0
  %778 = vmatpush1.bf16.msra.mxu0 0
  %779 = vmatprep.subr.bf16.mxu0 0
  %780 = vmatpush1.bf16.msra.mxu0 0
  %781 = vmatprep.subr.bf16.mxu0 0
  %782 = vmatpush1.bf16.msra.mxu0 0
  %783 = vmatprep.subr.bf16.mxu0 0
  %784 = vmatpush1.bf16.msra.mxu0 0
  %785 = vmatprep.mubr.bf16.mxu0 0
  %786 = vmatmul.mubr.bf16.gmra.mrb[0].mxu0 %v710
  %v787 = vpop.f32.mrb[0].mxu0
  %v788 = vadd.f32 0.0, %v787
  %v789 = vpop.f32.mrb[0].mxu0
  %v790 = vadd.f32 0.0, %v789
  %v791 = vpop.f32.mrb[0].mxu0
  %v792 = vpop.f32.mrb[0].mxu0
  %793 = vdwg.mxu0
  %v802 = vunpack.c.l.b16 %v651
  %v803 = vunpack.c.h.b16 %v651
  %v804 = vunpack.c.l.b16 %v652
  %v805 = vunpack.c.h.b16 %v652
  %v806 = vunpack.c.l.b16 %v653
  %v807 = vunpack.c.h.b16 %v653
  %v808 = vunpack.c.l.b16 %v654
  %v809 = vunpack.c.h.b16 %v654
  %v810 = vunpack.c.l.b16 %v655
  %v811 = vunpack.c.h.b16 %v655
  %v812 = vunpack.c.l.b16 %v656
  %v813 = vunpack.c.h.b16 %v656
  %v814 = vunpack.c.l.b16 %v657
  %v815 = vunpack.c.h.b16 %v657
  %v816 = vunpack.c.l.b16 %v658
  %v817 = vunpack.c.h.b16 %v658
  %v818 = vpack.c.b16 %v806, %v802
  %v819 = vpack.c.b16 %v807, %v803
  %v820 = vpack.c.b16 %v808, %v804
  %v821 = vpack.c.b16 %v809, %v805
  %v822 = vpack.c.b16 %v814, %v810
  %v823 = vpack.c.b16 %v815, %v811
  %v824 = vpack.c.b16 %v816, %v812
  %v825 = vpack.c.b16 %v817, %v813
  %v835 = vsel %vm78, %v650, 0
  %837 = vmatprep.subr.bf16.mxu0 %v819
  %838 = vmatpush1.bf16.msra.mxu0 %v818
  %839 = vmatprep.subr.bf16.mxu0 %v823
  %840 = vmatpush1.bf16.msra.mxu0 %v822
  %841 = vmatprep.subr.bf16.mxu0 0
  %842 = vmatpush1.bf16.msra.mxu0 0
  %843 = vmatprep.subr.bf16.mxu0 0
  %844 = vmatpush1.bf16.msra.mxu0 0
  %845 = vmatprep.subr.bf16.mxu0 0
  %846 = vmatpush1.bf16.msra.mxu0 0
  %847 = vmatprep.subr.bf16.mxu0 0
  %848 = vmatpush1.bf16.msra.mxu0 0
  %849 = vmatprep.subr.bf16.mxu0 0
  %850 = vmatpush1.bf16.msra.mxu0 0
  %851 = vmatprep.subr.bf16.mxu0 0
  %852 = vmatpush1.bf16.msra.mxu0 0
  %853 = vmatprep.subr.bf16.mxu0 0
  %854 = vmatpush1.bf16.msra.mxu0 0
  %855 = vmatprep.subr.bf16.mxu0 0
  %856 = vmatpush1.bf16.msra.mxu0 0
  %857 = vmatprep.subr.bf16.mxu0 0
  %858 = vmatpush1.bf16.msra.mxu0 0
  %859 = vmatprep.subr.bf16.mxu0 0
  %860 = vmatpush1.bf16.msra.mxu0 0
  %861 = vmatprep.subr.bf16.mxu0 0
  %862 = vmatpush1.bf16.msra.mxu0 0
  %863 = vmatprep.subr.bf16.mxu0 0
  %864 = vmatpush1.bf16.msra.mxu0 0
  %865 = vmatprep.subr.bf16.mxu0 0
  %866 = vmatpush1.bf16.msra.mxu0 0
  %867 = vmatprep.subr.bf16.mxu0 0
  %868 = vmatpush1.bf16.msra.mxu0 0
  %869 = vmatprep.mubr.bf16.mxu0 0
  %870 = vmatmul.mubr.bf16.gmra.mrb[0].mxu0 %v835
  %v871 = vpop.f32.mrb[0].mxu0
  %v872 = vadd.f32 %v747, %v871
  %v873 = vpop.f32.mrb[0].mxu0
  %v874 = vadd.f32 %v749, %v873
  %v875 = vpop.f32.mrb[0].mxu0
  %v876 = vpop.f32.mrb[0].mxu0
  %877 = vdwg.mxu0
  %878 = vmatprep.subr.bf16.mxu0 %v821
  %879 = vmatpush1.bf16.msra.mxu0 %v820
  %880 = vmatprep.subr.bf16.mxu0 %v825
  %881 = vmatpush1.bf16.msra.mxu0 %v824
  %882 = vmatprep.subr.bf16.mxu0 0
  %883 = vmatpush1.bf16.msra.mxu0 0
  %884 = vmatprep.subr.bf16.mxu0 0
  %885 = vmatpush1.bf16.msra.mxu0 0
  %886 = vmatprep.subr.bf16.mxu0 0
  %887 = vmatpush1.bf16.msra.mxu0 0
  %888 = vmatprep.subr.bf16.mxu0 0
  %889 = vmatpush1.bf16.msra.mxu0 0
  %890 = vmatprep.subr.bf16.mxu0 0
  %891 = vmatpush1.bf16.msra.mxu0 0
  %892 = vmatprep.subr.bf16.mxu0 0
  %893 = vmatpush1.bf16.msra.mxu0 0
  %894 = vmatprep.subr.bf16.mxu0 0
  %895 = vmatpush1.bf16.msra.mxu0 0
  %896 = vmatprep.subr.bf16.mxu0 0
  %897 = vmatpush1.bf16.msra.mxu0 0
  %898 = vmatprep.subr.bf16.mxu0 0
  %899 = vmatpush1.bf16.msra.mxu0 0
  %900 = vmatprep.subr.bf16.mxu0 0
  %901 = vmatpush1.bf16.msra.mxu0 0
  %902 = vmatprep.subr.bf16.mxu0 0
  %903 = vmatpush1.bf16.msra.mxu0 0
  %904 = vmatprep.subr.bf16.mxu0 0
  %905 = vmatpush1.bf16.msra.mxu0 0
  %906 = vmatprep.subr.bf16.mxu0 0
  %907 = vmatpush1.bf16.msra.mxu0 0
  %908 = vmatprep.subr.bf16.mxu0 0
  %909 = vmatpush1.bf16.msra.mxu0 0
  %910 = vmatprep.mubr.bf16.mxu0 0
  %911 = vmatmul.mubr.bf16.gmra.mrb[0].mxu0 %v835
  %v912 = vpop.f32.mrb[0].mxu0
  %v913 = vadd.f32 %v788, %v912
  %v914 = vpop.f32.mrb[0].mxu0
  %v915 = vadd.f32 %v790, %v914
  %v916 = vpop.f32.mrb[0].mxu0
  %v917 = vpop.f32.mrb[0].mxu0
  %918 = vdwg.mxu0
  %v919 = vadd.f32 %v872, %v292
  %v920 = vadd.f32 %v874, %v292
  %v921 = vadd.f32 %v913, %v292
  %v922 = vadd.f32 %v915, %v292
  %v923 = vmax.f32 %v919, 0.0
  %v924 = vmax.f32 %v920, 0.0
  %v925 = vmax.f32 %v921, 0.0
  %v926 = vmax.f32 %v922, 0.0
  %v927 = vpack.c.bf16 %v923, %v923
  %v928 = vpack.c.bf16 %v924, %v924
  %v929 = vpack.c.bf16 %v925, %v925
  %v930 = vpack.c.bf16 %v926, %v926
  %v935 = vunpack.c.l.b16 %v927
  %v936 = vunpack.c.l.b16 %v928
  %v937 = vunpack.c.l.b16 %v929
  %v938 = vunpack.c.l.b16 %v930
  %v939 = vpack.c.b16 %v936, %v935
  %v940 = vpack.c.b16 %v938, %v937
  %s943 = scalar_lea.vmem %s3, 32
  %944 = vst [vmem:[%s943] sm:$0xff] %v939
  %945 = vst [vmem:[%s943 + $0x8] sm:$0xff] %v940
  %v946 = vadd.f32 %v923, %v924
  %v947 = vadd.f32 %v946, %v925
  %v948 = vadd.f32 %v947, %v926
  %949 = vadd.xlane.f32.xlu0 %v948
  %v950 = vpop.xlane.xlu0 %949
  %v951 = vadd.f32 %v638, %v950
  %v952 = vmul.f32 %v923, %v923
  %v953 = vmul.f32 %v924, %v924
  %v954 = vmul.f32 %v925, %v925
  %v955 = vmul.f32 %v926, %v926
  %v956 = vadd.f32 %v952, %v953
  %v957 = vadd.f32 %v956, %v954
  %v958 = vadd.f32 %v957, %v955
  %959 = vadd.xlane.f32.xlu0 %v958
  %v960 = vpop.xlane.xlu0 %959
  %v961 = vadd.f32 %v648, %v960
  %s962 = scalar_lea.vmem %s1, 24
  %v963 = vld [vmem:[%s962] sm:$0xf]
  %v964 = vld [vmem:[%s0 + $0x80] sm:$0xff]
  %v965 = vld [vmem:[%s0 + $0x88] sm:$0xff]
  %v966 = vld [vmem:[%s0 + $0x90] sm:$0xff]
  %v967 = vld [vmem:[%s0 + $0x98] sm:$0xff]
  %v968 = vld [vmem:[%s0 + $0xa0] sm:$0xff]
  %v969 = vld [vmem:[%s0 + $0xa8] sm:$0xff]
  %v970 = vld [vmem:[%s0 + $0xb0] sm:$0xff]
  %v971 = vld [vmem:[%s0 + $0xb8] sm:$0xff]
  %s972 = scalar_lea.vmem %s1, 28
  %v973 = vld [vmem:[%s972] sm:$0xf]
  %v974 = vld [vmem:[%s0 + $0xe0] sm:$0xff]
  %v975 = vld [vmem:[%s0 + $0xe8] sm:$0xff]
  %v976 = vld [vmem:[%s0 + $0xf0] sm:$0xff]
  %v977 = vld [vmem:[%s0 + $0xf8] sm:$0xff]
  %v978 = vld [vmem:[%s0 + $0x100] sm:$0xff]
  %v979 = vld [vmem:[%s0 + $0x108] sm:$0xff]
  %v980 = vld [vmem:[%s0 + $0x110] sm:$0xff]
  %v981 = vld [vmem:[%s0 + $0x118] sm:$0xff]
  %v990 = vunpack.c.l.b16 %v974
  %v991 = vunpack.c.h.b16 %v974
  %v992 = vunpack.c.l.b16 %v975
  %v993 = vunpack.c.h.b16 %v975
  %v994 = vunpack.c.l.b16 %v976
  %v995 = vunpack.c.h.b16 %v976
  %v996 = vunpack.c.l.b16 %v977
  %v997 = vunpack.c.h.b16 %v977
  %v998 = vunpack.c.l.b16 %v978
  %v999 = vunpack.c.h.b16 %v978
  %v1000 = vunpack.c.l.b16 %v979
  %v1001 = vunpack.c.h.b16 %v979
  %v1002 = vunpack.c.l.b16 %v980
  %v1003 = vunpack.c.h.b16 %v980
  %v1004 = vunpack.c.l.b16 %v981
  %v1005 = vunpack.c.h.b16 %v981
  %v1006 = vpack.c.b16 %v994, %v990
  %v1007 = vpack.c.b16 %v995, %v991
  %v1008 = vpack.c.b16 %v996, %v992
  %v1009 = vpack.c.b16 %v997, %v993
  %v1010 = vpack.c.b16 %v1002, %v998
  %v1011 = vpack.c.b16 %v1003, %v999
  %v1012 = vpack.c.b16 %v1004, %v1000
  %v1013 = vpack.c.b16 %v1005, %v1001
  %v1023 = vsel %vm78, %v973, 0
  %1025 = vmatprep.subr.bf16.mxu0 %v1007
  %1026 = vmatpush1.bf16.msra.mxu0 %v1006
  %1027 = vmatprep.subr.bf16.mxu0 %v1011
  %1028 = vmatpush1.bf16.msra.mxu0 %v1010
  %1029 = vmatprep.subr.bf16.mxu0 0
  %1030 = vmatpush1.bf16.msra.mxu0 0
  %1031 = vmatprep.subr.bf16.mxu0 0
  %1032 = vmatpush1.bf16.msra.mxu0 0
  %1033 = vmatprep.subr.bf16.mxu0 0
  %1034 = vmatpush1.bf16.msra.mxu0 0
  %1035 = vmatprep.subr.bf16.mxu0 0
  %1036 = vmatpush1.bf16.msra.mxu0 0
  %1037 = vmatprep.subr.bf16.mxu0 0
  %1038 = vmatpush1.bf16.msra.mxu0 0
  %1039 = vmatprep.subr.bf16.mxu0 0
  %1040 = vmatpush1.bf16.msra.mxu0 0
  %1041 = vmatprep.subr.bf16.mxu0 0
  %1042 = vmatpush1.bf16.msra.mxu0 0
  %1043 = vmatprep.subr.bf16.mxu0 0
  %1044 = vmatpush1.bf16.msra.mxu0 0
  %1045 = vmatprep.subr.bf16.mxu0 0
  %1046 = vmatpush1.bf16.msra.mxu0 0
  %1047 = vmatprep.subr.bf16.mxu0 0
  %1048 = vmatpush1.bf16.msra.mxu0 0
  %1049 = vmatprep.subr.bf16.mxu0 0
  %1050 = vmatpush1.bf16.msra.mxu0 0
  %1051 = vmatprep.subr.bf16.mxu0 0
  %1052 = vmatpush1.bf16.msra.mxu0 0
  %1053 = vmatprep.subr.bf16.mxu0 0
  %1054 = vmatpush1.bf16.msra.mxu0 0
  %1055 = vmatprep.subr.bf16.mxu0 0
  %1056 = vmatpush1.bf16.msra.mxu0 0
  %1057 = vmatprep.mubr.bf16.mxu0 0
  %1058 = vmatmul.mubr.bf16.gmra.mrb[0].mxu0 %v1023
  %v1059 = vpop.f32.mrb[0].mxu0
  %v1060 = vadd.f32 0.0, %v1059
  %v1061 = vpop.f32.mrb[0].mxu0
  %v1062 = vadd.f32 0.0, %v1061
  %v1063 = vpop.f32.mrb[0].mxu0
  %v1064 = vpop.f32.mrb[0].mxu0
  %1065 = vdwg.mxu0
  %1066 = vmatprep.subr.bf16.mxu0 %v1009
  %1067 = vmatpush1.bf16.msra.mxu0 %v1008
  %1068 = vmatprep.subr.bf16.mxu0 %v1013
  %1069 = vmatpush1.bf16.msra.mxu0 %v1012
  %1070 = vmatprep.subr.bf16.mxu0 0
  %1071 = vmatpush1.bf16.msra.mxu0 0
  %1072 = vmatprep.subr.bf16.mxu0 0
  %1073 = vmatpush1.bf16.msra.mxu0 0
  %1074 = vmatprep.subr.bf16.mxu0 0
  %1075 = vmatpush1.bf16.msra.mxu0 0
  %1076 = vmatprep.subr.bf16.mxu0 0
  %1077 = vmatpush1.bf16.msra.mxu0 0
  %1078 = vmatprep.subr.bf16.mxu0 0
  %1079 = vmatpush1.bf16.msra.mxu0 0
  %1080 = vmatprep.subr.bf16.mxu0 0
  %1081 = vmatpush1.bf16.msra.mxu0 0
  %1082 = vmatprep.subr.bf16.mxu0 0
  %1083 = vmatpush1.bf16.msra.mxu0 0
  %1084 = vmatprep.subr.bf16.mxu0 0
  %1085 = vmatpush1.bf16.msra.mxu0 0
  %1086 = vmatprep.subr.bf16.mxu0 0
  %1087 = vmatpush1.bf16.msra.mxu0 0
  %1088 = vmatprep.subr.bf16.mxu0 0
  %1089 = vmatpush1.bf16.msra.mxu0 0
  %1090 = vmatprep.subr.bf16.mxu0 0
  %1091 = vmatpush1.bf16.msra.mxu0 0
  %1092 = vmatprep.subr.bf16.mxu0 0
  %1093 = vmatpush1.bf16.msra.mxu0 0
  %1094 = vmatprep.subr.bf16.mxu0 0
  %1095 = vmatpush1.bf16.msra.mxu0 0
  %1096 = vmatprep.subr.bf16.mxu0 0
  %1097 = vmatpush1.bf16.msra.mxu0 0
  %1098 = vmatprep.mubr.bf16.mxu0 0
  %1099 = vmatmul.mubr.bf16.gmra.mrb[0].mxu0 %v1023
  %v1100 = vpop.f32.mrb[0].mxu0
  %v1101 = vadd.f32 0.0, %v1100
  %v1102 = vpop.f32.mrb[0].mxu0
  %v1103 = vadd.f32 0.0, %v1102
  %v1104 = vpop.f32.mrb[0].mxu0
  %v1105 = vpop.f32.mrb[0].mxu0
  %1106 = vdwg.mxu0
  %v1115 = vunpack.c.l.b16 %v964
  %v1116 = vunpack.c.h.b16 %v964
  %v1117 = vunpack.c.l.b16 %v965
  %v1118 = vunpack.c.h.b16 %v965
  %v1119 = vunpack.c.l.b16 %v966
  %v1120 = vunpack.c.h.b16 %v966
  %v1121 = vunpack.c.l.b16 %v967
  %v1122 = vunpack.c.h.b16 %v967
  %v1123 = vunpack.c.l.b16 %v968
  %v1124 = vunpack.c.h.b16 %v968
  %v1125 = vunpack.c.l.b16 %v969
  %v1126 = vunpack.c.h.b16 %v969
  %v1127 = vunpack.c.l.b16 %v970
  %v1128 = vunpack.c.h.b16 %v970
  %v1129 = vunpack.c.l.b16 %v971
  %v1130 = vunpack.c.h.b16 %v971
  %v1131 = vpack.c.b16 %v1119, %v1115
  %v1132 = vpack.c.b16 %v1120, %v1116
  %v1133 = vpack.c.b16 %v1121, %v1117
  %v1134 = vpack.c.b16 %v1122, %v1118
  %v1135 = vpack.c.b16 %v1127, %v1123
  %v1136 = vpack.c.b16 %v1128, %v1124
  %v1137 = vpack.c.b16 %v1129, %v1125
  %v1138 = vpack.c.b16 %v1130, %v1126
  %v1148 = vsel %vm78, %v963, 0
  %1150 = vmatprep.subr.bf16.mxu0 %v1132
  %1151 = vmatpush1.bf16.msra.mxu0 %v1131
  %1152 = vmatprep.subr.bf16.mxu0 %v1136
  %1153 = vmatpush1.bf16.msra.mxu0 %v1135
  %1154 = vmatprep.subr.bf16.mxu0 0
  %1155 = vmatpush1.bf16.msra.mxu0 0
  %1156 = vmatprep.subr.bf16.mxu0 0
  %1157 = vmatpush1.bf16.msra.mxu0 0
  %1158 = vmatprep.subr.bf16.mxu0 0
  %1159 = vmatpush1.bf16.msra.mxu0 0
  %1160 = vmatprep.subr.bf16.mxu0 0
  %1161 = vmatpush1.bf16.msra.mxu0 0
  %1162 = vmatprep.subr.bf16.mxu0 0
  %1163 = vmatpush1.bf16.msra.mxu0 0
  %1164 = vmatprep.subr.bf16.mxu0 0
  %1165 = vmatpush1.bf16.msra.mxu0 0
  %1166 = vmatprep.subr.bf16.mxu0 0
  %1167 = vmatpush1.bf16.msra.mxu0 0
  %1168 = vmatprep.subr.bf16.mxu0 0
  %1169 = vmatpush1.bf16.msra.mxu0 0
  %1170 = vmatprep.subr.bf16.mxu0 0
  %1171 = vmatpush1.bf16.msra.mxu0 0
  %1172 = vmatprep.subr.bf16.mxu0 0
  %1173 = vmatpush1.bf16.msra.mxu0 0
  %1174 = vmatprep.subr.bf16.mxu0 0
  %1175 = vmatpush1.bf16.msra.mxu0 0
  %1176 = vmatprep.subr.bf16.mxu0 0
  %1177 = vmatpush1.bf16.msra.mxu0 0
  %1178 = vmatprep.subr.bf16.mxu0 0
  %1179 = vmatpush1.bf16.msra.mxu0 0
  %1180 = vmatprep.subr.bf16.mxu0 0
  %1181 = vmatpush1.bf16.msra.mxu0 0
  %1182 = vmatprep.mubr.bf16.mxu0 0
  %1183 = vmatmul.mubr.bf16.gmra.mrb[0].mxu0 %v1148
  %v1184 = vpop.f32.mrb[0].mxu0
  %v1185 = vadd.f32 %v1060, %v1184
  %v1186 = vpop.f32.mrb[0].mxu0
  %v1187 = vadd.f32 %v1062, %v1186
  %v1188 = vpop.f32.mrb[0].mxu0
  %v1189 = vpop.f32.mrb[0].mxu0
  %1190 = vdwg.mxu0
  %1191 = vmatprep.subr.bf16.mxu0 %v1134
  %1192 = vmatpush1.bf16.msra.mxu0 %v1133
  %1193 = vmatprep.subr.bf16.mxu0 %v1138
  %1194 = vmatpush1.bf16.msra.mxu0 %v1137
  %1195 = vmatprep.subr.bf16.mxu0 0
  %1196 = vmatpush1.bf16.msra.mxu0 0
  %1197 = vmatprep.subr.bf16.mxu0 0
  %1198 = vmatpush1.bf16.msra.mxu0 0
  %1199 = vmatprep.subr.bf16.mxu0 0
  %1200 = vmatpush1.bf16.msra.mxu0 0
  %1201 = vmatprep.subr.bf16.mxu0 0
  %1202 = vmatpush1.bf16.msra.mxu0 0
  %1203 = vmatprep.subr.bf16.mxu0 0
  %1204 = vmatpush1.bf16.msra.mxu0 0
  %1205 = vmatprep.subr.bf16.mxu0 0
  %1206 = vmatpush1.bf16.msra.mxu0 0
  %1207 = vmatprep.subr.bf16.mxu0 0
  %1208 = vmatpush1.bf16.msra.mxu0 0
  %1209 = vmatprep.subr.bf16.mxu0 0
  %1210 = vmatpush1.bf16.msra.mxu0 0
  %1211 = vmatprep.subr.bf16.mxu0 0
  %1212 = vmatpush1.bf16.msra.mxu0 0
  %1213 = vmatprep.subr.bf16.mxu0 0
  %1214 = vmatpush1.bf16.msra.mxu0 0
  %1215 = vmatprep.subr.bf16.mxu0 0
  %1216 = vmatpush1.bf16.msra.mxu0 0
  %1217 = vmatprep.subr.bf16.mxu0 0
  %1218 = vmatpush1.bf16.msra.mxu0 0
  %1219 = vmatprep.subr.bf16.mxu0 0
  %1220 = vmatpush1.bf16.msra.mxu0 0
  %1221 = vmatprep.subr.bf16.mxu0 0
  %1222 = vmatpush1.bf16.msra.mxu0 0
  %1223 = vmatprep.mubr.bf16.mxu0 0
  %1224 = vmatmul.mubr.bf16.gmra.mrb[0].mxu0 %v1148
  %v1225 = vpop.f32.mrb[0].mxu0
  %v1226 = vadd.f32 %v1101, %v1225
  %v1227 = vpop.f32.mrb[0].mxu0
  %v1228 = vadd.f32 %v1103, %v1227
  %v1229 = vpop.f32.mrb[0].mxu0
  %v1230 = vpop.f32.mrb[0].mxu0
  %1231 = vdwg.mxu0
  %v1232 = vadd.f32 %v1185, %v292
  %v1233 = vadd.f32 %v1187, %v292
  %v1234 = vadd.f32 %v1226, %v292
  %v1235 = vadd.f32 %v1228, %v292
  %v1236 = vmax.f32 %v1232, 0.0
  %v1237 = vmax.f32 %v1233, 0.0
  %v1238 = vmax.f32 %v1234, 0.0
  %v1239 = vmax.f32 %v1235, 0.0
  %v1240 = vpack.c.bf16 %v1236, %v1236
  %v1241 = vpack.c.bf16 %v1237, %v1237
  %v1242 = vpack.c.bf16 %v1238, %v1238
  %v1243 = vpack.c.bf16 %v1239, %v1239
  %v1248 = vunpack.c.l.b16 %v1240
  %v1249 = vunpack.c.l.b16 %v1241
  %v1250 = vunpack.c.l.b16 %v1242
  %v1251 = vunpack.c.l.b16 %v1243
  %v1252 = vpack.c.b16 %v1249, %v1248
  %v1253 = vpack.c.b16 %v1251, %v1250
  %s1256 = scalar_lea.vmem %s3, 48
  %1257 = vst [vmem:[%s1256] sm:$0xff] %v1252
  %1258 = vst [vmem:[%s1256 + $0x8] sm:$0xff] %v1253
  %v1259 = vadd.f32 %v1236, %v1237
  %v1260 = vadd.f32 %v1259, %v1238
  %v1261 = vadd.f32 %v1260, %v1239
  %1262 = vadd.xlane.f32.xlu0 %v1261
  %v1263 = vpop.xlane.xlu0 %1262
  %v1264 = vadd.f32 %v951, %v1263
  %v1265 = vmul.f32 %v1236, %v1236
  %v1266 = vmul.f32 %v1237, %v1237
  %v1267 = vmul.f32 %v1238, %v1238
  %v1268 = vmul.f32 %v1239, %v1239
  %v1269 = vadd.f32 %v1265, %v1266
  %v1270 = vadd.f32 %v1269, %v1267
  %v1271 = vadd.f32 %v1270, %v1268
  %1272 = vadd.xlane.f32.xlu0 %v1271
  %v1273 = vpop.xlane.xlu0 %1272
  %v1274 = vadd.f32 %v961, %v1273
  %vm1275 = vcmask 7168
  %1276 = vst.msk [vmem:[%s4] sm:$0xff] %vm1275, %v1264
  %1277 = vst.msk [vmem:[%s5] sm:$0xff] %vm1275, %v1274
  // Predicated region
  $region14: #{genconv_forward.2} parent=0 // pred_check
    _
  $region15: #{genconv_forward.2} parent=0 // pred_check_branch
    %1279 = sbr.rel (0) target = $region17
  $region16: #{genconv_forward.2} parent=0 // pred_region
    _
  $region17: #{genconv_forward.2} parent=0 // pred_fallthru
    _
  // Predicated region
  $region18: #{genconv_forward.2} parent=0 // pred_check
    _
  $region19: #{genconv_forward.2} parent=0 // pred_check_branch
    %1281 = sbr.rel (0) target = $region21
  $region20: #{genconv_forward.2} parent=0 // pred_region
    _
  $region21: #{genconv_forward.2} parent=0 // pred_fallthru
    _
  // Predicated region
  $region22: #{genconv_forward.2} parent=0 // pred_check
    _
  $region23: #{genconv_forward.2} parent=0 // pred_check_branch
    %1283 = sbr.rel (0) target = $region25
  $region24: #{genconv_forward.2} parent=0 // pred_region
    _
  $region25: #{genconv_forward.2} parent=0 // pred_fallthru
    _
  // Predicated region
  $region26: #{genconv_forward.2} parent=0 // pred_check
    _
  $region27: #{genconv_forward.2} parent=0 // pred_check_branch
    %1285 = sbr.rel (0) target = $region29
  $region28: #{genconv_forward.2} parent=0 // pred_region
    _
  $region29: #{genconv_forward.2} parent=0 // pred_fallthru
    _
  // Predicated region
  $region30: #{genconv_forward.2} parent=0 // pred_check
    _
  $region31: #{genconv_forward.2} parent=0 // pred_check_branch
    %1287 = sbr.rel (0) target = $region33
  $region32: #{genconv_forward.2} parent=0 // pred_region
    _
  $region33: #{genconv_forward.2} parent=0 // pred_fallthru
    _
  // Predicated region
  $region34: #{genconv_forward.2} parent=0 // pred_check
    _
  $region35: #{genconv_forward.2} parent=0 // pred_check_branch
    %1289 = sbr.rel (0) target = $region37
  $region36: #{genconv_forward.2} parent=0 // pred_region
    _
  $region37: #{genconv_forward.2} parent=0 // pred_fallthru
    _

// kernel: genconv_forward.3
$region0: #{genconv_forward.3}
  #allocation0 [shape = 'u32[]', space=smem, size = 0x4, offset = 0x4, fixed_abs, tag = 'smem constant byte address 0x4 - core index']
  #allocation1 [shape = 'u32[144,128]{1,0:T(1,128)}', space=vmem, size = 0x12000, scoped, tag = 'internal scratch']
  %s0 = inlined_call_operand.vmem [shape: bf16[4,8,512], index: 0, kind: input, shape index: {}]
  %s1 = inlined_call_operand.vmem [shape: f32[3,8], index: 1, kind: input, shape index: {}]
  %s2 = inlined_call_operand.vmem [shape: f32[3,1], index: 2, kind: input, shape index: {}]
  %s3 = inlined_call_operand.vmem [shape: f32[4,3,512], index: 3, kind: output, shape index: {}]
  %s4 = sld [smem:[#allocation0]]
  $region22: #{genconv_forward.3} parent=0
    _
  %s6 = ssub.s32 1, %s4
  %s7 = scalar_select 0, %s6, %s4
  // Predicated region
  $region2: #{genconv_forward.3} parent=0 // pred_check
    _
  $region3: #{genconv_forward.3} parent=0 // pred_check_branch
    %9 = sbr.rel (0) target = $region5
  $region4: #{genconv_forward.3} parent=0 // pred_region
    _
  $region5: #{genconv_forward.3} parent=0 // pred_fallthru
    _
  // Predicated region
  $region6: #{genconv_forward.3} parent=0 // pred_check
    _
  $region7: #{genconv_forward.3} parent=0 // pred_check_branch
    %11 = sbr.rel (0) target = $region9
  $region8: #{genconv_forward.3} parent=0 // pred_region
    _
  $region9: #{genconv_forward.3} parent=0 // pred_fallthru
    _
  // Predicated region
  $region10: #{genconv_forward.3} parent=0 // pred_check
    _
  $region11: #{genconv_forward.3} parent=0 // pred_check_branch
    %13 = sbr.rel (0) target = $region13
  $region12: #{genconv_forward.3} parent=0 // pred_region
    _
  $region13: #{genconv_forward.3} parent=0 // pred_fallthru
    _
  %v14 = vld [vmem:[%s1] sm:$0x7]
  %v15 = vld [vmem:[%s2] sm:$0x7]
  %v16 = vld [vmem:[%s0] sm:$0xff]
  %v17 = vld [vmem:[%s0 + $0x8] sm:$0xff]
  %v18 = vunpack.c.l.bf16 %v16
  %v19 = vunpack.c.h.bf16 %v16
  %v20 = vunpack.c.l.bf16 %v17
  %v21 = vunpack.c.h.bf16 %v17
  %23 = vset.pattern.permute.xlu0 0
  %24 = vperm.xlu0 %23, %v15
  %v25 = vpop.permute.xlu0 %24
  %vm27 = vcmask 64512
  %v29 = vsel %vm27, %v14, 0
  %31 = vmatprep.subr.mxu0 %v19
  %32 = vmatpush1.msra.mxu0 %v18
  %33 = vmatprep.subr.mxu0 0.0
  %34 = vmatpush1.msra.mxu0 0.0
  %35 = vmatprep.subr.mxu0 0.0
  %36 = vmatpush1.msra.mxu0 0.0
  %37 = vmatprep.subr.mxu0 0.0
  %38 = vmatpush1.msra.mxu0 0.0
  %39 = vmatprep.subr.mxu0 0.0
  %40 = vmatpush1.msra.mxu0 0.0
  %41 = vmatprep.subr.mxu0 0.0
  %42 = vmatpush1.msra.mxu0 0.0
  %43 = vmatprep.subr.mxu0 0.0
  %44 = vmatpush1.msra.mxu0 0.0
  %45 = vmatprep.subr.mxu0 0.0
  %46 = vmatpush1.msra.mxu0 0.0
  %47 = vmatprep.subr.mxu0 0.0
  %48 = vmatpush1.msra.mxu0 0.0
  %49 = vmatprep.subr.mxu0 0.0
  %50 = vmatpush1.msra.mxu0 0.0
  %51 = vmatprep.subr.mxu0 0.0
  %52 = vmatpush1.msra.mxu0 0.0
  %53 = vmatprep.subr.mxu0 0.0
  %54 = vmatpush1.msra.mxu0 0.0
  %55 = vmatprep.subr.mxu0 0.0
  %56 = vmatpush1.msra.mxu0 0.0
  %57 = vmatprep.subr.mxu0 0.0
  %58 = vmatpush1.msra.mxu0 0.0
  %59 = vmatprep.subr.mxu0 0.0
  %60 = vmatpush1.msra.mxu0 0.0
  %61 = vmatprep.subr.mxu0 0.0
  %62 = vmatpush1.msra.mxu0 0.0
  %63 = vmatprep.subr.mxu0 0.0
  %64 = vmatpush1.msra.mxu0 0.0
  %65 = vmatprep.subr.mxu0 0.0
  %66 = vmatpush1.msra.mxu0 0.0
  %67 = vmatprep.subr.mxu0 0.0
  %68 = vmatpush1.msra.mxu0 0.0
  %69 = vmatprep.subr.mxu0 0.0
  %70 = vmatpush1.msra.mxu0 0.0
  %71 = vmatprep.subr.mxu0 0.0
  %72 = vmatpush1.msra.mxu0 0.0
  %73 = vmatprep.subr.mxu0 0.0
  %74 = vmatpush1.msra.mxu0 0.0
  %75 = vmatprep.subr.mxu0 0.0
  %76 = vmatpush1.msra.mxu0 0.0
  %77 = vmatprep.subr.mxu0 0.0
  %78 = vmatpush1.msra.mxu0 0.0
  %79 = vmatprep.subr.mxu0 0.0
  %80 = vmatpush1.msra.mxu0 0.0
  %81 = vmatprep.subr.mxu0 0.0
  %82 = vmatpush1.msra.mxu0 0.0
  %83 = vmatprep.subr.mxu0 0.0
  %84 = vmatpush1.msra.mxu0 0.0
  %85 = vmatprep.subr.mxu0 0.0
  %86 = vmatpush1.msra.mxu0 0.0
  %87 = vmatprep.subr.mxu0 0.0
  %88 = vmatpush1.msra.mxu0 0.0
  %89 = vmatprep.subr.mxu0 0.0
  %90 = vmatpush1.msra.mxu0 0.0
  %91 = vmatprep.subr.mxu0 0.0
  %92 = vmatpush1.msra.mxu0 0.0
  %93 = vmatprep.subr.mxu0 0.0
  %94 = vmatpush1.msra.mxu0 0.0
  %95 = vmatprep.mubr.f32.mxu0 0.0
  %96 = vmatmul.mubr.f32.gmra.mrb[0].mxu0 %v29
  %v97 = vpop.f32.mrb[0].mxu0
  %v98 = vadd.f32 %v25, %v97
  %v99 = vpop.f32.mrb[0].mxu0
  %v100 = vadd.f32 %v25, %v99
  %101 = vdwg.mxu0
  %102 = vmatprep.subr.mxu0 %v21
  %103 = vmatpush1.msra.mxu0 %v20
  %104 = vmatprep.subr.mxu0 0.0
  %105 = vmatpush1.msra.mxu0 0.0
  %106 = vmatprep.subr.mxu0 0.0
  %107 = vmatpush1.msra.mxu0 0.0
  %108 = vmatprep.subr.mxu0 0.0
  %109 = vmatpush1.msra.mxu0 0.0
  %110 = vmatprep.subr.mxu0 0.0
  %111 = vmatpush1.msra.mxu0 0.0
  %112 = vmatprep.subr.mxu0 0.0
  %113 = vmatpush1.msra.mxu0 0.0
  %114 = vmatprep.subr.mxu0 0.0
  %115 = vmatpush1.msra.mxu0 0.0
  %116 = vmatprep.subr.mxu0 0.0
  %117 = vmatpush1.msra.mxu0 0.0
  %118 = vmatprep.subr.mxu0 0.0
  %119 = vmatpush1.msra.mxu0 0.0
  %120 = vmatprep.subr.mxu0 0.0
  %121 = vmatpush1.msra.mxu0 0.0
  %122 = vmatprep.subr.mxu0 0.0
  %123 = vmatpush1.msra.mxu0 0.0
  %124 = vmatprep.subr.mxu0 0.0
  %125 = vmatpush1.msra.mxu0 0.0
  %126 = vmatprep.subr.mxu0 0.0
  %127 = vmatpush1.msra.mxu0 0.0
  %128 = vmatprep.subr.mxu0 0.0
  %129 = vmatpush1.msra.mxu0 0.0
  %130 = vmatprep.subr.mxu0 0.0
  %131 = vmatpush1.msra.mxu0 0.0
  %132 = vmatprep.subr.mxu0 0.0
  %133 = vmatpush1.msra.mxu0 0.0
  %134 = vmatprep.subr.mxu0 0.0
  %135 = vmatpush1.msra.mxu0 0.0
  %136 = vmatprep.subr.mxu0 0.0
  %137 = vmatpush1.msra.mxu0 0.0
  %138 = vmatprep.subr.mxu0 0.0
  %139 = vmatpush1.msra.mxu0 0.0
  %140 = vmatprep.subr.mxu0 0.0
  %141 = vmatpush1.msra.mxu0 0.0
  %142 = vmatprep.subr.mxu0 0.0
  %143 = vmatpush1.msra.mxu0 0.0
  %144 = vmatprep.subr.mxu0 0.0
  %145 = vmatpush1.msra.mxu0 0.0
  %146 = vmatprep.subr.mxu0 0.0
  %147 = vmatpush1.msra.mxu0 0.0
  %148 = vmatprep.subr.mxu0 0.0
  %149 = vmatpush1.msra.mxu0 0.0
  %150 = vmatprep.subr.mxu0 0.0
  %151 = vmatpush1.msra.mxu0 0.0
  %152 = vmatprep.subr.mxu0 0.0
  %153 = vmatpush1.msra.mxu0 0.0
  %154 = vmatprep.subr.mxu0 0.0
  %155 = vmatpush1.msra.mxu0 0.0
  %156 = vmatprep.subr.mxu0 0.0
  %157 = vmatpush1.msra.mxu0 0.0
  %158 = vmatprep.subr.mxu0 0.0
  %159 = vmatpush1.msra.mxu0 0.0
  %160 = vmatprep.subr.mxu0 0.0
  %161 = vmatpush1.msra.mxu0 0.0
  %162 = vmatprep.subr.mxu0 0.0
  %163 = vmatpush1.msra.mxu0 0.0
  %164 = vmatprep.subr.mxu0 0.0
  %165 = vmatpush1.msra.mxu0 0.0
  %166 = vmatprep.mubr.f32.mxu0 0.0
  %167 = vmatmul.mubr.f32.gmra.mrb[0].mxu0 %v29
  %v168 = vpop.f32.mrb[0].mxu0
  %v169 = vadd.f32 %v25, %v168
  %v170 = vpop.f32.mrb[0].mxu0
  %v171 = vadd.f32 %v25, %v170
  %172 = vdwg.mxu0
  %v173 = vtanh.pop %v98
  %v174 = vtanh.pop %v100
  %v175 = vtanh.pop %v169
  %v176 = vtanh.pop %v171
  %v181 = vcombine.low %v173, %v174
  %v182 = vcombine.low %v175, %v176
  %185 = vst [vmem:[%s3] sm:$0x77] %v181
  %186 = vst [vmem:[%s3 + $0x8] sm:$0x77] %v182
  %s187 = scalar_lea.vmem %s0, 16
  %v188 = vld [vmem:[%s187] sm:$0xff]
  %v189 = vld [vmem:[%s187 + $0x8] sm:$0xff]
  %v190 = vunpack.c.l.bf16 %v188
  %v191 = vunpack.c.h.bf16 %v188
  %v192 = vunpack.c.l.bf16 %v189
  %v193 = vunpack.c.h.bf16 %v189
  %194 = vmatprep.subr.mxu0 %v191
  %195 = vmatpush1.msra.mxu0 %v190
  %196 = vmatprep.subr.mxu0 0.0
  %197 = vmatpush1.msra.mxu0 0.0
  %198 = vmatprep.subr.mxu0 0.0
  %199 = vmatpush1.msra.mxu0 0.0
  %200 = vmatprep.subr.mxu0 0.0
  %201 = vmatpush1.msra.mxu0 0.0
  %202 = vmatprep.subr.mxu0 0.0
  %203 = vmatpush1.msra.mxu0 0.0
  %204 = vmatprep.subr.mxu0 0.0
  %205 = vmatpush1.msra.mxu0 0.0
  %206 = vmatprep.subr.mxu0 0.0
  %207 = vmatpush1.msra.mxu0 0.0
  %208 = vmatprep.subr.mxu0 0.0
  %209 = vmatpush1.msra.mxu0 0.0
  %210 = vmatprep.subr.mxu0 0.0
  %211 = vmatpush1.msra.mxu0 0.0
  %212 = vmatprep.subr.mxu0 0.0
  %213 = vmatpush1.msra.mxu0 0.0
  %214 = vmatprep.subr.mxu0 0.0
  %215 = vmatpush1.msra.mxu0 0.0
  %216 = vmatprep.subr.mxu0 0.0
  %217 = vmatpush1.msra.mxu0 0.0
  %218 = vmatprep.subr.mxu0 0.0
  %219 = vmatpush1.msra.mxu0 0.0
  %220 = vmatprep.subr.mxu0 0.0
  %221 = vmatpush1.msra.mxu0 0.0
  %222 = vmatprep.subr.mxu0 0.0
  %223 = vmatpush1.msra.mxu0 0.0
  %224 = vmatprep.subr.mxu0 0.0
  %225 = vmatpush1.msra.mxu0 0.0
  %226 = vmatprep.subr.mxu0 0.0
  %227 = vmatpush1.msra.mxu0 0.0
  %228 = vmatprep.subr.mxu0 0.0
  %229 = vmatpush1.msra.mxu0 0.0
  %230 = vmatprep.subr.mxu0 0.0
  %231 = vmatpush1.msra.mxu0 0.0
  %232 = vmatprep.subr.mxu0 0.0
  %233 = vmatpush1.msra.mxu0 0.0
  %234 = vmatprep.subr.mxu0 0.0
  %235 = vmatpush1.msra.mxu0 0.0
  %236 = vmatprep.subr.mxu0 0.0
  %237 = vmatpush1.msra.mxu0 0.0
  %238 = vmatprep.subr.mxu0 0.0
  %239 = vmatpush1.msra.mxu0 0.0
  %240 = vmatprep.subr.mxu0 0.0
  %241 = vmatpush1.msra.mxu0 0.0
  %242 = vmatprep.subr.mxu0 0.0
  %243 = vmatpush1.msra.mxu0 0.0
  %244 = vmatprep.subr.mxu0 0.0
  %245 = vmatpush1.msra.mxu0 0.0
  %246 = vmatprep.subr.mxu0 0.0
  %247 = vmatpush1.msra.mxu0 0.0
  %248 = vmatprep.subr.mxu0 0.0
  %249 = vmatpush1.msra.mxu0 0.0
  %250 = vmatprep.subr.mxu0 0.0
  %251 = vmatpush1.msra.mxu0 0.0
  %252 = vmatprep.subr.mxu0 0.0
  %253 = vmatpush1.msra.mxu0 0.0
  %254 = vmatprep.subr.mxu0 0.0
  %255 = vmatpush1.msra.mxu0 0.0
  %256 = vmatprep.subr.mxu0 0.0
  %257 = vmatpush1.msra.mxu0 0.0
  %258 = vmatprep.mubr.f32.mxu0 0.0
  %259 = vmatmul.mubr.f32.gmra.mrb[0].mxu0 %v29
  %v260 = vpop.f32.mrb[0].mxu0
  %v261 = vadd.f32 %v25, %v260
  %v262 = vpop.f32.mrb[0].mxu0
  %v263 = vadd.f32 %v25, %v262
  %264 = vdwg.mxu0
  %265 = vmatprep.subr.mxu0 %v193
  %266 = vmatpush1.msra.mxu0 %v192
  %267 = vmatprep.subr.mxu0 0.0
  %268 = vmatpush1.msra.mxu0 0.0
  %269 = vmatprep.subr.mxu0 0.0
  %270 = vmatpush1.msra.mxu0 0.0
  %271 = vmatprep.subr.mxu0 0.0
  %272 = vmatpush1.msra.mxu0 0.0
  %273 = vmatprep.subr.mxu0 0.0
  %274 = vmatpush1.msra.mxu0 0.0
  %275 = vmatprep.subr.mxu0 0.0
  %276 = vmatpush1.msra.mxu0 0.0
  %277 = vmatprep.subr.mxu0 0.0
  %278 = vmatpush1.msra.mxu0 0.0
  %279 = vmatprep.subr.mxu0 0.0
  %280 = vmatpush1.msra.mxu0 0.0
  %281 = vmatprep.subr.mxu0 0.0
  %282 = vmatpush1.msra.mxu0 0.0
  %283 = vmatprep.subr.mxu0 0.0
  %284 = vmatpush1.msra.mxu0 0.0
  %285 = vmatprep.subr.mxu0 0.0
  %286 = vmatpush1.msra.mxu0 0.0
  %287 = vmatprep.subr.mxu0 0.0
  %288 = vmatpush1.msra.mxu0 0.0
  %289 = vmatprep.subr.mxu0 0.0
  %290 = vmatpush1.msra.mxu0 0.0
  %291 = vmatprep.subr.mxu0 0.0
  %292 = vmatpush1.msra.mxu0 0.0
  %293 = vmatprep.subr.mxu0 0.0
  %294 = vmatpush1.msra.mxu0 0.0
  %295 = vmatprep.subr.mxu0 0.0
  %296 = vmatpush1.msra.mxu0 0.0
  %297 = vmatprep.subr.mxu0 0.0
  %298 = vmatpush1.msra.mxu0 0.0
  %299 = vmatprep.subr.mxu0 0.0
  %300 = vmatpush1.msra.mxu0 0.0
  %301 = vmatprep.subr.mxu0 0.0
  %302 = vmatpush1.msra.mxu0 0.0
  %303 = vmatprep.subr.mxu0 0.0
  %304 = vmatpush1.msra.mxu0 0.0
  %305 = vmatprep.subr.mxu0 0.0
  %306 = vmatpush1.msra.mxu0 0.0
  %307 = vmatprep.subr.mxu0 0.0
  %308 = vmatpush1.msra.mxu0 0.0
  %309 = vmatprep.subr.mxu0 0.0
  %310 = vmatpush1.msra.mxu0 0.0
  %311 = vmatprep.subr.mxu0 0.0
  %312 = vmatpush1.msra.mxu0 0.0
  %313 = vmatprep.subr.mxu0 0.0
  %314 = vmatpush1.msra.mxu0 0.0
  %315 = vmatprep.subr.mxu0 0.0
  %316 = vmatpush1.msra.mxu0 0.0
  %317 = vmatprep.subr.mxu0 0.0
  %318 = vmatpush1.msra.mxu0 0.0
  %319 = vmatprep.subr.mxu0 0.0
  %320 = vmatpush1.msra.mxu0 0.0
  %321 = vmatprep.subr.mxu0 0.0
  %322 = vmatpush1.msra.mxu0 0.0
  %323 = vmatprep.subr.mxu0 0.0
  %324 = vmatpush1.msra.mxu0 0.0
  %325 = vmatprep.subr.mxu0 0.0
  %326 = vmatpush1.msra.mxu0 0.0
  %327 = vmatprep.subr.mxu0 0.0
  %328 = vmatpush1.msra.mxu0 0.0
  %329 = vmatprep.mubr.f32.mxu0 0.0
  %330 = vmatmul.mubr.f32.gmra.mrb[0].mxu0 %v29
  %v331 = vpop.f32.mrb[0].mxu0
  %v332 = vadd.f32 %v25, %v331
  %v333 = vpop.f32.mrb[0].mxu0
  %v334 = vadd.f32 %v25, %v333
  %335 = vdwg.mxu0
  %v336 = vtanh.pop %v261
  %v337 = vtanh.pop %v263
  %v338 = vtanh.pop %v332
  %v339 = vtanh.pop %v334
  %v344 = vcombine.low %v336, %v337
  %v345 = vcombine.low %v338, %v339
  %s348 = scalar_lea.vmem %s3, 16
  %349 = vst [vmem:[%s348] sm:$0x77] %v344
  %350 = vst [vmem:[%s348 + $0x8] sm:$0x77] %v345
  %s351 = scalar_lea.vmem %s0, 32
  %v352 = vld [vmem:[%s351] sm:$0xff]
  %v353 = vld [vmem:[%s351 + $0x8] sm:$0xff]
  %v354 = vunpack.c.l.bf16 %v352
  %v355 = vunpack.c.h.bf16 %v352
  %v356 = vunpack.c.l.bf16 %v353
  %v357 = vunpack.c.h.bf16 %v353
  %358 = vmatprep.subr.mxu0 %v355
  %359 = vmatpush1.msra.mxu0 %v354
  %360 = vmatprep.subr.mxu0 0.0
  %361 = vmatpush1.msra.mxu0 0.0
  %362 = vmatprep.subr.mxu0 0.0
  %363 = vmatpush1.msra.mxu0 0.0
  %364 = vmatprep.subr.mxu0 0.0
  %365 = vmatpush1.msra.mxu0 0.0
  %366 = vmatprep.subr.mxu0 0.0
  %367 = vmatpush1.msra.mxu0 0.0
  %368 = vmatprep.subr.mxu0 0.0
  %369 = vmatpush1.msra.mxu0 0.0
  %370 = vmatprep.subr.mxu0 0.0
  %371 = vmatpush1.msra.mxu0 0.0
  %372 = vmatprep.subr.mxu0 0.0
  %373 = vmatpush1.msra.mxu0 0.0
  %374 = vmatprep.subr.mxu0 0.0
  %375 = vmatpush1.msra.mxu0 0.0
  %376 = vmatprep.subr.mxu0 0.0
  %377 = vmatpush1.msra.mxu0 0.0
  %378 = vmatprep.subr.mxu0 0.0
  %379 = vmatpush1.msra.mxu0 0.0
  %380 = vmatprep.subr.mxu0 0.0
  %381 = vmatpush1.msra.mxu0 0.0
  %382 = vmatprep.subr.mxu0 0.0
  %383 = vmatpush1.msra.mxu0 0.0
  %384 = vmatprep.subr.mxu0 0.0
  %385 = vmatpush1.msra.mxu0 0.0
  %386 = vmatprep.subr.mxu0 0.0
  %387 = vmatpush1.msra.mxu0 0.0
  %388 = vmatprep.subr.mxu0 0.0
  %389 = vmatpush1.msra.mxu0 0.0
  %390 = vmatprep.subr.mxu0 0.0
  %391 = vmatpush1.msra.mxu0 0.0
  %392 = vmatprep.subr.mxu0 0.0
  %393 = vmatpush1.msra.mxu0 0.0
  %394 = vmatprep.subr.mxu0 0.0
  %395 = vmatpush1.msra.mxu0 0.0
  %396 = vmatprep.subr.mxu0 0.0
  %397 = vmatpush1.msra.mxu0 0.0
  %398 = vmatprep.subr.mxu0 0.0
  %399 = vmatpush1.msra.mxu0 0.0
  %400 = vmatprep.subr.mxu0 0.0
  %401 = vmatpush1.msra.mxu0 0.0
  %402 = vmatprep.subr.mxu0 0.0
  %403 = vmatpush1.msra.mxu0 0.0
  %404 = vmatprep.subr.mxu0 0.0
  %405 = vmatpush1.msra.mxu0 0.0
  %406 = vmatprep.subr.mxu0 0.0
  %407 = vmatpush1.msra.mxu0 0.0
  %408 = vmatprep.subr.mxu0 0.0
  %409 = vmatpush1.msra.mxu0 0.0
  %410 = vmatprep.subr.mxu0 0.0
  %411 = vmatpush1.msra.mxu0 0.0
  %412 = vmatprep.subr.mxu0 0.0
  %413 = vmatpush1.msra.mxu0 0.0
  %414 = vmatprep.subr.mxu0 0.0
  %415 = vmatpush1.msra.mxu0 0.0
  %416 = vmatprep.subr.mxu0 0.0
  %417 = vmatpush1.msra.mxu0 0.0
  %418 = vmatprep.subr.mxu0 0.0
  %419 = vmatpush1.msra.mxu0 0.0
  %420 = vmatprep.subr.mxu0 0.0
  %421 = vmatpush1.msra.mxu0 0.0
  %422 = vmatprep.mubr.f32.mxu0 0.0
  %423 = vmatmul.mubr.f32.gmra.mrb[0].mxu0 %v29
  %v424 = vpop.f32.mrb[0].mxu0
  %v425 = vadd.f32 %v25, %v424
  %v426 = vpop.f32.mrb[0].mxu0
  %v427 = vadd.f32 %v25, %v426
  %428 = vdwg.mxu0
  %429 = vmatprep.subr.mxu0 %v357
  %430 = vmatpush1.msra.mxu0 %v356
  %431 = vmatprep.subr.mxu0 0.0
  %432 = vmatpush1.msra.mxu0 0.0
  %433 = vmatprep.subr.mxu0 0.0
  %434 = vmatpush1.msra.mxu0 0.0
  %435 = vmatprep.subr.mxu0 0.0
  %436 = vmatpush1.msra.mxu0 0.0
  %437 = vmatprep.subr.mxu0 0.0
  %438 = vmatpush1.msra.mxu0 0.0
  %439 = vmatprep.subr.mxu0 0.0
  %440 = vmatpush1.msra.mxu0 0.0
  %441 = vmatprep.subr.mxu0 0.0
  %442 = vmatpush1.msra.mxu0 0.0
  %443 = vmatprep.subr.mxu0 0.0
  %444 = vmatpush1.msra.mxu0 0.0
  %445 = vmatprep.subr.mxu0 0.0
  %446 = vmatpush1.msra.mxu0 0.0
  %447 = vmatprep.subr.mxu0 0.0
  %448 = vmatpush1.msra.mxu0 0.0
  %449 = vmatprep.subr.mxu0 0.0
  %450 = vmatpush1.msra.mxu0 0.0
  %451 = vmatprep.subr.mxu0 0.0
  %452 = vmatpush1.msra.mxu0 0.0
  %453 = vmatprep.subr.mxu0 0.0
  %454 = vmatpush1.msra.mxu0 0.0
  %455 = vmatprep.subr.mxu0 0.0
  %456 = vmatpush1.msra.mxu0 0.0
  %457 = vmatprep.subr.mxu0 0.0
  %458 = vmatpush1.msra.mxu0 0.0
  %459 = vmatprep.subr.mxu0 0.0
  %460 = vmatpush1.msra.mxu0 0.0
  %461 = vmatprep.subr.mxu0 0.0
  %462 = vmatpush1.msra.mxu0 0.0
  %463 = vmatprep.subr.mxu0 0.0
  %464 = vmatpush1.msra.mxu0 0.0
  %465 = vmatprep.subr.mxu0 0.0
  %466 = vmatpush1.msra.mxu0 0.0
  %467 = vmatprep.subr.mxu0 0.0
  %468 = vmatpush1.msra.mxu0 0.0
  %469 = vmatprep.subr.mxu0 0.0
  %470 = vmatpush1.msra.mxu0 0.0
  %471 = vmatprep.subr.mxu0 0.0
  %472 = vmatpush1.msra.mxu0 0.0
  %473 = vmatprep.subr.mxu0 0.0
  %474 = vmatpush1.msra.mxu0 0.0
  %475 = vmatprep.subr.mxu0 0.0
  %476 = vmatpush1.msra.mxu0 0.0
  %477 = vmatprep.subr.mxu0 0.0
  %478 = vmatpush1.msra.mxu0 0.0
  %479 = vmatprep.subr.mxu0 0.0
  %480 = vmatpush1.msra.mxu0 0.0
  %481 = vmatprep.subr.mxu0 0.0
  %482 = vmatpush1.msra.mxu0 0.0
  %483 = vmatprep.subr.mxu0 0.0
  %484 = vmatpush1.msra.mxu0 0.0
  %485 = vmatprep.subr.mxu0 0.0
  %486 = vmatpush1.msra.mxu0 0.0
  %487 = vmatprep.subr.mxu0 0.0
  %488 = vmatpush1.msra.mxu0 0.0
  %489 = vmatprep.subr.mxu0 0.0
  %490 = vmatpush1.msra.mxu0 0.0
  %491 = vmatprep.subr.mxu0 0.0
  %492 = vmatpush1.msra.mxu0 0.0
  %493 = vmatprep.mubr.f32.mxu0 0.0
  %494 = vmatmul.mubr.f32.gmra.mrb[0].mxu0 %v29
  %v495 = vpop.f32.mrb[0].mxu0
  %v496 = vadd.f32 %v25, %v495
  %v497 = vpop.f32.mrb[0].mxu0
  %v498 = vadd.f32 %v25, %v497
  %499 = vdwg.mxu0
  %v500 = vtanh.pop %v425
  %v501 = vtanh.pop %v427
  %v502 = vtanh.pop %v496
  %v503 = vtanh.pop %v498
  %v508 = vcombine.low %v500, %v501
  %v509 = vcombine.low %v502, %v503
  %s512 = scalar_lea.vmem %s3, 32
  %513 = vst [vmem:[%s512] sm:$0x77] %v508
  %514 = vst [vmem:[%s512 + $0x8] sm:$0x77] %v509
  %s515 = scalar_lea.vmem %s0, 48
  %v516 = vld [vmem:[%s515] sm:$0xff]
  %v517 = vld [vmem:[%s515 + $0x8] sm:$0xff]
  %v518 = vunpack.c.l.bf16 %v516
  %v519 = vunpack.c.h.bf16 %v516
  %v520 = vunpack.c.l.bf16 %v517
  %v521 = vunpack.c.h.bf16 %v517
  %522 = vmatprep.subr.mxu0 %v519
  %523 = vmatpush1.msra.mxu0 %v518
  %524 = vmatprep.subr.mxu0 0.0
  %525 = vmatpush1.msra.mxu0 0.0
  %526 = vmatprep.subr.mxu0 0.0
  %527 = vmatpush1.msra.mxu0 0.0
  %528 = vmatprep.subr.mxu0 0.0
  %529 = vmatpush1.msra.mxu0 0.0
  %530 = vmatprep.subr.mxu0 0.0
  %531 = vmatpush1.msra.mxu0 0.0
  %532 = vmatprep.subr.mxu0 0.0
  %533 = vmatpush1.msra.mxu0 0.0
  %534 = vmatprep.subr.mxu0 0.0
  %535 = vmatpush1.msra.mxu0 0.0
  %536 = vmatprep.subr.mxu0 0.0
  %537 = vmatpush1.msra.mxu0 0.0
  %538 = vmatprep.subr.mxu0 0.0
  %539 = vmatpush1.msra.mxu0 0.0
  %540 = vmatprep.subr.mxu0 0.0
  %541 = vmatpush1.msra.mxu0 0.0
  %542 = vmatprep.subr.mxu0 0.0
  %543 = vmatpush1.msra.mxu0 0.0
  %544 = vmatprep.subr.mxu0 0.0
  %545 = vmatpush1.msra.mxu0 0.0
  %546 = vmatprep.subr.mxu0 0.0
  %547 = vmatpush1.msra.mxu0 0.0
  %548 = vmatprep.subr.mxu0 0.0
  %549 = vmatpush1.msra.mxu0 0.0
  %550 = vmatprep.subr.mxu0 0.0
  %551 = vmatpush1.msra.mxu0 0.0
  %552 = vmatprep.subr.mxu0 0.0
  %553 = vmatpush1.msra.mxu0 0.0
  %554 = vmatprep.subr.mxu0 0.0
  %555 = vmatpush1.msra.mxu0 0.0
  %556 = vmatprep.subr.mxu0 0.0
  %557 = vmatpush1.msra.mxu0 0.0
  %558 = vmatprep.subr.mxu0 0.0
  %559 = vmatpush1.msra.mxu0 0.0
  %560 = vmatprep.subr.mxu0 0.0
  %561 = vmatpush1.msra.mxu0 0.0
  %562 = vmatprep.subr.mxu0 0.0
  %563 = vmatpush1.msra.mxu0 0.0
  %564 = vmatprep.subr.mxu0 0.0
  %565 = vmatpush1.msra.mxu0 0.0
  %566 = vmatprep.subr.mxu0 0.0
  %567 = vmatpush1.msra.mxu0 0.0
  %568 = vmatprep.subr.mxu0 0.0
  %569 = vmatpush1.msra.mxu0 0.0
  %570 = vmatprep.subr.mxu0 0.0
  %571 = vmatpush1.msra.mxu0 0.0
  %572 = vmatprep.subr.mxu0 0.0
  %573 = vmatpush1.msra.mxu0 0.0
  %574 = vmatprep.subr.mxu0 0.0
  %575 = vmatpush1.msra.mxu0 0.0
  %576 = vmatprep.subr.mxu0 0.0
  %577 = vmatpush1.msra.mxu0 0.0
  %578 = vmatprep.subr.mxu0 0.0
  %579 = vmatpush1.msra.mxu0 0.0
  %580 = vmatprep.subr.mxu0 0.0
  %581 = vmatpush1.msra.mxu0 0.0
  %582 = vmatprep.subr.mxu0 0.0
  %583 = vmatpush1.msra.mxu0 0.0
  %584 = vmatprep.subr.mxu0 0.0
  %585 = vmatpush1.msra.mxu0 0.0
  %586 = vmatprep.mubr.f32.mxu0 0.0
  %587 = vmatmul.mubr.f32.gmra.mrb[0].mxu0 %v29
  %v588 = vpop.f32.mrb[0].mxu0
  %v589 = vadd.f32 %v25, %v588
  %v590 = vpop.f32.mrb[0].mxu0
  %v591 = vadd.f32 %v25, %v590
  %592 = vdwg.mxu0
  %593 = vmatprep.subr.mxu0 %v521
  %594 = vmatpush1.msra.mxu0 %v520
  %595 = vmatprep.subr.mxu0 0.0
  %596 = vmatpush1.msra.mxu0 0.0
  %597 = vmatprep.subr.mxu0 0.0
  %598 = vmatpush1.msra.mxu0 0.0
  %599 = vmatprep.subr.mxu0 0.0
  %600 = vmatpush1.msra.mxu0 0.0
  %601 = vmatprep.subr.mxu0 0.0
  %602 = vmatpush1.msra.mxu0 0.0
  %603 = vmatprep.subr.mxu0 0.0
  %604 = vmatpush1.msra.mxu0 0.0
  %605 = vmatprep.subr.mxu0 0.0
  %606 = vmatpush1.msra.mxu0 0.0
  %607 = vmatprep.subr.mxu0 0.0
  %608 = vmatpush1.msra.mxu0 0.0
  %609 = vmatprep.subr.mxu0 0.0
  %610 = vmatpush1.msra.mxu0 0.0
  %611 = vmatprep.subr.mxu0 0.0
  %612 = vmatpush1.msra.mxu0 0.0
  %613 = vmatprep.subr.mxu0 0.0
  %614 = vmatpush1.msra.mxu0 0.0
  %615 = vmatprep.subr.mxu0 0.0
  %616 = vmatpush1.msra.mxu0 0.0
  %617 = vmatprep.subr.mxu0 0.0
  %618 = vmatpush1.msra.mxu0 0.0
  %619 = vmatprep.subr.mxu0 0.0
  %620 = vmatpush1.msra.mxu0 0.0
  %621 = vmatprep.subr.mxu0 0.0
  %622 = vmatpush1.msra.mxu0 0.0
  %623 = vmatprep.subr.mxu0 0.0
  %624 = vmatpush1.msra.mxu0 0.0
  %625 = vmatprep.subr.mxu0 0.0
  %626 = vmatpush1.msra.mxu0 0.0
  %627 = vmatprep.subr.mxu0 0.0
  %628 = vmatpush1.msra.mxu0 0.0
  %629 = vmatprep.subr.mxu0 0.0
  %630 = vmatpush1.msra.mxu0 0.0
  %631 = vmatprep.subr.mxu0 0.0
  %632 = vmatpush1.msra.mxu0 0.0
  %633 = vmatprep.subr.mxu0 0.0
  %634 = vmatpush1.msra.mxu0 0.0
  %635 = vmatprep.subr.mxu0 0.0
  %636 = vmatpush1.msra.mxu0 0.0
  %637 = vmatprep.subr.mxu0 0.0
  %638 = vmatpush1.msra.mxu0 0.0
  %639 = vmatprep.subr.mxu0 0.0
  %640 = vmatpush1.msra.mxu0 0.0
  %641 = vmatprep.subr.mxu0 0.0
  %642 = vmatpush1.msra.mxu0 0.0
  %643 = vmatprep.subr.mxu0 0.0
  %644 = vmatpush1.msra.mxu0 0.0
  %645 = vmatprep.subr.mxu0 0.0
  %646 = vmatpush1.msra.mxu0 0.0
  %647 = vmatprep.subr.mxu0 0.0
  %648 = vmatpush1.msra.mxu0 0.0
  %649 = vmatprep.subr.mxu0 0.0
  %650 = vmatpush1.msra.mxu0 0.0
  %651 = vmatprep.subr.mxu0 0.0
  %652 = vmatpush1.msra.mxu0 0.0
  %653 = vmatprep.subr.mxu0 0.0
  %654 = vmatpush1.msra.mxu0 0.0
  %655 = vmatprep.subr.mxu0 0.0
  %656 = vmatpush1.msra.mxu0 0.0
  %657 = vmatprep.mubr.f32.mxu0 0.0
  %658 = vmatmul.mubr.f32.gmra.mrb[0].mxu0 %v29
  %v659 = vpop.f32.mrb[0].mxu0
  %v660 = vadd.f32 %v25, %v659
  %v661 = vpop.f32.mrb[0].mxu0
  %v662 = vadd.f32 %v25, %v661
  %663 = vdwg.mxu0
  %v664 = vtanh.pop %v589
  %v665 = vtanh.pop %v591
  %v666 = vtanh.pop %v660
  %v667 = vtanh.pop %v662
  %v672 = vcombine.low %v664, %v665
  %v673 = vcombine.low %v666, %v667
  %s676 = scalar_lea.vmem %s3, 48
  %677 = vst [vmem:[%s676] sm:$0x77] %v672
  %678 = vst [vmem:[%s676 + $0x8] sm:$0x77] %v673
  // Predicated region
  $region14: #{genconv_forward.3} parent=0 // pred_check
    _
  $region15: #{genconv_forward.3} parent=0 // pred_check_branch
    %680 = sbr.rel (0) target = $region17
  $region16: #{genconv_forward.3} parent=0 // pred_region
    _
  $region17: #{genconv_forward.3} parent=0 // pred_fallthru
    _
  // Predicated region
  $region18: #{genconv_forward.3} parent=0 // pred_check
    _
  $region19: #{genconv_forward.3} parent=0 // pred_check_branch
    %682 = sbr.rel (0) target = $region21
  $region20: #{genconv_forward.3} parent=0 // pred_region
    _
  $region21: #{genconv_forward.3} parent=0 // pred_fallthru
    _

</llo_original>
